<compile_context>
chip_gen: v6e
topology: v6e:2x2x1
jax: 0.10.0
libtpu: 0.0.40
codegen_flags: <defaults>
</compile_context>

<pallas_src>
import math
import functools

import jax
import jax.numpy as jnp
from jax.experimental import pallas as pl
from jax.experimental.pallas import tpu as pltpu


def _layer_norm(x, gamma, beta, eps=1e-6):
    # matches nn.LayerNorm(hidden, eps=1e-6); x: (..., H) f32, gamma/beta: (H,)
    mean = jnp.mean(x, axis=-1, keepdims=True)
    var = jnp.mean(jnp.square(x - mean), axis=-1, keepdims=True)
    return (x - mean) * jax.lax.rsqrt(var + eps) * gamma + beta


def _gelu_exact(x):
    # matches torch.nn.functional.gelu (approximate='none')
    return 0.5 * x * (1.0 + jax.lax.erf(x * (1.0 / math.sqrt(2.0))))


def encoder_kernel(
    x_ref,
    ln1_g, ln1_b, wqkv, bqkv, wo, bo,
    ln2_g, ln2_b, w1, b1, w2, b2,
    enc_g, enc_b,
    o_ref,
    x_scr,
    *, num_heads, bt, seq,
):
    """Fused ViT encoder: grid=(batch_tiles, num_layers); one layer per step."""
    layer = pl.program_id(1)
    num_layers = pl.num_programs(1)

    # load the activation tile into the VMEM carry at the first layer
    @pl.when(layer == 0)
    def _():
        x_scr[...] = x_ref[...].astype(jnp.float32)

    x = x_scr[...]                                   # (R, H) f32, R = bt*seq
    R, H = x.shape
    hd = H // num_heads
    scale = 1.0 / math.sqrt(hd)

    # ---------------- attention sub-block ----------------
    xn = _layer_norm(x, ln1_g[0, 0], ln1_b[0, 0])
    # fused QKV projection: one big MXU dot, bf16 inputs, f32 accumulation
    qkv = jnp.dot(xn.astype(jnp.bfloat16), wqkv[0],
                  preferred_element_type=jnp.float32) + bqkv[0]     # (R, 3H)
    qkv3 = qkv.reshape(bt, seq, 3 * H)               # split batch back out

    # per-head attention with the batch dim fed to a batched einsum
    # (small static head loop kept; slices are static lane slices)
    ctx_heads = []
    for h in range(num_heads):
        qh = qkv3[:, :, h * hd:(h + 1) * hd].astype(jnp.bfloat16)
        kh = qkv3[:, :, H + h * hd:H + (h + 1) * hd].astype(jnp.bfloat16)
        vh = qkv3[:, :, 2 * H + h * hd:2 * H + (h + 1) * hd].astype(jnp.bfloat16)
        s = jnp.einsum('bqd,bkd->bqk', qh, kh,
                       preferred_element_type=jnp.float32) * scale  # (bt,S,S)
        s = s - jnp.max(s, axis=-1, keepdims=True)
        e = jnp.exp(s)
        p = e * pl.reciprocal(jnp.sum(e, axis=-1, keepdims=True), approx=True)
        ctx_heads.append(
            jnp.einsum('bqk,bkd->bqd', p.astype(jnp.bfloat16), vh,
                       preferred_element_type=jnp.float32))         # (bt,S,hd)
    ctx = jnp.concatenate(ctx_heads, axis=-1).reshape(R, H)          # (R, H)

    attn = jnp.dot(ctx.astype(jnp.bfloat16), wo[0],
                   preferred_element_type=jnp.float32) + bo[0]
    # TODO(synk): attn_dropout / proj_dropout (rate 0.0) are identity.
    x = x + attn

    # ---------------- MLP sub-block ----------------
    xn2 = _layer_norm(x, ln2_g[0, 0], ln2_b[0, 0])
    hmid = jnp.dot(xn2.astype(jnp.bfloat16), w1[0],
                   preferred_element_type=jnp.float32) + b1[0]
    hmid = _gelu_exact(hmid)
    # TODO(synk): nn.Dropout(p=0.2) in Mlp is identity here (inference mode).
    x = x + jnp.dot(hmid.astype(jnp.bfloat16), w2[0],
                    preferred_element_type=jnp.float32) + b2[0]

    x_scr[...] = x

    # final encoder LayerNorm, written once on the last layer step
    @pl.when(layer == num_layers - 1)
    def _():
        o_ref[...] = _layer_norm(x, enc_g[0], enc_b[0]).astype(o_ref.dtype)


def tmain_forward(x, params, enc_norm, num_heads):
    """Equivalent to tmain.forward: num_layers Blocks + final encoder LayerNorm."""
    B, S, H = x.shape
    L = params["wqkv"].shape[0]
    M = params["w1"].shape[2]
    R = B * S
    x2 = x.reshape(R, H)

    # Batch-tile ("parallel") axis: 1 tile at demo scale; for real ViT pick
    # n_bt so each tile keeps rows % 8 == 0 and both v7x TensorCores get work.
    n_bt = 1
    bt = B // n_bt
    rows = bt * S

    def wspec(shape):
        nd = len(shape)
        return pl.BlockSpec((1,) + tuple(shape[1:]),
                            lambda b, l, _nd=nd: (l,) + (0,) * (_nd - 1))

    in_specs = [
        pl.BlockSpec((rows, H), lambda b, l: (b, 0)),          # x
        wspec((L, 1, H)), wspec((L, 1, H)),                    # ln1 gamma/beta
        wspec((L, H, 3 * H)), wspec((L, 1, 3 * H)),            # Wqkv, bqkv
        wspec((L, H, H)), wspec((L, 1, H)),                    # Wo, bo
        wspec((L, 1, H)), wspec((L, 1, H)),                    # ln2 gamma/beta
        wspec((L, H, M)), wspec((L, 1, M)),                    # W1, b1
        wspec((L, M, H)), wspec((L, 1, H)),                    # W2, b2
        pl.BlockSpec((1, H), lambda b, l: (0, 0)),             # encoder-norm gamma
        pl.BlockSpec((1, H), lambda b, l: (0, 0)),             # encoder-norm beta
    ]
    out_spec = pl.BlockSpec((rows, H), lambda b, l: (b, 0))

    kernel = functools.partial(encoder_kernel, num_heads=num_heads, bt=bt, seq=S)
    out = pl.pallas_call(
        kernel,
        out_shape=jax.ShapeDtypeStruct((R, H), jnp.float32),
        grid_spec=pltpu.PrefetchScalarGridSpec(
            num_scalar_prefetch=0,
            grid=(n_bt, L),
            in_specs=in_specs,
            out_specs=out_spec,
            scratch_shapes=[pltpu.VMEM((rows, H), jnp.float32)],
        ),
        compiler_params=pltpu.CompilerParams(
            dimension_semantics=("parallel", "arbitrary"),
        ),
    )(
        x2,
        params["ln1_g"], params["ln1_b"],
        params["wqkv"], params["bqkv"],
        params["wo"], params["bo"],
        params["ln2_g"], params["ln2_b"],
        params["w1"], params["b1"],
        params["w2"], params["b2"],
        enc_norm["g"], enc_norm["b"],
    )
    return out.reshape(B, S, H)


def init_params(key, hidden_size, num_layers, mlp_dim):
    """Deterministic synthetic parameters, stacked along a leading layer axis.

    Weights are stored bf16 (MXU-native, halves HBM->VMEM DMA bytes); biases
    and LayerNorm params stay f32.  Q/K/V weights are fused into (L, H, 3H).
    """
    H, L, M = hidden_size, num_layers, mlp_dim
    keys = jax.random.split(key, 8)
    s_h = 1.0 / math.sqrt(H)
    lim = math.sqrt(6.0 / (H + M))   # xavier_uniform bound for fc1/fc2

    wq = jax.random.normal(keys[0], (L, H, H), jnp.float32) * s_h
    wk = jax.random.normal(keys[1], (L, H, H), jnp.float32) * s_h
    wv = jax.random.normal(keys[2], (L, H, H), jnp.float32) * s_h

    params = {
        "ln1_g": jnp.ones((L, 1, H), jnp.float32),
        "ln1_b": jnp.zeros((L, 1, H), jnp.float32),
        "wqkv": jnp.concatenate([wq, wk, wv], axis=-1).astype(jnp.bfloat16),
        "bqkv": jnp.zeros((L, 1, 3 * H), jnp.float32),
        "wo": (jax.random.normal(keys[3], (L, H, H), jnp.float32) * s_h
               ).astype(jnp.bfloat16),
        "bo": jnp.zeros((L, 1, H), jnp.float32),
        "ln2_g": jnp.ones((L, 1, H), jnp.float32),
        "ln2_b": jnp.zeros((L, 1, H), jnp.float32),
        "w1": jax.random.uniform(keys[4], (L, H, M), jnp.float32, -lim, lim
                                 ).astype(jnp.bfloat16),
        "b1": jax.random.normal(keys[5], (L, 1, M), jnp.float32) * 1e-6,
        "w2": jax.random.uniform(keys[6], (L, M, H), jnp.float32, -lim, lim
                                 ).astype(jnp.bfloat16),
        "b2": jax.random.normal(keys[7], (L, 1, H), jnp.float32) * 1e-6,
    }
    enc_norm = {
        "g": jnp.ones((1, H), jnp.float32),
        "b": jnp.zeros((1, H), jnp.float32),
    }
    return params, enc_norm


if __name__ == "__main__":
    # small, forward-consistent shapes
    B, S = 2, 8
    hidden_size = 32
    num_layers = 2
    num_heads = 4
    mlp_dim = 2048  # fixed by tmain's config

    key = jax.random.PRNGKey(0)
    k_x, k_p = jax.random.split(key)
    x = jax.random.normal(k_x, (B, S, hidden_size), jnp.float32)

    params, enc_norm = init_params(k_p, hidden_size, num_layers, mlp_dim)

    out = tmain_forward(x, params, enc_norm, num_heads)
    out = jax.block_until_ready(out)
    assert out.shape == (B, S, hidden_size)
    assert bool(jnp.all(jnp.isfinite(out)))
    print("KERNEL_OK")
</pallas_src>

<mosaic_0001>
module attributes {stable_mosaic.version = 11 : i64} {
  func.func @encoder_kernel(%arg0: i32, %arg1: i32, %arg2: memref<16x32xf32, #tpu.memory_space<vmem>>, %arg3: memref<1x1x32xf32, #tpu.memory_space<vmem>>, %arg4: memref<1x1x32xf32, #tpu.memory_space<vmem>>, %arg5: memref<1x32x96xbf16, #tpu.memory_space<vmem>>, %arg6: memref<1x1x96xf32, #tpu.memory_space<vmem>>, %arg7: memref<1x32x32xbf16, #tpu.memory_space<vmem>>, %arg8: memref<1x1x32xf32, #tpu.memory_space<vmem>>, %arg9: memref<1x1x32xf32, #tpu.memory_space<vmem>>, %arg10: memref<1x1x32xf32, #tpu.memory_space<vmem>>, %arg11: memref<1x32x2048xbf16, #tpu.memory_space<vmem>>, %arg12: memref<1x1x2048xf32, #tpu.memory_space<vmem>>, %arg13: memref<1x2048x32xbf16, #tpu.memory_space<vmem>>, %arg14: memref<1x1x32xf32, #tpu.memory_space<vmem>>, %arg15: memref<1x32xf32, #tpu.memory_space<vmem>>, %arg16: memref<1x32xf32, #tpu.memory_space<vmem>>, %arg17: memref<16x32xf32, #tpu.memory_space<vmem>>, %arg18: memref<16x32xf32, #tpu.memory_space<vmem>>) attributes {dimension_semantics = [#tpu.dimension_semantics<parallel>, #tpu.dimension_semantics<arbitrary>], iteration_bounds = array<i64: 1, 2>, scalar_prefetch = 0 : i64, scratch_operands = 1 : i64, tpu.core_type = #tpu.core_type<tc>, window_params = [{transform_indices = @transform_0, window_bounds = array<i64: 16, 32>}, {transform_indices = @transform_1, window_bounds = array<i64: 1, 1, 32>}, {transform_indices = @transform_2, window_bounds = array<i64: 1, 1, 32>}, {transform_indices = @transform_3, window_bounds = array<i64: 1, 32, 96>}, {transform_indices = @transform_4, window_bounds = array<i64: 1, 1, 96>}, {transform_indices = @transform_5, window_bounds = array<i64: 1, 32, 32>}, {transform_indices = @transform_6, window_bounds = array<i64: 1, 1, 32>}, {transform_indices = @transform_7, window_bounds = array<i64: 1, 1, 32>}, {transform_indices = @transform_8, window_bounds = array<i64: 1, 1, 32>}, {transform_indices = @transform_9, window_bounds = array<i64: 1, 32, 2048>}, {transform_indices = @transform_10, window_bounds = array<i64: 1, 1, 2048>}, {transform_indices = @transform_11, window_bounds = array<i64: 1, 2048, 32>}, {transform_indices = @transform_12, window_bounds = array<i64: 1, 1, 32>}, {pipeline_mode = #tpu.pipeline_mode<synchronous>, transform_indices = @transform_13, window_bounds = array<i64: 1, 32>}, {pipeline_mode = #tpu.pipeline_mode<synchronous>, transform_indices = @transform_14, window_bounds = array<i64: 1, 32>}, {transform_indices = @transform_15, window_bounds = array<i64: 16, 32>}]} {
    %c0_i32 = arith.constant 0 : i32
    %0 = arith.cmpi eq, %arg1, %c0_i32 : i32
    %1 = arith.extui %0 : i1 to i32
    %c0_i32_0 = arith.constant 0 : i32
    %2 = arith.cmpi ne, %1, %c0_i32_0 : i32
    scf.if %2 {
      %c0_77 = arith.constant 0 : index
      %c0_78 = arith.constant 0 : index
      %193 = vector.load %arg2[%c0_77, %c0_78] : memref<16x32xf32, #tpu.memory_space<vmem>>, vector<16x32xf32>
      %c0_79 = arith.constant 0 : index
      %c0_80 = arith.constant 0 : index
      %194 = vector.load %arg18[%c0_79, %c0_80] : memref<16x32xf32, #tpu.memory_space<vmem>>, vector<16x32xf32>
      tpu.vector_store %arg18[%c0_79, %c0_80], %193 {strides = array<i32>} : memref<16x32xf32, #tpu.memory_space<vmem>>, vector<16x32xf32>,
    } else {
    }
    %c0 = arith.constant 0 : index
    %c0_1 = arith.constant 0 : index
    %3 = vector.load %arg18[%c0, %c0_1] : memref<16x32xf32, #tpu.memory_space<vmem>>, vector<16x32xf32>
    %c0_2 = arith.constant 0 : index
    %c0_3 = arith.constant 0 : index
    %c0_4 = arith.constant 0 : index
    %4 = vector.load %arg3[%c0_2, %c0_3, %c0_4] : memref<1x1x32xf32, #tpu.memory_space<vmem>>, vector<1x1x32xf32>
    %5 = vector.shape_cast %4 : vector<1x1x32xf32> to vector<32xf32>
    %c0_5 = arith.constant 0 : index
    %c0_6 = arith.constant 0 : index
    %c0_7 = arith.constant 0 : index
    %6 = vector.load %arg4[%c0_5, %c0_6, %c0_7] : memref<1x1x32xf32, #tpu.memory_space<vmem>>, vector<1x1x32xf32>
    %7 = vector.shape_cast %6 : vector<1x1x32xf32> to vector<32xf32>
    %cst = arith.constant dense<0.000000e+00> : vector<16xf32>
    %8 = vector.multi_reduction <add>, %3, %cst [1] : vector<16x32xf32> to vector<16xf32>
    %9 = vector.shape_cast %8 : vector<16xf32> to vector<16x1xf32>
    %cst_8 = arith.constant 3.200000e+01 : f32
    %10 = vector.broadcast %cst_8 : f32 to vector<16x1xf32>
    %11 = arith.divf %9, %10 : vector<16x1xf32>
    %12 = vector.broadcast %11 : vector<16x1xf32> to vector<16x32xf32>
    %13 = arith.subf %3, %12 : vector<16x32xf32>
    %14 = arith.mulf %13, %13 : vector<16x32xf32>
    %cst_9 = arith.constant dense<0.000000e+00> : vector<16xf32>
    %15 = vector.multi_reduction <add>, %14, %cst_9 [1] : vector<16x32xf32> to vector<16xf32>
    %16 = vector.shape_cast %15 : vector<16xf32> to vector<16x1xf32>
    %cst_10 = arith.constant 3.200000e+01 : f32
    %17 = vector.broadcast %cst_10 : f32 to vector<16x1xf32>
    %18 = arith.divf %16, %17 : vector<16x1xf32>
    %19 = vector.broadcast %11 : vector<16x1xf32> to vector<16x32xf32>
    %20 = arith.subf %3, %19 : vector<16x32xf32>
    %cst_11 = arith.constant 9.99999997E-7 : f32
    %21 = vector.broadcast %cst_11 : f32 to vector<16x1xf32>
    %22 = arith.addf %18, %21 : vector<16x1xf32>
    %23 = math.rsqrt %22 : vector<16x1xf32>
    %24 = vector.broadcast %23 : vector<16x1xf32> to vector<16x32xf32>
    %25 = arith.mulf %20, %24 : vector<16x32xf32>
    %26 = vector.shape_cast %5 : vector<32xf32> to vector<1x32xf32>
    %27 = vector.broadcast %26 : vector<1x32xf32> to vector<16x32xf32>
    %28 = arith.mulf %25, %27 : vector<16x32xf32>
    %29 = vector.shape_cast %7 : vector<32xf32> to vector<1x32xf32>
    %30 = vector.broadcast %29 : vector<1x32xf32> to vector<16x32xf32>
    %31 = arith.addf %28, %30 : vector<16x32xf32>
    %32 = arith.truncf %31 : vector<16x32xf32> to vector<16x32xbf16>
    %c0_12 = arith.constant 0 : index
    %c0_13 = arith.constant 0 : index
    %c0_14 = arith.constant 0 : index
    %33 = vector.load %arg5[%c0_12, %c0_13, %c0_14] : memref<1x32x96xbf16, #tpu.memory_space<vmem>>, vector<1x32x96xbf16>
    %34 = vector.shape_cast %33 : vector<1x32x96xbf16> to vector<32x96xbf16>
    %cst_15 = arith.constant dense<0.000000e+00> : vector<16x96xf32>
    %35 = tpu.matmul %32, %34, %cst_15 {dimension_numbers = #tpu.dot_dimension_numbers<[1], [0], [0], [1], [0, 0, 1, 1], [], []>} : vector<16x32xbf16>, vector<32x96xbf16>, vector<16x96xf32> -> vector<16x96xf32>
    %c0_16 = arith.constant 0 : index
    %c0_17 = arith.constant 0 : index
    %c0_18 = arith.constant 0 : index
    %36 = vector.load %arg6[%c0_16, %c0_17, %c0_18] : memref<1x1x96xf32, #tpu.memory_space<vmem>>, vector<1x1x96xf32>
    %37 = vector.shape_cast %36 : vector<1x1x96xf32> to vector<1x96xf32>
    %38 = vector.broadcast %37 : vector<1x96xf32> to vector<16x96xf32>
    %39 = arith.addf %35, %38 : vector<16x96xf32>
    %40 = vector.shape_cast %39 : vector<16x96xf32> to vector<2x8x96xf32>
    %41 = vector.extract_strided_slice %40 {offsets = [0, 0, 0], sizes = [2, 8, 8], strides = [1, 1, 1]} : vector<2x8x96xf32> to vector<2x8x8xf32>
    %42 = arith.truncf %41 : vector<2x8x8xf32> to vector<2x8x8xbf16>
    %43 = vector.extract_strided_slice %40 {offsets = [0, 0, 32], sizes = [2, 8, 8], strides = [1, 1, 1]} : vector<2x8x96xf32> to vector<2x8x8xf32>
    %44 = arith.truncf %43 : vector<2x8x8xf32> to vector<2x8x8xbf16>
    %45 = vector.extract_strided_slice %40 {offsets = [0, 0, 64], sizes = [2, 8, 8], strides = [1, 1, 1]} : vector<2x8x96xf32> to vector<2x8x8xf32>
    %46 = arith.truncf %45 : vector<2x8x8xf32> to vector<2x8x8xbf16>
    "tpu.trace_start"() <{level = 10 : i32, message = "bqd,bkd->bqk"}> : () -> ()
    %cst_19 = arith.constant dense<0.000000e+00> : vector<2x8x8xf32>
    %47 = tpu.matmul %42, %44, %cst_19 {dimension_numbers = #tpu.dot_dimension_numbers<[2], [2], [1], [1], [0, 0, 0, 1, 1, 1], [0], [0]>} : vector<2x8x8xbf16>, vector<2x8x8xbf16>, vector<2x8x8xf32> -> vector<2x8x8xf32>
    "tpu.trace_stop"() : () -> ()
    %cst_20 = arith.constant 0.353553385 : f32
    %48 = vector.broadcast %cst_20 : f32 to vector<2x8x8xf32>
    %49 = arith.mulf %47, %48 : vector<2x8x8xf32>
    %cst_21 = arith.constant dense<0xFF800000> : vector<2x8xf32>
    %50 = vector.multi_reduction <maximumf>, %49, %cst_21 [2] : vector<2x8x8xf32> to vector<2x8xf32>
    %51 = vector.shape_cast %50 : vector<2x8xf32> to vector<2x8x1xf32>
    %52 = vector.broadcast %51 : vector<2x8x1xf32> to vector<2x8x8xf32>
    %53 = arith.subf %49, %52 : vector<2x8x8xf32>
    %54 = math.exp %53 : vector<2x8x8xf32>
    %cst_22 = arith.constant dense<0.000000e+00> : vector<2x8xf32>
    %55 = vector.multi_reduction <add>, %54, %cst_22 [2] : vector<2x8x8xf32> to vector<2x8xf32>
    %56 = vector.shape_cast %55 : vector<2x8xf32> to vector<2x8x1xf32>
    %57 = tpu.reciprocal %56 {approx = true} : vector<2x8x1xf32> -> vector<2x8x1xf32>
    %58 = vector.broadcast %57 : vector<2x8x1xf32> to vector<2x8x8xf32>
    %59 = arith.mulf %54, %58 : vector<2x8x8xf32>
    %60 = arith.truncf %59 : vector<2x8x8xf32> to vector<2x8x8xbf16>
    "tpu.trace_start"() <{level = 10 : i32, message = "bqk,bkd->bqd"}> : () -> ()
    %cst_23 = arith.constant dense<0.000000e+00> : vector<2x8x8xf32>
    %61 = tpu.matmul %60, %46, %cst_23 {dimension_numbers = #tpu.dot_dimension_numbers<[2], [1], [1], [2], [0, 0, 0, 1, 1, 2], [0], [0]>} : vector<2x8x8xbf16>, vector<2x8x8xbf16>, vector<2x8x8xf32> -> vector<2x8x8xf32>
    "tpu.trace_stop"() : () -> ()
    %62 = vector.extract_strided_slice %40 {offsets = [0, 0, 8], sizes = [2, 8, 8], strides = [1, 1, 1]} : vector<2x8x96xf32> to vector<2x8x8xf32>
    %63 = arith.truncf %62 : vector<2x8x8xf32> to vector<2x8x8xbf16>
    %64 = vector.extract_strided_slice %40 {offsets = [0, 0, 40], sizes = [2, 8, 8], strides = [1, 1, 1]} : vector<2x8x96xf32> to vector<2x8x8xf32>
    %65 = arith.truncf %64 : vector<2x8x8xf32> to vector<2x8x8xbf16>
    %66 = vector.extract_strided_slice %40 {offsets = [0, 0, 72], sizes = [2, 8, 8], strides = [1, 1, 1]} : vector<2x8x96xf32> to vector<2x8x8xf32>
    %67 = arith.truncf %66 : vector<2x8x8xf32> to vector<2x8x8xbf16>
    "tpu.trace_start"() <{level = 10 : i32, message = "bqd,bkd->bqk"}> : () -> ()
    %cst_24 = arith.constant dense<0.000000e+00> : vector<2x8x8xf32>
    %68 = tpu.matmul %63, %65, %cst_24 {dimension_numbers = #tpu.dot_dimension_numbers<[2], [2], [1], [1], [0, 0, 0, 1, 1, 1], [0], [0]>} : vector<2x8x8xbf16>, vector<2x8x8xbf16>, vector<2x8x8xf32> -> vector<2x8x8xf32>
    "tpu.trace_stop"() : () -> ()
    %cst_25 = arith.constant 0.353553385 : f32
    %69 = vector.broadcast %cst_25 : f32 to vector<2x8x8xf32>
    %70 = arith.mulf %68, %69 : vector<2x8x8xf32>
    %cst_26 = arith.constant dense<0xFF800000> : vector<2x8xf32>
    %71 = vector.multi_reduction <maximumf>, %70, %cst_26 [2] : vector<2x8x8xf32> to vector<2x8xf32>
    %72 = vector.shape_cast %71 : vector<2x8xf32> to vector<2x8x1xf32>
    %73 = vector.broadcast %72 : vector<2x8x1xf32> to vector<2x8x8xf32>
    %74 = arith.subf %70, %73 : vector<2x8x8xf32>
    %75 = math.exp %74 : vector<2x8x8xf32>
    %cst_27 = arith.constant dense<0.000000e+00> : vector<2x8xf32>
    %76 = vector.multi_reduction <add>, %75, %cst_27 [2] : vector<2x8x8xf32> to vector<2x8xf32>
    %77 = vector.shape_cast %76 : vector<2x8xf32> to vector<2x8x1xf32>
    %78 = tpu.reciprocal %77 {approx = true} : vector<2x8x1xf32> -> vector<2x8x1xf32>
    %79 = vector.broadcast %78 : vector<2x8x1xf32> to vector<2x8x8xf32>
    %80 = arith.mulf %75, %79 : vector<2x8x8xf32>
    %81 = arith.truncf %80 : vector<2x8x8xf32> to vector<2x8x8xbf16>
    "tpu.trace_start"() <{level = 10 : i32, message = "bqk,bkd->bqd"}> : () -> ()
    %cst_28 = arith.constant dense<0.000000e+00> : vector<2x8x8xf32>
    %82 = tpu.matmul %81, %67, %cst_28 {dimension_numbers = #tpu.dot_dimension_numbers<[2], [1], [1], [2], [0, 0, 0, 1, 1, 2], [0], [0]>} : vector<2x8x8xbf16>, vector<2x8x8xbf16>, vector<2x8x8xf32> -> vector<2x8x8xf32>
    "tpu.trace_stop"() : () -> ()
    %83 = vector.extract_strided_slice %40 {offsets = [0, 0, 16], sizes = [2, 8, 8], strides = [1, 1, 1]} : vector<2x8x96xf32> to vector<2x8x8xf32>
    %84 = arith.truncf %83 : vector<2x8x8xf32> to vector<2x8x8xbf16>
    %85 = vector.extract_strided_slice %40 {offsets = [0, 0, 48], sizes = [2, 8, 8], strides = [1, 1, 1]} : vector<2x8x96xf32> to vector<2x8x8xf32>
    %86 = arith.truncf %85 : vector<2x8x8xf32> to vector<2x8x8xbf16>
    %87 = vector.extract_strided_slice %40 {offsets = [0, 0, 80], sizes = [2, 8, 8], strides = [1, 1, 1]} : vector<2x8x96xf32> to vector<2x8x8xf32>
    %88 = arith.truncf %87 : vector<2x8x8xf32> to vector<2x8x8xbf16>
    "tpu.trace_start"() <{level = 10 : i32, message = "bqd,bkd->bqk"}> : () -> ()
    %cst_29 = arith.constant dense<0.000000e+00> : vector<2x8x8xf32>
    %89 = tpu.matmul %84, %86, %cst_29 {dimension_numbers = #tpu.dot_dimension_numbers<[2], [2], [1], [1], [0, 0, 0, 1, 1, 1], [0], [0]>} : vector<2x8x8xbf16>, vector<2x8x8xbf16>, vector<2x8x8xf32> -> vector<2x8x8xf32>
    "tpu.trace_stop"() : () -> ()
    %cst_30 = arith.constant 0.353553385 : f32
    %90 = vector.broadcast %cst_30 : f32 to vector<2x8x8xf32>
    %91 = arith.mulf %89, %90 : vector<2x8x8xf32>
    %cst_31 = arith.constant dense<0xFF800000> : vector<2x8xf32>
    %92 = vector.multi_reduction <maximumf>, %91, %cst_31 [2] : vector<2x8x8xf32> to vector<2x8xf32>
    %93 = vector.shape_cast %92 : vector<2x8xf32> to vector<2x8x1xf32>
    %94 = vector.broadcast %93 : vector<2x8x1xf32> to vector<2x8x8xf32>
    %95 = arith.subf %91, %94 : vector<2x8x8xf32>
    %96 = math.exp %95 : vector<2x8x8xf32>
    %cst_32 = arith.constant dense<0.000000e+00> : vector<2x8xf32>
    %97 = vector.multi_reduction <add>, %96, %cst_32 [2] : vector<2x8x8xf32> to vector<2x8xf32>
    %98 = vector.shape_cast %97 : vector<2x8xf32> to vector<2x8x1xf32>
    %99 = tpu.reciprocal %98 {approx = true} : vector<2x8x1xf32> -> vector<2x8x1xf32>
    %100 = vector.broadcast %99 : vector<2x8x1xf32> to vector<2x8x8xf32>
    %101 = arith.mulf %96, %100 : vector<2x8x8xf32>
    %102 = arith.truncf %101 : vector<2x8x8xf32> to vector<2x8x8xbf16>
    "tpu.trace_start"() <{level = 10 : i32, message = "bqk,bkd->bqd"}> : () -> ()
    %cst_33 = arith.constant dense<0.000000e+00> : vector<2x8x8xf32>
    %103 = tpu.matmul %102, %88, %cst_33 {dimension_numbers = #tpu.dot_dimension_numbers<[2], [1], [1], [2], [0, 0, 0, 1, 1, 2], [0], [0]>} : vector<2x8x8xbf16>, vector<2x8x8xbf16>, vector<2x8x8xf32> -> vector<2x8x8xf32>
    "tpu.trace_stop"() : () -> ()
    %104 = vector.extract_strided_slice %40 {offsets = [0, 0, 24], sizes = [2, 8, 8], strides = [1, 1, 1]} : vector<2x8x96xf32> to vector<2x8x8xf32>
    %105 = arith.truncf %104 : vector<2x8x8xf32> to vector<2x8x8xbf16>
    %106 = vector.extract_strided_slice %40 {offsets = [0, 0, 56], sizes = [2, 8, 8], strides = [1, 1, 1]} : vector<2x8x96xf32> to vector<2x8x8xf32>
    %107 = arith.truncf %106 : vector<2x8x8xf32> to vector<2x8x8xbf16>
    %108 = vector.extract_strided_slice %40 {offsets = [0, 0, 88], sizes = [2, 8, 8], strides = [1, 1, 1]} : vector<2x8x96xf32> to vector<2x8x8xf32>
    %109 = arith.truncf %108 : vector<2x8x8xf32> to vector<2x8x8xbf16>
    "tpu.trace_start"() <{level = 10 : i32, message = "bqd,bkd->bqk"}> : () -> ()
    %cst_34 = arith.constant dense<0.000000e+00> : vector<2x8x8xf32>
    %110 = tpu.matmul %105, %107, %cst_34 {dimension_numbers = #tpu.dot_dimension_numbers<[2], [2], [1], [1], [0, 0, 0, 1, 1, 1], [0], [0]>} : vector<2x8x8xbf16>, vector<2x8x8xbf16>, vector<2x8x8xf32> -> vector<2x8x8xf32>
    "tpu.trace_stop"() : () -> ()
    %cst_35 = arith.constant 0.353553385 : f32
    %111 = vector.broadcast %cst_35 : f32 to vector<2x8x8xf32>
    %112 = arith.mulf %110, %111 : vector<2x8x8xf32>
    %cst_36 = arith.constant dense<0xFF800000> : vector<2x8xf32>
    %113 = vector.multi_reduction <maximumf>, %112, %cst_36 [2] : vector<2x8x8xf32> to vector<2x8xf32>
    %114 = vector.shape_cast %113 : vector<2x8xf32> to vector<2x8x1xf32>
    %115 = vector.broadcast %114 : vector<2x8x1xf32> to vector<2x8x8xf32>
    %116 = arith.subf %112, %115 : vector<2x8x8xf32>
    %117 = math.exp %116 : vector<2x8x8xf32>
    %cst_37 = arith.constant dense<0.000000e+00> : vector<2x8xf32>
    %118 = vector.multi_reduction <add>, %117, %cst_37 [2] : vector<2x8x8xf32> to vector<2x8xf32>
    %119 = vector.shape_cast %118 : vector<2x8xf32> to vector<2x8x1xf32>
    %120 = tpu.reciprocal %119 {approx = true} : vector<2x8x1xf32> -> vector<2x8x1xf32>
    %121 = vector.broadcast %120 : vector<2x8x1xf32> to vector<2x8x8xf32>
    %122 = arith.mulf %117, %121 : vector<2x8x8xf32>
    %123 = arith.truncf %122 : vector<2x8x8xf32> to vector<2x8x8xbf16>
    "tpu.trace_start"() <{level = 10 : i32, message = "bqk,bkd->bqd"}> : () -> ()
    %cst_38 = arith.constant dense<0.000000e+00> : vector<2x8x8xf32>
    %124 = tpu.matmul %123, %109, %cst_38 {dimension_numbers = #tpu.dot_dimension_numbers<[2], [1], [1], [2], [0, 0, 0, 1, 1, 2], [0], [0]>} : vector<2x8x8xbf16>, vector<2x8x8xbf16>, vector<2x8x8xf32> -> vector<2x8x8xf32>
    "tpu.trace_stop"() : () -> ()
    %125 = tpu.concatenate %61, %82, %103, %124 in 2 : vector<2x8x8xf32>, vector<2x8x8xf32>, vector<2x8x8xf32>, vector<2x8x8xf32> -> vector<2x8x32xf32>
    %126 = vector.shape_cast %125 : vector<2x8x32xf32> to vector<16x32xf32>
    %127 = arith.truncf %126 : vector<16x32xf32> to vector<16x32xbf16>
    %c0_39 = arith.constant 0 : index
    %c0_40 = arith.constant 0 : index
    %c0_41 = arith.constant 0 : index
    %128 = vector.load %arg7[%c0_39, %c0_40, %c0_41] : memref<1x32x32xbf16, #tpu.memory_space<vmem>>, vector<1x32x32xbf16>
    %129 = vector.shape_cast %128 : vector<1x32x32xbf16> to vector<32x32xbf16>
    %cst_42 = arith.constant dense<0.000000e+00> : vector<16x32xf32>
    %130 = tpu.matmul %127, %129, %cst_42 {dimension_numbers = #tpu.dot_dimension_numbers<[1], [0], [0], [1], [0, 0, 1, 1], [], []>} : vector<16x32xbf16>, vector<32x32xbf16>, vector<16x32xf32> -> vector<16x32xf32>
    %c0_43 = arith.constant 0 : index
    %c0_44 = arith.constant 0 : index
    %c0_45 = arith.constant 0 : index
    %131 = vector.load %arg8[%c0_43, %c0_44, %c0_45] : memref<1x1x32xf32, #tpu.memory_space<vmem>>, vector<1x1x32xf32>
    %132 = vector.shape_cast %131 : vector<1x1x32xf32> to vector<1x32xf32>
    %133 = vector.broadcast %132 : vector<1x32xf32> to vector<16x32xf32>
    %134 = arith.addf %130, %133 : vector<16x32xf32>
    %135 = arith.addf %3, %134 : vector<16x32xf32>
    %c0_46 = arith.constant 0 : index
    %c0_47 = arith.constant 0 : index
    %c0_48 = arith.constant 0 : index
    %136 = vector.load %arg9[%c0_46, %c0_47, %c0_48] : memref<1x1x32xf32, #tpu.memory_space<vmem>>, vector<1x1x32xf32>
    %137 = vector.shape_cast %136 : vector<1x1x32xf32> to vector<32xf32>
    %c0_49 = arith.constant 0 : index
    %c0_50 = arith.constant 0 : index
    %c0_51 = arith.constant 0 : index
    %138 = vector.load %arg10[%c0_49, %c0_50, %c0_51] : memref<1x1x32xf32, #tpu.memory_space<vmem>>, vector<1x1x32xf32>
    %139 = vector.shape_cast %138 : vector<1x1x32xf32> to vector<32xf32>
    %cst_52 = arith.constant dense<0.000000e+00> : vector<16xf32>
    %140 = vector.multi_reduction <add>, %135, %cst_52 [1] : vector<16x32xf32> to vector<16xf32>
    %141 = vector.shape_cast %140 : vector<16xf32> to vector<16x1xf32>
    %cst_53 = arith.constant 3.200000e+01 : f32
    %142 = vector.broadcast %cst_53 : f32 to vector<16x1xf32>
    %143 = arith.divf %141, %142 : vector<16x1xf32>
    %144 = vector.broadcast %143 : vector<16x1xf32> to vector<16x32xf32>
    %145 = arith.subf %135, %144 : vector<16x32xf32>
    %146 = arith.mulf %145, %145 : vector<16x32xf32>
    %cst_54 = arith.constant dense<0.000000e+00> : vector<16xf32>
    %147 = vector.multi_reduction <add>, %146, %cst_54 [1] : vector<16x32xf32> to vector<16xf32>
    %148 = vector.shape_cast %147 : vector<16xf32> to vector<16x1xf32>
    %cst_55 = arith.constant 3.200000e+01 : f32
    %149 = vector.broadcast %cst_55 : f32 to vector<16x1xf32>
    %150 = arith.divf %148, %149 : vector<16x1xf32>
    %151 = vector.broadcast %143 : vector<16x1xf32> to vector<16x32xf32>
    %152 = arith.subf %135, %151 : vector<16x32xf32>
    %cst_56 = arith.constant 9.99999997E-7 : f32
    %153 = vector.broadcast %cst_56 : f32 to vector<16x1xf32>
    %154 = arith.addf %150, %153 : vector<16x1xf32>
    %155 = math.rsqrt %154 : vector<16x1xf32>
    %156 = vector.broadcast %155 : vector<16x1xf32> to vector<16x32xf32>
    %157 = arith.mulf %152, %156 : vector<16x32xf32>
    %158 = vector.shape_cast %137 : vector<32xf32> to vector<1x32xf32>
    %159 = vector.broadcast %158 : vector<1x32xf32> to vector<16x32xf32>
    %160 = arith.mulf %157, %159 : vector<16x32xf32>
    %161 = vector.shape_cast %139 : vector<32xf32> to vector<1x32xf32>
    %162 = vector.broadcast %161 : vector<1x32xf32> to vector<16x32xf32>
    %163 = arith.addf %160, %162 : vector<16x32xf32>
    %164 = arith.truncf %163 : vector<16x32xf32> to vector<16x32xbf16>
    %c0_57 = arith.constant 0 : index
    %c0_58 = arith.constant 0 : index
    %c0_59 = arith.constant 0 : index
    %165 = vector.load %arg11[%c0_57, %c0_58, %c0_59] : memref<1x32x2048xbf16, #tpu.memory_space<vmem>>, vector<1x32x2048xbf16>
    %166 = vector.shape_cast %165 : vector<1x32x2048xbf16> to vector<32x2048xbf16>
    %cst_60 = arith.constant dense<0.000000e+00> : vector<16x2048xf32>
    %167 = tpu.matmul %164, %166, %cst_60 {dimension_numbers = #tpu.dot_dimension_numbers<[1], [0], [0], [1], [0, 0, 1, 1], [], []>} : vector<16x32xbf16>, vector<32x2048xbf16>, vector<16x2048xf32> -> vector<16x2048xf32>
    %c0_61 = arith.constant 0 : index
    %c0_62 = arith.constant 0 : index
    %c0_63 = arith.constant 0 : index
    %168 = vector.load %arg12[%c0_61, %c0_62, %c0_63] : memref<1x1x2048xf32, #tpu.memory_space<vmem>>, vector<1x1x2048xf32>
    %169 = vector.shape_cast %168 : vector<1x1x2048xf32> to vector<1x2048xf32>
    %170 = vector.broadcast %169 : vector<1x2048xf32> to vector<16x2048xf32>
    %171 = arith.addf %167, %170 : vector<16x2048xf32>
    %cst_64 = arith.constant 5.000000e-01 : f32
    %172 = vector.broadcast %cst_64 : f32 to vector<16x2048xf32>
    %173 = arith.mulf %172, %171 : vector<16x2048xf32>
    %cst_65 = arith.constant 0.707106769 : f32
    %174 = vector.broadcast %cst_65 : f32 to vector<16x2048xf32>
    %175 = arith.mulf %171, %174 : vector<16x2048xf32>
    %176 = math.erf %175 : vector<16x2048xf32>
    %cst_66 = arith.constant 1.000000e+00 : f32
    %177 = vector.broadcast %cst_66 : f32 to vector<16x2048xf32>
    %178 = arith.addf %177, %176 : vector<16x2048xf32>
    %179 = arith.mulf %173, %178 : vector<16x2048xf32>
    %180 = arith.truncf %179 : vector<16x2048xf32> to vector<16x2048xbf16>
    %c0_67 = arith.constant 0 : index
    %c0_68 = arith.constant 0 : index
    %c0_69 = arith.constant 0 : index
    %181 = vector.load %arg13[%c0_67, %c0_68, %c0_69] : memref<1x2048x32xbf16, #tpu.memory_space<vmem>>, vector<1x2048x32xbf16>
    %182 = vector.shape_cast %181 : vector<1x2048x32xbf16> to vector<2048x32xbf16>
    %cst_70 = arith.constant dense<0.000000e+00> : vector<16x32xf32>
    %183 = tpu.matmul %180, %182, %cst_70 {dimension_numbers = #tpu.dot_dimension_numbers<[1], [0], [0], [1], [0, 0, 1, 1], [], []>} : vector<16x2048xbf16>, vector<2048x32xbf16>, vector<16x32xf32> -> vector<16x32xf32>
    %184 = arith.addf %135, %183 : vector<16x32xf32>
    %c0_71 = arith.constant 0 : index
    %c0_72 = arith.constant 0 : index
    %c0_73 = arith.constant 0 : index
    %185 = vector.load %arg14[%c0_71, %c0_72, %c0_73] : memref<1x1x32xf32, #tpu.memory_space<vmem>>, vector<1x1x32xf32>
    %186 = vector.shape_cast %185 : vector<1x1x32xf32> to vector<1x32xf32>
    %187 = vector.broadcast %186 : vector<1x32xf32> to vector<16x32xf32>
    %188 = arith.addf %184, %187 : vector<16x32xf32>
    %c0_74 = arith.constant 0 : index
    %c0_75 = arith.constant 0 : index
    %189 = vector.load %arg18[%c0_74, %c0_75] : memref<16x32xf32, #tpu.memory_space<vmem>>, vector<16x32xf32>
    tpu.vector_store %arg18[%c0_74, %c0_75], %188 {strides = array<i32>} : memref<16x32xf32, #tpu.memory_space<vmem>>, vector<16x32xf32>,
    %c1_i32 = arith.constant 1 : i32
    %190 = arith.cmpi eq, %arg1, %c1_i32 : i32
    %191 = arith.extui %190 : i1 to i32
    %c0_i32_76 = arith.constant 0 : i32
    %192 = arith.cmpi ne, %191, %c0_i32_76 : i32
    scf.if %192 {
      %c0_77 = arith.constant 0 : index
      %c0_78 = arith.constant 0 : index
      %193 = vector.load %arg15[%c0_77, %c0_78] : memref<1x32xf32, #tpu.memory_space<vmem>>, vector<1x32xf32>
      %194 = vector.shape_cast %193 : vector<1x32xf32> to vector<32xf32>
      %c0_79 = arith.constant 0 : index
      %c0_80 = arith.constant 0 : index
      %195 = vector.load %arg16[%c0_79, %c0_80] : memref<1x32xf32, #tpu.memory_space<vmem>>, vector<1x32xf32>
      %196 = vector.shape_cast %195 : vector<1x32xf32> to vector<32xf32>
      %cst_81 = arith.constant dense<0.000000e+00> : vector<16xf32>
      %197 = vector.multi_reduction <add>, %188, %cst_81 [1] : vector<16x32xf32> to vector<16xf32>
      %198 = vector.shape_cast %197 : vector<16xf32> to vector<16x1xf32>
      %cst_82 = arith.constant 3.200000e+01 : f32
      %199 = vector.broadcast %cst_82 : f32 to vector<16x1xf32>
      %200 = arith.divf %198, %199 : vector<16x1xf32>
      %201 = vector.broadcast %200 : vector<16x1xf32> to vector<16x32xf32>
      %202 = arith.subf %188, %201 : vector<16x32xf32>
      %203 = arith.mulf %202, %202 : vector<16x32xf32>
      %cst_83 = arith.constant dense<0.000000e+00> : vector<16xf32>
      %204 = vector.multi_reduction <add>, %203, %cst_83 [1] : vector<16x32xf32> to vector<16xf32>
      %205 = vector.shape_cast %204 : vector<16xf32> to vector<16x1xf32>
      %cst_84 = arith.constant 3.200000e+01 : f32
      %206 = vector.broadcast %cst_84 : f32 to vector<16x1xf32>
      %207 = arith.divf %205, %206 : vector<16x1xf32>
      %208 = vector.broadcast %200 : vector<16x1xf32> to vector<16x32xf32>
      %209 = arith.subf %188, %208 : vector<16x32xf32>
      %cst_85 = arith.constant 9.99999997E-7 : f32
      %210 = vector.broadcast %cst_85 : f32 to vector<16x1xf32>
      %211 = arith.addf %207, %210 : vector<16x1xf32>
      %212 = math.rsqrt %211 : vector<16x1xf32>
      %213 = vector.broadcast %212 : vector<16x1xf32> to vector<16x32xf32>
      %214 = arith.mulf %209, %213 : vector<16x32xf32>
      %215 = vector.shape_cast %194 : vector<32xf32> to vector<1x32xf32>
      %216 = vector.broadcast %215 : vector<1x32xf32> to vector<16x32xf32>
      %217 = arith.mulf %214, %216 : vector<16x32xf32>
      %218 = vector.shape_cast %196 : vector<32xf32> to vector<1x32xf32>
      %219 = vector.broadcast %218 : vector<1x32xf32> to vector<16x32xf32>
      %220 = arith.addf %217, %219 : vector<16x32xf32>
      %c0_86 = arith.constant 0 : index
      %c0_87 = arith.constant 0 : index
      %221 = vector.load %arg17[%c0_86, %c0_87] : memref<16x32xf32, #tpu.memory_space<vmem>>, vector<16x32xf32>
      tpu.vector_store %arg17[%c0_86, %c0_87], %220 {strides = array<i32>} : memref<16x32xf32, #tpu.memory_space<vmem>>, vector<16x32xf32>,
    } else {
    }
    return
  }
  func.func @transform_0(%arg0: i32, %arg1: i32) -> (i32, i32) {
    %c0_i32 = arith.constant 0 : i32
    %c0_i32_0 = arith.constant 0 : i32
    return %arg0, %c0_i32 : i32, i32
  }
  func.func @transform_1(%arg0: i32, %arg1: i32) -> (i32, i32, i32) {
    %c0_i32 = arith.constant 0 : i32
    %c0_i32_0 = arith.constant 0 : i32
    %c0_i32_1 = arith.constant 0 : i32
    return %arg1, %c0_i32, %c0_i32_0 : i32, i32, i32
  }
  func.func @transform_2(%arg0: i32, %arg1: i32) -> (i32, i32, i32) {
    %c0_i32 = arith.constant 0 : i32
    %c0_i32_0 = arith.constant 0 : i32
    %c0_i32_1 = arith.constant 0 : i32
    return %arg1, %c0_i32, %c0_i32_0 : i32, i32, i32
  }
  func.func @transform_3(%arg0: i32, %arg1: i32) -> (i32, i32, i32) {
    %c0_i32 = arith.constant 0 : i32
    %c0_i32_0 = arith.constant 0 : i32
    %c0_i32_1 = arith.constant 0 : i32
    return %arg1, %c0_i32, %c0_i32_0 : i32, i32, i32
  }
  func.func @transform_4(%arg0: i32, %arg1: i32) -> (i32, i32, i32) {
    %c0_i32 = arith.constant 0 : i32
    %c0_i32_0 = arith.constant 0 : i32
    %c0_i32_1 = arith.constant 0 : i32
    return %arg1, %c0_i32, %c0_i32_0 : i32, i32, i32
  }
  func.func @transform_5(%arg0: i32, %arg1: i32) -> (i32, i32, i32) {
    %c0_i32 = arith.constant 0 : i32
    %c0_i32_0 = arith.constant 0 : i32
    %c0_i32_1 = arith.constant 0 : i32
    return %arg1, %c0_i32, %c0_i32_0 : i32, i32, i32
  }
  func.func @transform_6(%arg0: i32, %arg1: i32) -> (i32, i32, i32) {
    %c0_i32 = arith.constant 0 : i32
    %c0_i32_0 = arith.constant 0 : i32
    %c0_i32_1 = arith.constant 0 : i32
    return %arg1, %c0_i32, %c0_i32_0 : i32, i32, i32
  }
  func.func @transform_7(%arg0: i32, %arg1: i32) -> (i32, i32, i32) {
    %c0_i32 = arith.constant 0 : i32
    %c0_i32_0 = arith.constant 0 : i32
    %c0_i32_1 = arith.constant 0 : i32
    return %arg1, %c0_i32, %c0_i32_0 : i32, i32, i32
  }
  func.func @transform_8(%arg0: i32, %arg1: i32) -> (i32, i32, i32) {
    %c0_i32 = arith.constant 0 : i32
    %c0_i32_0 = arith.constant 0 : i32
    %c0_i32_1 = arith.constant 0 : i32
    return %arg1, %c0_i32, %c0_i32_0 : i32, i32, i32
  }
  func.func @transform_9(%arg0: i32, %arg1: i32) -> (i32, i32, i32) {
    %c0_i32 = arith.constant 0 : i32
    %c0_i32_0 = arith.constant 0 : i32
    %c0_i32_1 = arith.constant 0 : i32
    return %arg1, %c0_i32, %c0_i32_0 : i32, i32, i32
  }
  func.func @transform_10(%arg0: i32, %arg1: i32) -> (i32, i32, i32) {
    %c0_i32 = arith.constant 0 : i32
    %c0_i32_0 = arith.constant 0 : i32
    %c0_i32_1 = arith.constant 0 : i32
    return %arg1, %c0_i32, %c0_i32_0 : i32, i32, i32
  }
  func.func @transform_11(%arg0: i32, %arg1: i32) -> (i32, i32, i32) {
    %c0_i32 = arith.constant 0 : i32
    %c0_i32_0 = arith.constant 0 : i32
    %c0_i32_1 = arith.constant 0 : i32
    return %arg1, %c0_i32, %c0_i32_0 : i32, i32, i32
  }
  func.func @transform_12(%arg0: i32, %arg1: i32) -> (i32, i32, i32) {
    %c0_i32 = arith.constant 0 : i32
    %c0_i32_0 = arith.constant 0 : i32
    %c0_i32_1 = arith.constant 0 : i32
    return %arg1, %c0_i32, %c0_i32_0 : i32, i32, i32
  }
  func.func @transform_13(%arg0: i32, %arg1: i32) -> (i32, i32) {
    %c0_i32 = arith.constant 0 : i32
    %c0_i32_0 = arith.constant 0 : i32
    %c0_i32_1 = arith.constant 0 : i32
    return %c0_i32, %c0_i32_0 : i32, i32
  }
  func.func @transform_14(%arg0: i32, %arg1: i32) -> (i32, i32) {
    %c0_i32 = arith.constant 0 : i32
    %c0_i32_0 = arith.constant 0 : i32
    %c0_i32_1 = arith.constant 0 : i32
    return %c0_i32, %c0_i32_0 : i32, i32
  }
  func.func @transform_15(%arg0: i32, %arg1: i32) -> (i32, i32) {
    %c0_i32 = arith.constant 0 : i32
    %c0_i32_0 = arith.constant 0 : i32
    return %arg0, %c0_i32 : i32, i32
  }
}

</mosaic_0001>

<llo_original>
// kernel: tpu_custom_call.1
$region0: #{tpu_custom_call.1}
  #allocation0 [shape = 'u32[]', space=smem, size = 0x4, offset = 0x4, fixed_abs, tag = 'smem constant byte address 0x4 - core index']
  #allocation1 [shape = 'u32[144,128]{1,0:T(1,128)}', space=vmem, size = 0x12000, scoped, tag = 'internal scratch']
  #allocation2 [shape = 'f32[16,32]{1,0:T(8,128)}', space=vmem, size = 0x2000, scoped, tag = 'scratch operand']
  %s0 = inlined_call_operand.vmem [shape: f32[16,32], index: 0, kind: input, shape index: {}]
  %s1 = inlined_call_operand.vmem [shape: f32[2,1,32], index: 1, kind: input, shape index: {}]
  %s2 = inlined_call_operand.vmem [shape: f32[2,1,32], index: 2, kind: input, shape index: {}]
  %s3 = inlined_call_operand.vmem [shape: bf16[2,32,96], index: 3, kind: input, shape index: {}]
  %s4 = inlined_call_operand.vmem [shape: f32[2,1,96], index: 4, kind: input, shape index: {}]
  %s5 = inlined_call_operand.vmem [shape: bf16[2,32,32], index: 5, kind: input, shape index: {}]
  %s6 = inlined_call_operand.vmem [shape: f32[2,1,32], index: 6, kind: input, shape index: {}]
  %s7 = inlined_call_operand.vmem [shape: f32[2,1,32], index: 7, kind: input, shape index: {}]
  %s8 = inlined_call_operand.vmem [shape: f32[2,1,32], index: 8, kind: input, shape index: {}]
  %s9 = inlined_call_operand.vmem [shape: bf16[2,32,2048], index: 9, kind: input, shape index: {}]
  %s10 = inlined_call_operand.vmem [shape: f32[2,1,2048], index: 10, kind: input, shape index: {}]
  %s11 = inlined_call_operand.vmem [shape: bf16[2,2048,32], index: 11, kind: input, shape index: {}]
  %s12 = inlined_call_operand.vmem [shape: f32[2,1,32], index: 12, kind: input, shape index: {}]
  %s13 = inlined_call_operand.vmem [shape: f32[1,32], index: 13, kind: input, shape index: {}]
  %s14 = inlined_call_operand.vmem [shape: f32[1,32], index: 14, kind: input, shape index: {}]
  %s15 = inlined_call_operand.hbm [shape: f32[16,32], index: 15, kind: output, shape index: {}]
  %s16 = sld [smem:[#allocation0]]
  $region101: #{tpu_custom_call.1} parent=0
    _
  %s18 = ssub.s32 1, %s16
  %s19 = scalar_select 0, %s18, %s16
  $region1: #{tpu_custom_call.1} parent=0
    #allocation3 [shape = 'u8[8192]{0}', space=vmem, size = 0x2000, scoped, tag = 'output window, operand 0, single buffered']
    #allocation4 [shape = 's32[2]{0}', space=sflag, size = 0x8, scoped, tag = 'scoped memory for tpu_custom_call.1']
    %20 = vsyncpa [#allocation4], 0
    loop: start=0, step=1, limit=4
    $region2: #{tpu_custom_call.1} parent=1 // loop_pre_header
      _
    $region3: #{tpu_custom_call.1} parent=1 // loop_header
      %s22 = sphi 0, %s26
      %p23 = scmp.ge.s32.totalorder %s22, 4
      %s29 = sphi 0, %s41
      %s30 = sphi 0, %s37
      %s31 = sphi 0, %s29
      %s32 = sphi 0, %s30
      %s33 = sphi 0, %s31
      %s34 = sphi 0, %s32
      %s44 = sphi 0, %s46
      %s47 = sphi 0, %s44
      %s48 = sphi 0, %s47
      %s64 = sphi 0, %s48
      %s70 = sphi 0, %s72
      %s73 = sphi 0, %s70
      %s74 = sphi 0, %s73
      %s90 = sphi 0, %s74
      %s96 = sphi 0, %s98
      %s99 = sphi 0, %s96
      %s100 = sphi 0, %s99
      %s116 = sphi 0, %s100
      %s122 = sphi 0, %s124
      %s125 = sphi 0, %s122
      %s126 = sphi 0, %s125
      %s142 = sphi 0, %s126
      %s148 = sphi 0, %s150
      %s151 = sphi 0, %s148
      %s152 = sphi 0, %s151
      %s168 = sphi 0, %s152
      %s174 = sphi 0, %s176
      %s177 = sphi 0, %s174
      %s178 = sphi 0, %s177
      %s194 = sphi 0, %s178
      %s200 = sphi 0, %s202
      %s203 = sphi 0, %s200
      %s204 = sphi 0, %s203
      %s220 = sphi 0, %s204
      %s226 = sphi 0, %s228
      %s229 = sphi 0, %s226
      %s230 = sphi 0, %s229
      %s246 = sphi 0, %s230
      %s252 = sphi 0, %s254
      %s255 = sphi 0, %s252
      %s256 = sphi 0, %s255
      %s272 = sphi 0, %s256
      %s278 = sphi 0, %s280
      %s281 = sphi 0, %s278
      %s282 = sphi 0, %s281
      %s298 = sphi 0, %s282
      %s304 = sphi 0, %s306
      %s307 = sphi 0, %s304
      %s308 = sphi 0, %s307
      %s324 = sphi 0, %s308
      %s330 = sphi 0, %s332
      %s333 = sphi 0, %s330
      %s334 = sphi 0, %s333
      %s350 = sphi 0, %s334
      %s356 = sphi 0, %s358
      %s359 = sphi 0, %s356
      %s360 = sphi 0, %s359
      %s376 = sphi 0, %s360
      %s380 = sphi 0, %s380
      %s382 = sphi 0, %s380
      %s383 = sphi 0, %s382
      %s397 = sphi 0, %s383
      %s401 = sphi 0, %s401
      %s403 = sphi 0, %s401
      %s404 = sphi 0, %s403
      %s418 = sphi 0, %s404
      %s424 = sphi 0, %s426
      %s427 = sphi 0, %s424
      %s428 = sphi 0, %s427
      %s444 = sphi 0, %s428
    $region4: #{tpu_custom_call.1} parent=1 // loop_header_branch
      %25 = sbr.rel (%p23) target = $region8
    $region5: #{tpu_custom_call.1} parent=1 // loop_body
      %s27 = ssub.s32 %s22, 1
      %s28 = ssub.s32 %s22, 2
      %s35 = sadd.s32 1, %s30
      %p36 = scmp.ge.s32.totalorder %s35, 2
      %s37 = scalar_select %p36, 0, %s35
      %s38 = sadd.s32 1, %s29
      %s39 = scalar_select %p36, %s38, %s29
      %p40 = scmp.ge.s32.totalorder %s39, 1
      %s41 = scalar_select %p40, 0, %s39
      %s42 = ssub.s32 %s29, %s41
      %p43 = scmp.eq.s32.totalorder %s42, 0
      %s45 = sadd.s32 %s44, 1
      %s46 = scalar_select %p43, %s44, %s45
      %p49 = pneg %p43
      %p50 = scmp.eq.s32.totalorder %s22, 1
      %p51 = por %p49, %p50
      %p52 = scmp.ne.s32.totalorder %s44, %s47
      %p53 = scmp.eq.s32.totalorder %s22, 0
      %p54 = por %p52, %p53
      %p55 = scmp.ne.s32.totalorder %s44, %s47
      %p56 = scmp.eq.s32.totalorder %s27, 1
      %p57 = por %p55, %p56
      %p58 = scmp.ne.s32.totalorder %s47, %s48
      %p59 = scmp.eq.s32.totalorder %s27, 0
      %p60 = por %p58, %p59
      %p61 = scmp.ne.s32.totalorder %s47, %s48
      %p62 = scmp.eq.s32.totalorder %s28, 1
      %p63 = por %p61, %p62
      %p65 = scmp.ne.s32.totalorder %s48, %s64
      %p66 = scmp.eq.s32.totalorder %s28, 0
      %p67 = por %p65, %p66
      %s68 = ssub.s32 %s30, %s37
      %p69 = scmp.eq.s32.totalorder %s68, 0
      %s71 = sadd.s32 %s70, 1
      %s72 = scalar_select %p69, %s70, %s71
      %p75 = pneg %p69
      %p76 = scmp.eq.s32.totalorder %s22, 1
      %p77 = por %p75, %p76
      %p78 = scmp.ne.s32.totalorder %s70, %s73
      %p79 = scmp.eq.s32.totalorder %s22, 0
      %p80 = por %p78, %p79
      %p81 = scmp.ne.s32.totalorder %s70, %s73
      %p82 = scmp.eq.s32.totalorder %s27, 1
      %p83 = por %p81, %p82
      %p84 = scmp.ne.s32.totalorder %s73, %s74
      %p85 = scmp.eq.s32.totalorder %s27, 0
      %p86 = por %p84, %p85
      %p87 = scmp.ne.s32.totalorder %s73, %s74
      %p88 = scmp.eq.s32.totalorder %s28, 1
      %p89 = por %p87, %p88
      %p91 = scmp.ne.s32.totalorder %s74, %s90
      %p92 = scmp.eq.s32.totalorder %s28, 0
      %p93 = por %p91, %p92
      %s94 = ssub.s32 %s30, %s37
      %p95 = scmp.eq.s32.totalorder %s94, 0
      %s97 = sadd.s32 %s96, 1
      %s98 = scalar_select %p95, %s96, %s97
      %p101 = pneg %p95
      %p102 = scmp.eq.s32.totalorder %s22, 1
      %p103 = por %p101, %p102
      %p104 = scmp.ne.s32.totalorder %s96, %s99
      %p105 = scmp.eq.s32.totalorder %s22, 0
      %p106 = por %p104, %p105
      %p107 = scmp.ne.s32.totalorder %s96, %s99
      %p108 = scmp.eq.s32.totalorder %s27, 1
      %p109 = por %p107, %p108
      %p110 = scmp.ne.s32.totalorder %s99, %s100
      %p111 = scmp.eq.s32.totalorder %s27, 0
      %p112 = por %p110, %p111
      %p113 = scmp.ne.s32.totalorder %s99, %s100
      %p114 = scmp.eq.s32.totalorder %s28, 1
      %p115 = por %p113, %p114
      %p117 = scmp.ne.s32.totalorder %s100, %s116
      %p118 = scmp.eq.s32.totalorder %s28, 0
      %p119 = por %p117, %p118
      %s120 = ssub.s32 %s30, %s37
      %p121 = scmp.eq.s32.totalorder %s120, 0
      %s123 = sadd.s32 %s122, 1
      %s124 = scalar_select %p121, %s122, %s123
      %p127 = pneg %p121
      %p128 = scmp.eq.s32.totalorder %s22, 1
      %p129 = por %p127, %p128
      %p130 = scmp.ne.s32.totalorder %s122, %s125
      %p131 = scmp.eq.s32.totalorder %s22, 0
      %p132 = por %p130, %p131
      %p133 = scmp.ne.s32.totalorder %s122, %s125
      %p134 = scmp.eq.s32.totalorder %s27, 1
      %p135 = por %p133, %p134
      %p136 = scmp.ne.s32.totalorder %s125, %s126
      %p137 = scmp.eq.s32.totalorder %s27, 0
      %p138 = por %p136, %p137
      %p139 = scmp.ne.s32.totalorder %s125, %s126
      %p140 = scmp.eq.s32.totalorder %s28, 1
      %p141 = por %p139, %p140
      %p143 = scmp.ne.s32.totalorder %s126, %s142
      %p144 = scmp.eq.s32.totalorder %s28, 0
      %p145 = por %p143, %p144
      %s146 = ssub.s32 %s30, %s37
      %p147 = scmp.eq.s32.totalorder %s146, 0
      %s149 = sadd.s32 %s148, 1
      %s150 = scalar_select %p147, %s148, %s149
      %p153 = pneg %p147
      %p154 = scmp.eq.s32.totalorder %s22, 1
      %p155 = por %p153, %p154
      %p156 = scmp.ne.s32.totalorder %s148, %s151
      %p157 = scmp.eq.s32.totalorder %s22, 0
      %p158 = por %p156, %p157
      %p159 = scmp.ne.s32.totalorder %s148, %s151
      %p160 = scmp.eq.s32.totalorder %s27, 1
      %p161 = por %p159, %p160
      %p162 = scmp.ne.s32.totalorder %s151, %s152
      %p163 = scmp.eq.s32.totalorder %s27, 0
      %p164 = por %p162, %p163
      %p165 = scmp.ne.s32.totalorder %s151, %s152
      %p166 = scmp.eq.s32.totalorder %s28, 1
      %p167 = por %p165, %p166
      %p169 = scmp.ne.s32.totalorder %s152, %s168
      %p170 = scmp.eq.s32.totalorder %s28, 0
      %p171 = por %p169, %p170
      %s172 = ssub.s32 %s30, %s37
      %p173 = scmp.eq.s32.totalorder %s172, 0
      %s175 = sadd.s32 %s174, 1
      %s176 = scalar_select %p173, %s174, %s175
      %p179 = pneg %p173
      %p180 = scmp.eq.s32.totalorder %s22, 1
      %p181 = por %p179, %p180
      %p182 = scmp.ne.s32.totalorder %s174, %s177
      %p183 = scmp.eq.s32.totalorder %s22, 0
      %p184 = por %p182, %p183
      %p185 = scmp.ne.s32.totalorder %s174, %s177
      %p186 = scmp.eq.s32.totalorder %s27, 1
      %p187 = por %p185, %p186
      %p188 = scmp.ne.s32.totalorder %s177, %s178
      %p189 = scmp.eq.s32.totalorder %s27, 0
      %p190 = por %p188, %p189
      %p191 = scmp.ne.s32.totalorder %s177, %s178
      %p192 = scmp.eq.s32.totalorder %s28, 1
      %p193 = por %p191, %p192
      %p195 = scmp.ne.s32.totalorder %s178, %s194
      %p196 = scmp.eq.s32.totalorder %s28, 0
      %p197 = por %p195, %p196
      %s198 = ssub.s32 %s30, %s37
      %p199 = scmp.eq.s32.totalorder %s198, 0
      %s201 = sadd.s32 %s200, 1
      %s202 = scalar_select %p199, %s200, %s201
      %p205 = pneg %p199
      %p206 = scmp.eq.s32.totalorder %s22, 1
      %p207 = por %p205, %p206
      %p208 = scmp.ne.s32.totalorder %s200, %s203
      %p209 = scmp.eq.s32.totalorder %s22, 0
      %p210 = por %p208, %p209
      %p211 = scmp.ne.s32.totalorder %s200, %s203
      %p212 = scmp.eq.s32.totalorder %s27, 1
      %p213 = por %p211, %p212
      %p214 = scmp.ne.s32.totalorder %s203, %s204
      %p215 = scmp.eq.s32.totalorder %s27, 0
      %p216 = por %p214, %p215
      %p217 = scmp.ne.s32.totalorder %s203, %s204
      %p218 = scmp.eq.s32.totalorder %s28, 1
      %p219 = por %p217, %p218
      %p221 = scmp.ne.s32.totalorder %s204, %s220
      %p222 = scmp.eq.s32.totalorder %s28, 0
      %p223 = por %p221, %p222
      %s224 = ssub.s32 %s30, %s37
      %p225 = scmp.eq.s32.totalorder %s224, 0
      %s227 = sadd.s32 %s226, 1
      %s228 = scalar_select %p225, %s226, %s227
      %p231 = pneg %p225
      %p232 = scmp.eq.s32.totalorder %s22, 1
      %p233 = por %p231, %p232
      %p234 = scmp.ne.s32.totalorder %s226, %s229
      %p235 = scmp.eq.s32.totalorder %s22, 0
      %p236 = por %p234, %p235
      %p237 = scmp.ne.s32.totalorder %s226, %s229
      %p238 = scmp.eq.s32.totalorder %s27, 1
      %p239 = por %p237, %p238
      %p240 = scmp.ne.s32.totalorder %s229, %s230
      %p241 = scmp.eq.s32.totalorder %s27, 0
      %p242 = por %p240, %p241
      %p243 = scmp.ne.s32.totalorder %s229, %s230
      %p244 = scmp.eq.s32.totalorder %s28, 1
      %p245 = por %p243, %p244
      %p247 = scmp.ne.s32.totalorder %s230, %s246
      %p248 = scmp.eq.s32.totalorder %s28, 0
      %p249 = por %p247, %p248
      %s250 = ssub.s32 %s30, %s37
      %p251 = scmp.eq.s32.totalorder %s250, 0
      %s253 = sadd.s32 %s252, 1
      %s254 = scalar_select %p251, %s252, %s253
      %p257 = pneg %p251
      %p258 = scmp.eq.s32.totalorder %s22, 1
      %p259 = por %p257, %p258
      %p260 = scmp.ne.s32.totalorder %s252, %s255
      %p261 = scmp.eq.s32.totalorder %s22, 0
      %p262 = por %p260, %p261
      %p263 = scmp.ne.s32.totalorder %s252, %s255
      %p264 = scmp.eq.s32.totalorder %s27, 1
      %p265 = por %p263, %p264
      %p266 = scmp.ne.s32.totalorder %s255, %s256
      %p267 = scmp.eq.s32.totalorder %s27, 0
      %p268 = por %p266, %p267
      %p269 = scmp.ne.s32.totalorder %s255, %s256
      %p270 = scmp.eq.s32.totalorder %s28, 1
      %p271 = por %p269, %p270
      %p273 = scmp.ne.s32.totalorder %s256, %s272
      %p274 = scmp.eq.s32.totalorder %s28, 0
      %p275 = por %p273, %p274
      %s276 = ssub.s32 %s30, %s37
      %p277 = scmp.eq.s32.totalorder %s276, 0
      %s279 = sadd.s32 %s278, 1
      %s280 = scalar_select %p277, %s278, %s279
      %p283 = pneg %p277
      %p284 = scmp.eq.s32.totalorder %s22, 1
      %p285 = por %p283, %p284
      %p286 = scmp.ne.s32.totalorder %s278, %s281
      %p287 = scmp.eq.s32.totalorder %s22, 0
      %p288 = por %p286, %p287
      %p289 = scmp.ne.s32.totalorder %s278, %s281
      %p290 = scmp.eq.s32.totalorder %s27, 1
      %p291 = por %p289, %p290
      %p292 = scmp.ne.s32.totalorder %s281, %s282
      %p293 = scmp.eq.s32.totalorder %s27, 0
      %p294 = por %p292, %p293
      %p295 = scmp.ne.s32.totalorder %s281, %s282
      %p296 = scmp.eq.s32.totalorder %s28, 1
      %p297 = por %p295, %p296
      %p299 = scmp.ne.s32.totalorder %s282, %s298
      %p300 = scmp.eq.s32.totalorder %s28, 0
      %p301 = por %p299, %p300
      %s302 = ssub.s32 %s30, %s37
      %p303 = scmp.eq.s32.totalorder %s302, 0
      %s305 = sadd.s32 %s304, 1
      %s306 = scalar_select %p303, %s304, %s305
      %p309 = pneg %p303
      %p310 = scmp.eq.s32.totalorder %s22, 1
      %p311 = por %p309, %p310
      %p312 = scmp.ne.s32.totalorder %s304, %s307
      %p313 = scmp.eq.s32.totalorder %s22, 0
      %p314 = por %p312, %p313
      %p315 = scmp.ne.s32.totalorder %s304, %s307
      %p316 = scmp.eq.s32.totalorder %s27, 1
      %p317 = por %p315, %p316
      %p318 = scmp.ne.s32.totalorder %s307, %s308
      %p319 = scmp.eq.s32.totalorder %s27, 0
      %p320 = por %p318, %p319
      %p321 = scmp.ne.s32.totalorder %s307, %s308
      %p322 = scmp.eq.s32.totalorder %s28, 1
      %p323 = por %p321, %p322
      %p325 = scmp.ne.s32.totalorder %s308, %s324
      %p326 = scmp.eq.s32.totalorder %s28, 0
      %p327 = por %p325, %p326
      %s328 = ssub.s32 %s30, %s37
      %p329 = scmp.eq.s32.totalorder %s328, 0
      %s331 = sadd.s32 %s330, 1
      %s332 = scalar_select %p329, %s330, %s331
      %p335 = pneg %p329
      %p336 = scmp.eq.s32.totalorder %s22, 1
      %p337 = por %p335, %p336
      %p338 = scmp.ne.s32.totalorder %s330, %s333
      %p339 = scmp.eq.s32.totalorder %s22, 0
      %p340 = por %p338, %p339
      %p341 = scmp.ne.s32.totalorder %s330, %s333
      %p342 = scmp.eq.s32.totalorder %s27, 1
      %p343 = por %p341, %p342
      %p344 = scmp.ne.s32.totalorder %s333, %s334
      %p345 = scmp.eq.s32.totalorder %s27, 0
      %p346 = por %p344, %p345
      %p347 = scmp.ne.s32.totalorder %s333, %s334
      %p348 = scmp.eq.s32.totalorder %s28, 1
      %p349 = por %p347, %p348
      %p351 = scmp.ne.s32.totalorder %s334, %s350
      %p352 = scmp.eq.s32.totalorder %s28, 0
      %p353 = por %p351, %p352
      %s354 = ssub.s32 %s30, %s37
      %p355 = scmp.eq.s32.totalorder %s354, 0
      %s357 = sadd.s32 %s356, 1
      %s358 = scalar_select %p355, %s356, %s357
      %p361 = pneg %p355
      %p362 = scmp.eq.s32.totalorder %s22, 1
      %p363 = por %p361, %p362
      %p364 = scmp.ne.s32.totalorder %s356, %s359
      %p365 = scmp.eq.s32.totalorder %s22, 0
      %p366 = por %p364, %p365
      %p367 = scmp.ne.s32.totalorder %s356, %s359
      %p368 = scmp.eq.s32.totalorder %s27, 1
      %p369 = por %p367, %p368
      %p370 = scmp.ne.s32.totalorder %s359, %s360
      %p371 = scmp.eq.s32.totalorder %s27, 0
      %p372 = por %p370, %p371
      %p373 = scmp.ne.s32.totalorder %s359, %s360
      %p374 = scmp.eq.s32.totalorder %s28, 1
      %p375 = por %p373, %p374
      %p377 = scmp.ne.s32.totalorder %s360, %s376
      %p378 = scmp.eq.s32.totalorder %s28, 0
      %p379 = por %p377, %p378
      %s381 = sadd.s32 %s380, 1
      %p384 = scmp.eq.s32.totalorder %s22, 1
      %p385 = scmp.ne.s32.totalorder %s380, %s382
      %p386 = scmp.eq.s32.totalorder %s22, 0
      %p387 = por %p385, %p386
      %p388 = scmp.ne.s32.totalorder %s380, %s382
      %p389 = scmp.eq.s32.totalorder %s27, 1
      %p390 = por %p388, %p389
      %p391 = scmp.ne.s32.totalorder %s382, %s383
      %p392 = scmp.eq.s32.totalorder %s27, 0
      %p393 = por %p391, %p392
      %p394 = scmp.ne.s32.totalorder %s382, %s383
      %p395 = scmp.eq.s32.totalorder %s28, 1
      %p396 = por %p394, %p395
      %p398 = scmp.ne.s32.totalorder %s383, %s397
      %p399 = scmp.eq.s32.totalorder %s28, 0
      %p400 = por %p398, %p399
      %s402 = sadd.s32 %s401, 1
      %p405 = scmp.eq.s32.totalorder %s22, 1
      %p406 = scmp.ne.s32.totalorder %s401, %s403
      %p407 = scmp.eq.s32.totalorder %s22, 0
      %p408 = por %p406, %p407
      %p409 = scmp.ne.s32.totalorder %s401, %s403
      %p410 = scmp.eq.s32.totalorder %s27, 1
      %p411 = por %p409, %p410
      %p412 = scmp.ne.s32.totalorder %s403, %s404
      %p413 = scmp.eq.s32.totalorder %s27, 0
      %p414 = por %p412, %p413
      %p415 = scmp.ne.s32.totalorder %s403, %s404
      %p416 = scmp.eq.s32.totalorder %s28, 1
      %p417 = por %p415, %p416
      %p419 = scmp.ne.s32.totalorder %s404, %s418
      %p420 = scmp.eq.s32.totalorder %s28, 0
      %p421 = por %p419, %p420
      %s422 = ssub.s32 %s29, %s41
      %p423 = scmp.eq.s32.totalorder %s422, 0
      %s425 = sadd.s32 %s424, 1
      %s426 = scalar_select %p423, %s424, %s425
      %p429 = pneg %p423
      %p430 = scmp.eq.s32.totalorder %s22, 1
      %p431 = por %p429, %p430
      %p432 = scmp.ne.s32.totalorder %s424, %s427
      %p433 = scmp.eq.s32.totalorder %s22, 0
      %p434 = por %p432, %p433
      %p435 = scmp.ne.s32.totalorder %s424, %s427
      %p436 = scmp.eq.s32.totalorder %s27, 1
      %p437 = por %p435, %p436
      %p438 = scmp.ne.s32.totalorder %s427, %s428
      %p439 = scmp.eq.s32.totalorder %s27, 0
      %p440 = por %p438, %p439
      %p441 = scmp.ne.s32.totalorder %s427, %s428
      %p442 = scmp.eq.s32.totalorder %s28, 1
      %p443 = por %p441, %p442
      %p445 = scmp.ne.s32.totalorder %s428, %s444
      %p446 = scmp.eq.s32.totalorder %s28, 0
      %p447 = por %p445, %p446
      %p448 = scmp.le.s32.totalorder 1, %s22
      %p449 = scmp.lt.s32.totalorder %s22, 3
      %p450 = pnand %p448, %p449
      %p451 = pneg %p450
      // Predicated region
      $region9: #{tpu_custom_call.1} parent=5 // pred_check
        _
      $region10: #{tpu_custom_call.1} parent=5 // pred_check_branch
        %453 = sbr.rel (%p450) target = $region12
      $region11: #{tpu_custom_call.1} parent=5 // pred_region
        %s454 = ssub.s32 %s22, 1
        // Predicated region
        $region13: #{tpu_custom_call.1} parent=11 // pred_check
          %p455 = pneg %p60
        $region14: #{tpu_custom_call.1} parent=11 // pred_check_branch
          %457 = sbr.rel (%p455) target = $region16
        $region15: #{tpu_custom_call.1} parent=11 // pred_region
          %s458 = smul.u32 2, %s31
          %p459 = scmp.lt.s32.totalorder %s458, 1
          %s460 = scalar_select %p459, %s458, 1
          %s461 = smul.addr %s460, 8
          %s462 = scalar_lea.vmem %s0, %s461
          %s463 = smul.u32 2, %s31
        $region16: #{tpu_custom_call.1} parent=11 // pred_fallthru
          _
        // Predicated region
        $region17: #{tpu_custom_call.1} parent=11 // pred_check
          %p464 = pneg %p393
        $region18: #{tpu_custom_call.1} parent=11 // pred_check_branch
          %466 = sbr.rel (%p464) target = $region20
        $region19: #{tpu_custom_call.1} parent=11 // pred_region
          _
        $region20: #{tpu_custom_call.1} parent=11 // pred_fallthru
          _
        // Predicated region
        $region21: #{tpu_custom_call.1} parent=11 // pred_check
          %p467 = pneg %p414
        $region22: #{tpu_custom_call.1} parent=11 // pred_check_branch
          %469 = sbr.rel (%p467) target = $region24
        $region23: #{tpu_custom_call.1} parent=11 // pred_region
          _
        $region24: #{tpu_custom_call.1} parent=11 // pred_fallthru
          _
      $region12: #{tpu_custom_call.1} parent=5 // pred_fallthru
        _
      %p470 = scmp.lt.s32.totalorder %s22, 2
      // Predicated region
      $region25: #{tpu_custom_call.1} parent=5 // pred_check
        %p471 = pneg %p470
      $region26: #{tpu_custom_call.1} parent=5 // pred_check_branch
        %473 = sbr.rel (%p471) target = $region28
      $region27: #{tpu_custom_call.1} parent=5 // pred_region
        // Predicated region
        $region29: #{tpu_custom_call.1} parent=27 // pred_check
          %p474 = pneg %p80
        $region30: #{tpu_custom_call.1} parent=27 // pred_check_branch
          %476 = sbr.rel (%p474) target = $region32
        $region31: #{tpu_custom_call.1} parent=27 // pred_region
          %p477 = scmp.lt.s32.totalorder %s30, 1
          %s478 = scalar_select %p477, %s30, 1
          %s479 = scalar_lea.vmem %s1, %s478
        $region32: #{tpu_custom_call.1} parent=27 // pred_fallthru
          _
        // Predicated region
        $region33: #{tpu_custom_call.1} parent=27 // pred_check
          %p480 = pneg %p106
        $region34: #{tpu_custom_call.1} parent=27 // pred_check_branch
          %482 = sbr.rel (%p480) target = $region36
        $region35: #{tpu_custom_call.1} parent=27 // pred_region
          %p483 = scmp.lt.s32.totalorder %s30, 1
          %s484 = scalar_select %p483, %s30, 1
          %s485 = scalar_lea.vmem %s2, %s484
        $region36: #{tpu_custom_call.1} parent=27 // pred_fallthru
          _
        // Predicated region
        $region37: #{tpu_custom_call.1} parent=27 // pred_check
          %p486 = pneg %p132
        $region38: #{tpu_custom_call.1} parent=27 // pred_check_branch
          %488 = sbr.rel (%p486) target = $region40
        $region39: #{tpu_custom_call.1} parent=27 // pred_region
          %p489 = scmp.lt.s32.totalorder %s30, 1
          %s490 = scalar_select %p489, %s30, 1
          %s491 = smul.addr %s490, 4
          %s492 = smul.addr %s491, 4
          %s493 = scalar_lea.vmem %s3, %s492
        $region40: #{tpu_custom_call.1} parent=27 // pred_fallthru
          _
        // Predicated region
        $region41: #{tpu_custom_call.1} parent=27 // pred_check
          %p494 = pneg %p158
        $region42: #{tpu_custom_call.1} parent=27 // pred_check_branch
          %496 = sbr.rel (%p494) target = $region44
        $region43: #{tpu_custom_call.1} parent=27 // pred_region
          %p497 = scmp.lt.s32.totalorder %s30, 1
          %s498 = scalar_select %p497, %s30, 1
          %s499 = scalar_lea.vmem %s4, %s498
        $region44: #{tpu_custom_call.1} parent=27 // pred_fallthru
          _
        // Predicated region
        $region45: #{tpu_custom_call.1} parent=27 // pred_check
          %p500 = pneg %p184
        $region46: #{tpu_custom_call.1} parent=27 // pred_check_branch
          %502 = sbr.rel (%p500) target = $region48
        $region47: #{tpu_custom_call.1} parent=27 // pred_region
          %p503 = scmp.lt.s32.totalorder %s30, 1
          %s504 = scalar_select %p503, %s30, 1
          %s505 = smul.addr %s504, 4
          %s506 = smul.addr %s505, 4
          %s507 = scalar_lea.vmem %s5, %s506
        $region48: #{tpu_custom_call.1} parent=27 // pred_fallthru
          _
        // Predicated region
        $region49: #{tpu_custom_call.1} parent=27 // pred_check
          %p508 = pneg %p210
        $region50: #{tpu_custom_call.1} parent=27 // pred_check_branch
          %510 = sbr.rel (%p508) target = $region52
        $region51: #{tpu_custom_call.1} parent=27 // pred_region
          %p511 = scmp.lt.s32.totalorder %s30, 1
          %s512 = scalar_select %p511, %s30, 1
          %s513 = scalar_lea.vmem %s6, %s512
        $region52: #{tpu_custom_call.1} parent=27 // pred_fallthru
          _
        // Predicated region
        $region53: #{tpu_custom_call.1} parent=27 // pred_check
          %p514 = pneg %p236
        $region54: #{tpu_custom_call.1} parent=27 // pred_check_branch
          %516 = sbr.rel (%p514) target = $region56
        $region55: #{tpu_custom_call.1} parent=27 // pred_region
          %p517 = scmp.lt.s32.totalorder %s30, 1
          %s518 = scalar_select %p517, %s30, 1
          %s519 = scalar_lea.vmem %s7, %s518
        $region56: #{tpu_custom_call.1} parent=27 // pred_fallthru
          _
        // Predicated region
        $region57: #{tpu_custom_call.1} parent=27 // pred_check
          %p520 = pneg %p262
        $region58: #{tpu_custom_call.1} parent=27 // pred_check_branch
          %522 = sbr.rel (%p520) target = $region60
        $region59: #{tpu_custom_call.1} parent=27 // pred_region
          %p523 = scmp.lt.s32.totalorder %s30, 1
          %s524 = scalar_select %p523, %s30, 1
          %s525 = scalar_lea.vmem %s8, %s524
        $region60: #{tpu_custom_call.1} parent=27 // pred_fallthru
          _
        // Predicated region
        $region61: #{tpu_custom_call.1} parent=27 // pred_check
          %p526 = pneg %p288
        $region62: #{tpu_custom_call.1} parent=27 // pred_check_branch
          %528 = sbr.rel (%p526) target = $region64
        $region63: #{tpu_custom_call.1} parent=27 // pred_region
          %p529 = scmp.lt.s32.totalorder %s30, 1
          %s530 = scalar_select %p529, %s30, 1
          %s531 = smul.addr %s530, 64
          %s532 = smul.addr %s531, 4
          %s533 = scalar_lea.vmem %s9, %s532
        $region64: #{tpu_custom_call.1} parent=27 // pred_fallthru
          _
        // Predicated region
        $region65: #{tpu_custom_call.1} parent=27 // pred_check
          %p534 = pneg %p314
        $region66: #{tpu_custom_call.1} parent=27 // pred_check_branch
          %536 = sbr.rel (%p534) target = $region68
        $region67: #{tpu_custom_call.1} parent=27 // pred_region
          %p537 = scmp.lt.s32.totalorder %s30, 1
          %s538 = scalar_select %p537, %s30, 1
          %s539 = smul.addr %s538, 16
          %s540 = scalar_lea.vmem %s10, %s539
        $region68: #{tpu_custom_call.1} parent=27 // pred_fallthru
          _
        // Predicated region
        $region69: #{tpu_custom_call.1} parent=27 // pred_check
          %p541 = pneg %p340
        $region70: #{tpu_custom_call.1} parent=27 // pred_check_branch
          %543 = sbr.rel (%p541) target = $region72
        $region71: #{tpu_custom_call.1} parent=27 // pred_region
          %p544 = scmp.lt.s32.totalorder %s30, 1
          %s545 = scalar_select %p544, %s30, 1
          %s546 = smul.addr %s545, 256
          %s547 = smul.addr %s546, 4
          %s548 = scalar_lea.vmem %s11, %s547
        $region72: #{tpu_custom_call.1} parent=27 // pred_fallthru
          _
        // Predicated region
        $region73: #{tpu_custom_call.1} parent=27 // pred_check
          %p549 = pneg %p366
        $region74: #{tpu_custom_call.1} parent=27 // pred_check_branch
          %551 = sbr.rel (%p549) target = $region76
        $region75: #{tpu_custom_call.1} parent=27 // pred_region
          %p552 = scmp.lt.s32.totalorder %s30, 1
          %s553 = scalar_select %p552, %s30, 1
          %s554 = scalar_lea.vmem %s12, %s553
        $region76: #{tpu_custom_call.1} parent=27 // pred_fallthru
          _
      $region28: #{tpu_custom_call.1} parent=5 // pred_fallthru
        _
      %p555 = scmp.le.s32.totalorder 1, %s22
      %p556 = scmp.lt.s32.totalorder %s22, 3
      %p557 = pnand %p555, %p556
      %p558 = pneg %p557
      // Predicated region
      $region77: #{tpu_custom_call.1} parent=5 // pred_check
        _
      $region78: #{tpu_custom_call.1} parent=5 // pred_check_branch
        %560 = sbr.rel (%p557) target = $region80
      $region79: #{tpu_custom_call.1} parent=5 // pred_region
        %s561 = ssub.s32 %s22, 1
        %s562 = smul.u32 2, %s31
        %p563 = scmp.lt.s32.totalorder %s562, 1
        %s564 = scalar_select %p563, %s562, 1
        %s565 = smul.addr %s564, 8
        %s566 = scalar_lea.vmem %s0, %s565
        %p567 = pneg %p60
        %p568 = pneg %p57
        %p569 = scmp.lt.s32.totalorder %s32, 1
        %s570 = scalar_select %p569, %s32, 1
        %s571 = scalar_lea.vmem %s1, %s570
        %p572 = pneg %p86
        %p573 = pneg %p83
        %p574 = scmp.lt.s32.totalorder %s32, 1
        %s575 = scalar_select %p574, %s32, 1
        %s576 = scalar_lea.vmem %s2, %s575
        %p577 = pneg %p112
        %p578 = pneg %p109
        %p579 = scmp.lt.s32.totalorder %s32, 1
        %s580 = scalar_select %p579, %s32, 1
        %s581 = smul.addr %s580, 4
        %s582 = smul.addr %s581, 4
        %s583 = scalar_lea.vmem %s3, %s582
        %p584 = pneg %p138
        %p585 = pneg %p135
        %p586 = scmp.lt.s32.totalorder %s32, 1
        %s587 = scalar_select %p586, %s32, 1
        %s588 = scalar_lea.vmem %s4, %s587
        %p589 = pneg %p164
        %p590 = pneg %p161
        %p591 = scmp.lt.s32.totalorder %s32, 1
        %s592 = scalar_select %p591, %s32, 1
        %s593 = smul.addr %s592, 4
        %s594 = smul.addr %s593, 4
        %s595 = scalar_lea.vmem %s5, %s594
        %p596 = pneg %p190
        %p597 = pneg %p187
        %p598 = scmp.lt.s32.totalorder %s32, 1
        %s599 = scalar_select %p598, %s32, 1
        %s600 = scalar_lea.vmem %s6, %s599
        %p601 = pneg %p216
        %p602 = pneg %p213
        %p603 = scmp.lt.s32.totalorder %s32, 1
        %s604 = scalar_select %p603, %s32, 1
        %s605 = scalar_lea.vmem %s7, %s604
        %p606 = pneg %p242
        %p607 = pneg %p239
        %p608 = scmp.lt.s32.totalorder %s32, 1
        %s609 = scalar_select %p608, %s32, 1
        %s610 = scalar_lea.vmem %s8, %s609
        %p611 = pneg %p268
        %p612 = pneg %p265
        %p613 = scmp.lt.s32.totalorder %s32, 1
        %s614 = scalar_select %p613, %s32, 1
        %s615 = smul.addr %s614, 64
        %s616 = smul.addr %s615, 4
        %s617 = scalar_lea.vmem %s9, %s616
        %p618 = pneg %p294
        %p619 = pneg %p291
        %p620 = scmp.lt.s32.totalorder %s32, 1
        %s621 = scalar_select %p620, %s32, 1
        %s622 = smul.addr %s621, 16
        %s623 = scalar_lea.vmem %s10, %s622
        %p624 = pneg %p320
        %p625 = pneg %p317
        %p626 = scmp.lt.s32.totalorder %s32, 1
        %s627 = scalar_select %p626, %s32, 1
        %s628 = smul.addr %s627, 256
        %s629 = smul.addr %s628, 4
        %s630 = scalar_lea.vmem %s11, %s629
        %p631 = pneg %p346
        %p632 = pneg %p343
        %p633 = scmp.lt.s32.totalorder %s32, 1
        %s634 = scalar_select %p633, %s32, 1
        %s635 = scalar_lea.vmem %s12, %s634
        %p636 = pneg %p372
        %p637 = pneg %p369
        %p638 = pneg %p393
        %p639 = pneg %p390
        %p640 = pneg %p414
        %p641 = pneg %p411
        %p642 = pneg %p440
        %p643 = pneg %p437
        %s644 = smul.u32 2, %s31
        %p645 = scmp.lt.s32.totalorder %s644, 1
        %s646 = scalar_select %p645, %s644, 1
        %s647 = smul.addr %s646, 8
        %s648 = scalar_lea.vmem %s0, %s647
        %s649 = smul.u32 2, %s31
        %p650 = scmp.lt.s32.totalorder %s32, 1
        %s651 = scalar_select %p650, %s32, 1
        %s652 = scalar_lea.vmem %s1, %s651
        %p653 = scmp.lt.s32.totalorder %s32, 1
        %s654 = scalar_select %p653, %s32, 1
        %s655 = scalar_lea.vmem %s2, %s654
        %p656 = scmp.lt.s32.totalorder %s32, 1
        %s657 = scalar_select %p656, %s32, 1
        %s658 = smul.addr %s657, 4
        %s659 = smul.addr %s658, 4
        %s660 = scalar_lea.vmem %s3, %s659
        %p661 = scmp.lt.s32.totalorder %s32, 1
        %s662 = scalar_select %p661, %s32, 1
        %s663 = scalar_lea.vmem %s4, %s662
        %p664 = scmp.lt.s32.totalorder %s32, 1
        %s665 = scalar_select %p664, %s32, 1
        %s666 = smul.addr %s665, 4
        %s667 = smul.addr %s666, 4
        %s668 = scalar_lea.vmem %s5, %s667
        %p669 = scmp.lt.s32.totalorder %s32, 1
        %s670 = scalar_select %p669, %s32, 1
        %s671 = scalar_lea.vmem %s6, %s670
        %p672 = scmp.lt.s32.totalorder %s32, 1
        %s673 = scalar_select %p672, %s32, 1
        %s674 = scalar_lea.vmem %s7, %s673
        %p675 = scmp.lt.s32.totalorder %s32, 1
        %s676 = scalar_select %p675, %s32, 1
        %s677 = scalar_lea.vmem %s8, %s676
        %p678 = scmp.lt.s32.totalorder %s32, 1
        %s679 = scalar_select %p678, %s32, 1
        %s680 = smul.addr %s679, 64
        %s681 = smul.addr %s680, 4
        %s682 = scalar_lea.vmem %s9, %s681
        %p683 = scmp.lt.s32.totalorder %s32, 1
        %s684 = scalar_select %p683, %s32, 1
        %s685 = smul.addr %s684, 16
        %s686 = scalar_lea.vmem %s10, %s685
        %p687 = scmp.lt.s32.totalorder %s32, 1
        %s688 = scalar_select %p687, %s32, 1
        %s689 = smul.addr %s688, 256
        %s690 = smul.addr %s689, 4
        %s691 = scalar_lea.vmem %s11, %s690
        %p692 = scmp.lt.s32.totalorder %s32, 1
        %s693 = scalar_select %p692, %s32, 1
        %s694 = scalar_lea.vmem %s12, %s693
        %s695 = smul.u32 2, %s31
        %p697 = scmp.eq.s32.totalorder %s32, 0
        // Predicated region
        $region81: #{tpu_custom_call.1} parent=79 // pred_check
          %p698 = pneg %p697
        $region82: #{tpu_custom_call.1} parent=79 // pred_check_branch
          %700 = sbr.rel (%p698) target = $region84
        $region83: #{tpu_custom_call.1} parent=79 // pred_region
          %v701 = vld [vmem:[%s648] sm:$0xff]
          %v702 = vld [vmem:[%s648 + $0x8] sm:$0xff]
          %vm703 = vcmask 261120
          %704 = vst.msk [vmem:[#allocation2] sm:$0xff] %vm703, %v701
          %705 = vst.msk [vmem:[#allocation2 + $0x8] sm:$0xff] %vm703, %v702
        $region84: #{tpu_custom_call.1} parent=79 // pred_fallthru
          _
        %v706 = vld [vmem:[#allocation2] sm:$0xff]
        %v707 = vld [vmem:[#allocation2 + $0x8] sm:$0xff]
        %v708 = vld [vmem:[%s652] sm:$0x1]
        %v709 = vld [vmem:[%s655] sm:$0x1]
        %vm710 = vcmask 261120
        %v711 = vsel %vm710, %v706, 0.0
        %712 = vadd.xlane.f32.xlu0 %v711
        %v713 = vpop.xlane.xlu0 %712
        %v714 = vsel %vm710, %v707, 0.0
        %715 = vadd.xlane.f32.xlu0 %v714
        %v716 = vpop.xlane.xlu0 %715
        %v717 = vrcp.pop 32.0
        %v718 = vmul.f32 %v713, %v717
        %v719 = vmul.f32 %v716, %v717
        %v720 = vsub.f32 %v706, %v718
        %v721 = vsub.f32 %v707, %v719
        %v722 = vmul.f32 %v720, %v720
        %v723 = vmul.f32 %v721, %v721
        %v724 = vsel %vm710, %v722, 0.0
        %725 = vadd.xlane.f32.xlu0 %v724
        %v726 = vpop.xlane.xlu0 %725
        %v727 = vsel %vm710, %v723, 0.0
        %728 = vadd.xlane.f32.xlu0 %v727
        %v729 = vpop.xlane.xlu0 %728
        %v730 = vmul.f32 %v726, %v717
        %v731 = vmul.f32 %v729, %v717
        %v732 = vadd.f32 %v730, 1e-06
        %v733 = vadd.f32 %v731, 1e-06
        %v734 = vrsqrt.pop %v732
        %v735 = vrsqrt.pop %v733
        %v736 = vmul.f32 %v720, %v734
        %v737 = vmul.f32 %v721, %v735
        %v739 = vlaneseq
        %v740 = vshrl.u32 %v739, 7
        %v741 = vsub.s32 0, %v740
        %v742 = vrot.slane %v708, %v741
        %v744 = vmul.f32 %v736, %v742
        %v745 = vmul.f32 %v737, %v742
        %v747 = vlaneseq
        %v748 = vshrl.u32 %v747, 7
        %v749 = vsub.s32 0, %v748
        %v750 = vrot.slane %v709, %v749
        %v752 = vadd.f32 %v744, %v750
        %v753 = vadd.f32 %v745, %v750
        %v754 = vpack.c.bf16 %v753, %v752
        %v755 = vld [vmem:[%s660] sm:$0xf]
        %v756 = vld [vmem:[%s660 + $0x4] sm:$0xf]
        %v757 = vld [vmem:[%s660 + $0x8] sm:$0xf]
        %v758 = vld [vmem:[%s660 + $0xc] sm:$0xf]
        %v759 = vld [vmem:[%s663] sm:$0x1]
        %v761 = vlaneseq
        %v762 = vshrl.u32 %v761, 7
        %v763 = vsub.s32 0, %v762
        %v764 = vrot.slane %v759, %v763
        %v770 = vunpack.c.l.b16 %v755
        %v771 = vunpack.c.l.b16 %v756
        %v772 = vunpack.c.l.b16 %v757
        %v773 = vunpack.c.l.b16 %v758
        %v774 = vpack.c.b16 %v771, %v770
        %v775 = vpack.c.b16 %v773, %v772
        %v779 = vsel %vm710, %v754, 0
        %781 = vmatprep.subr.bf16.mxu0 0
        %782 = vmatpush1.bf16.msra.mxu0 0
        %783 = vmatprep.subr.bf16.mxu0 0
        %784 = vmatpush1.bf16.msra.mxu0 0
        %785 = vmatprep.subr.bf16.mxu0 0
        %786 = vmatpush1.bf16.msra.mxu0 0
        %787 = vmatprep.subr.bf16.mxu0 0
        %788 = vmatpush1.bf16.msra.mxu0 0
        %789 = vmatprep.subr.bf16.mxu0 0
        %790 = vmatpush1.bf16.msra.mxu0 0
        %791 = vmatprep.subr.bf16.mxu0 0
        %792 = vmatpush1.bf16.msra.mxu0 0
        %793 = vmatprep.subr.bf16.mxu0 0
        %794 = vmatpush1.bf16.msra.mxu0 %v775
        %795 = vmatprep.subr.bf16.mxu0 0
        %796 = vmatpush1.bf16.msra.mxu0 %v774
        %797 = vmatprep.subr.bf16.mxu0 0
        %798 = vmatpush2.bf16.msra.mxu0 0
        %799 = vmatprep.subr.bf16.mxu0 0
        %800 = vmatpush2.bf16.msra.mxu0 0
        %801 = vmatprep.subr.bf16.mxu0 0
        %802 = vmatpush2.bf16.msra.mxu0 0
        %803 = vmatprep.subr.bf16.mxu0 0
        %804 = vmatpush2.bf16.msra.mxu0 0
        %805 = vmatprep.subr.bf16.mxu0 0
        %806 = vmatpush2.bf16.msra.mxu0 0
        %807 = vmatprep.subr.bf16.mxu0 0
        %808 = vmatpush2.bf16.msra.mxu0 0
        %809 = vmatprep.subr.bf16.mxu0 0
        %810 = vmatpush2.bf16.msra.mxu0 0
        %811 = vmatprep.subr.bf16.mxu0 0
        %812 = vmatpush2.bf16.msra.mxu0 0
        %813 = vmatprep.mubr.bf16.mxu0 0
        %814 = vmatmul.mubr.bf16.gmra.mxu0 %v779
        %v815 = vpop.f32.mrf.mxu0
        %v816 = vadd.f32 %v764, %v815
        %v817 = vpop.f32.mrf.mxu0
        %v818 = vpop.f32.mrf.mxu0
        %v819 = vadd.f32 %v764, %v818
        %v820 = vpop.f32.mrf.mxu0
        %821 = vdwg.mxu0
        %v822 = vpack.c.bf16 %v816, %v816
        %v823 = vpack.c.bf16 %v819, %v819
        %825 = vrot.lane.b32.xlu0 %v822, 96
        %v826 = vpop.permute.xlu0 %825
        %vm827 = vcmask 64512
        %v829 = vsel %vm827, %v822, 0
        %v832 = vsel %vm827, %v826, 0
        %834 = vmatprep.subr.bf16.mxu0 0
        %835 = vmatpush1.bf16.xpose.msra.mxu0 0
        %836 = vmatprep.subr.bf16.mxu0 0
        %837 = vmatpush1.bf16.xpose.msra.mxu0 0
        %838 = vmatprep.subr.bf16.mxu0 0
        %839 = vmatpush1.bf16.xpose.msra.mxu0 0
        %840 = vmatprep.subr.bf16.mxu0 0
        %841 = vmatpush1.bf16.xpose.msra.mxu0 0
        %842 = vmatprep.subr.bf16.mxu0 0
        %843 = vmatpush1.bf16.xpose.msra.mxu0 0
        %844 = vmatprep.subr.bf16.mxu0 0
        %845 = vmatpush1.bf16.xpose.msra.mxu0 0
        %846 = vmatprep.subr.bf16.mxu0 0
        %847 = vmatpush1.bf16.xpose.msra.mxu0 0
        %848 = vmatprep.subr.bf16.mxu0 0
        %849 = vmatpush1.bf16.xpose.msra.mxu0 %v832
        %850 = vmatprep.subr.bf16.mxu0 0
        %851 = vmatpush2.bf16.xpose.msra.mxu0 0
        %852 = vmatprep.subr.bf16.mxu0 0
        %853 = vmatpush2.bf16.xpose.msra.mxu0 0
        %854 = vmatprep.subr.bf16.mxu0 0
        %855 = vmatpush2.bf16.xpose.msra.mxu0 0
        %856 = vmatprep.subr.bf16.mxu0 0
        %857 = vmatpush2.bf16.xpose.msra.mxu0 0
        %858 = vmatprep.subr.bf16.mxu0 0
        %859 = vmatpush2.bf16.xpose.msra.mxu0 0
        %860 = vmatprep.subr.bf16.mxu0 0
        %861 = vmatpush2.bf16.xpose.msra.mxu0 0
        %862 = vmatprep.subr.bf16.mxu0 0
        %863 = vmatpush2.bf16.xpose.msra.mxu0 0
        %864 = vmatprep.subr.bf16.mxu0 0
        %865 = vmatpush2.bf16.xpose.msra.mxu0 0
        %866 = vmatprep.mubr.bf16.mxu0 0
        %867 = vmatmul.mubr.bf16.gmra.mxu0 %v829
        %v868 = vpop.f32.mrf.mxu0
        %v869 = vadd.f32 0.0, %v868
        %v870 = vpop.f32.mrf.mxu0
        %v871 = vpop.f32.mrf.mxu0
        %v872 = vpop.f32.mrf.mxu0
        %873 = vdwg.mxu0
        %875 = vrot.lane.b32.xlu0 %v823, 96
        %v876 = vpop.permute.xlu0 %875
        %v878 = vsel %vm827, %v823, 0
        %v881 = vsel %vm827, %v876, 0
        %883 = vmatprep.subr.bf16.mxu0 0
        %884 = vmatpush1.bf16.xpose.msra.mxu0 0
        %885 = vmatprep.subr.bf16.mxu0 0
        %886 = vmatpush1.bf16.xpose.msra.mxu0 0
        %887 = vmatprep.subr.bf16.mxu0 0
        %888 = vmatpush1.bf16.xpose.msra.mxu0 0
        %889 = vmatprep.subr.bf16.mxu0 0
        %890 = vmatpush1.bf16.xpose.msra.mxu0 0
        %891 = vmatprep.subr.bf16.mxu0 0
        %892 = vmatpush1.bf16.xpose.msra.mxu0 0
        %893 = vmatprep.subr.bf16.mxu0 0
        %894 = vmatpush1.bf16.xpose.msra.mxu0 0
        %895 = vmatprep.subr.bf16.mxu0 0
        %896 = vmatpush1.bf16.xpose.msra.mxu0 0
        %897 = vmatprep.subr.bf16.mxu0 0
        %898 = vmatpush1.bf16.xpose.msra.mxu0 %v881
        %899 = vmatprep.subr.bf16.mxu0 0
        %900 = vmatpush2.bf16.xpose.msra.mxu0 0
        %901 = vmatprep.subr.bf16.mxu0 0
        %902 = vmatpush2.bf16.xpose.msra.mxu0 0
        %903 = vmatprep.subr.bf16.mxu0 0
        %904 = vmatpush2.bf16.xpose.msra.mxu0 0
        %905 = vmatprep.subr.bf16.mxu0 0
        %906 = vmatpush2.bf16.xpose.msra.mxu0 0
        %907 = vmatprep.subr.bf16.mxu0 0
        %908 = vmatpush2.bf16.xpose.msra.mxu0 0
        %909 = vmatprep.subr.bf16.mxu0 0
        %910 = vmatpush2.bf16.xpose.msra.mxu0 0
        %911 = vmatprep.subr.bf16.mxu0 0
        %912 = vmatpush2.bf16.xpose.msra.mxu0 0
        %913 = vmatprep.subr.bf16.mxu0 0
        %914 = vmatpush2.bf16.xpose.msra.mxu0 0
        %915 = vmatprep.mubr.bf16.mxu0 0
        %916 = vmatmul.mubr.bf16.gmra.mxu0 %v878
        %v917 = vpop.f32.mrf.mxu0
        %v918 = vadd.f32 0.0, %v917
        %v919 = vpop.f32.mrf.mxu0
        %v920 = vpop.f32.mrf.mxu0
        %v921 = vpop.f32.mrf.mxu0
        %922 = vdwg.mxu0
        %v923 = vmul.f32 %v869, 0.35355338
        %v924 = vmul.f32 %v918, 0.35355338
        %v925 = vsel %vm827, %v923, -inf
        %926 = vmax.xlane.f32.xlu0 %v925
        %v927 = vpop.xlane.xlu0 %926
        %v928 = vsel %vm827, %v924, -inf
        %929 = vmax.xlane.f32.xlu0 %v928
        %v930 = vpop.xlane.xlu0 %929
        %v931 = vsub.f32 %v923, %v927
        %v932 = vsub.f32 %v924, %v930
        %v933 = vmul.f32 %v931, 1.442695
        %v934 = vpow.pop %v933
        %v935 = vmul.f32 %v932, 1.442695
        %v936 = vpow.pop %v935
        %v937 = vsel %vm827, %v934, 0.0
        %938 = vadd.xlane.f32.xlu0 %v937
        %v939 = vpop.xlane.xlu0 %938
        %v940 = vsel %vm827, %v936, 0.0
        %941 = vadd.xlane.f32.xlu0 %v940
        %v942 = vpop.xlane.xlu0 %941
        %v943 = vrcp.pop %v939
        %v944 = vrcp.pop %v942
        %v945 = vmul.f32 %v934, %v943
        %v946 = vmul.f32 %v936, %v944
        %v947 = vpack.c.bf16 %v945, %v945
        %v948 = vpack.c.bf16 %v946, %v946
        %949 = vrot.lane.b32.xlu0 %v822, 64
        %v950 = vpop.permute.xlu0 %949
        %v952 = vsel %vm827, %v947, 0
        %vm954 = vcmask 1043456
        %v956 = vsel %vm954, %v950, 0
        %958 = vmatprep.subr.bf16.mxu0 0
        %959 = vmatpush1.bf16.msra.mxu0 0
        %960 = vmatprep.subr.bf16.mxu0 0
        %961 = vmatpush1.bf16.msra.mxu0 0
        %962 = vmatprep.subr.bf16.mxu0 0
        %963 = vmatpush1.bf16.msra.mxu0 0
        %964 = vmatprep.subr.bf16.mxu0 0
        %965 = vmatpush1.bf16.msra.mxu0 0
        %966 = vmatprep.subr.bf16.mxu0 0
        %967 = vmatpush1.bf16.msra.mxu0 0
        %968 = vmatprep.subr.bf16.mxu0 0
        %969 = vmatpush1.bf16.msra.mxu0 0
        %970 = vmatprep.subr.bf16.mxu0 0
        %971 = vmatpush1.bf16.msra.mxu0 0
        %972 = vmatprep.subr.bf16.mxu0 0
        %973 = vmatpush1.bf16.msra.mxu0 %v956
        %974 = vmatprep.subr.bf16.mxu0 0
        %975 = vmatpush2.bf16.msra.mxu0 0
        %976 = vmatprep.subr.bf16.mxu0 0
        %977 = vmatpush2.bf16.msra.mxu0 0
        %978 = vmatprep.subr.bf16.mxu0 0
        %979 = vmatpush2.bf16.msra.mxu0 0
        %980 = vmatprep.subr.bf16.mxu0 0
        %981 = vmatpush2.bf16.msra.mxu0 0
        %982 = vmatprep.subr.bf16.mxu0 0
        %983 = vmatpush2.bf16.msra.mxu0 0
        %984 = vmatprep.subr.bf16.mxu0 0
        %985 = vmatpush2.bf16.msra.mxu0 0
        %986 = vmatprep.subr.bf16.mxu0 0
        %987 = vmatpush2.bf16.msra.mxu0 0
        %988 = vmatprep.subr.bf16.mxu0 0
        %989 = vmatpush2.bf16.msra.mxu0 0
        %990 = vmatprep.mubr.bf16.mxu0 0
        %991 = vmatmul.mubr.bf16.gmra.mxu0 %v952
        %v992 = vpop.f32.mrf.mxu0
        %v993 = vadd.f32 0.0, %v992
        %v994 = vpop.f32.mrf.mxu0
        %v995 = vpop.f32.mrf.mxu0
        %v996 = vpop.f32.mrf.mxu0
        %997 = vdwg.mxu0
        %998 = vrot.lane.b32.xlu0 %v823, 64
        %v999 = vpop.permute.xlu0 %998
        %v1001 = vsel %vm827, %v948, 0
        %v1004 = vsel %vm954, %v999, 0
        %1006 = vmatprep.subr.bf16.mxu0 0
        %1007 = vmatpush1.bf16.msra.mxu0 0
        %1008 = vmatprep.subr.bf16.mxu0 0
        %1009 = vmatpush1.bf16.msra.mxu0 0
        %1010 = vmatprep.subr.bf16.mxu0 0
        %1011 = vmatpush1.bf16.msra.mxu0 0
        %1012 = vmatprep.subr.bf16.mxu0 0
        %1013 = vmatpush1.bf16.msra.mxu0 0
        %1014 = vmatprep.subr.bf16.mxu0 0
        %1015 = vmatpush1.bf16.msra.mxu0 0
        %1016 = vmatprep.subr.bf16.mxu0 0
        %1017 = vmatpush1.bf16.msra.mxu0 0
        %1018 = vmatprep.subr.bf16.mxu0 0
        %1019 = vmatpush1.bf16.msra.mxu0 0
        %1020 = vmatprep.subr.bf16.mxu0 0
        %1021 = vmatpush1.bf16.msra.mxu0 %v1004
        %1022 = vmatprep.subr.bf16.mxu0 0
        %1023 = vmatpush2.bf16.msra.mxu0 0
        %1024 = vmatprep.subr.bf16.mxu0 0
        %1025 = vmatpush2.bf16.msra.mxu0 0
        %1026 = vmatprep.subr.bf16.mxu0 0
        %1027 = vmatpush2.bf16.msra.mxu0 0
        %1028 = vmatprep.subr.bf16.mxu0 0
        %1029 = vmatpush2.bf16.msra.mxu0 0
        %1030 = vmatprep.subr.bf16.mxu0 0
        %1031 = vmatpush2.bf16.msra.mxu0 0
        %1032 = vmatprep.subr.bf16.mxu0 0
        %1033 = vmatpush2.bf16.msra.mxu0 0
        %1034 = vmatprep.subr.bf16.mxu0 0
        %1035 = vmatpush2.bf16.msra.mxu0 0
        %1036 = vmatprep.subr.bf16.mxu0 0
        %1037 = vmatpush2.bf16.msra.mxu0 0
        %1038 = vmatprep.mubr.bf16.mxu0 0
        %1039 = vmatmul.mubr.bf16.gmra.mxu0 %v1001
        %v1040 = vpop.f32.mrf.mxu0
        %v1041 = vadd.f32 0.0, %v1040
        %v1042 = vpop.f32.mrf.mxu0
        %v1043 = vpop.f32.mrf.mxu0
        %v1044 = vpop.f32.mrf.mxu0
        %1045 = vdwg.mxu0
        %1046 = vrot.lane.b32.xlu0 %v822, 120
        %v1047 = vpop.permute.xlu0 %1046
        %1048 = vrot.lane.b32.xlu0 %v822, 88
        %v1049 = vpop.permute.xlu0 %1048
        %v1051 = vsel %vm827, %v1047, 0
        %v1054 = vsel %vm827, %v1049, 0
        %1056 = vmatprep.subr.bf16.mxu0 0
        %1057 = vmatpush1.bf16.xpose.msra.mxu0 0
        %1058 = vmatprep.subr.bf16.mxu0 0
        %1059 = vmatpush1.bf16.xpose.msra.mxu0 0
        %1060 = vmatprep.subr.bf16.mxu0 0
        %1061 = vmatpush1.bf16.xpose.msra.mxu0 0
        %1062 = vmatprep.subr.bf16.mxu0 0
        %1063 = vmatpush1.bf16.xpose.msra.mxu0 0
        %1064 = vmatprep.subr.bf16.mxu0 0
        %1065 = vmatpush1.bf16.xpose.msra.mxu0 0
        %1066 = vmatprep.subr.bf16.mxu0 0
        %1067 = vmatpush1.bf16.xpose.msra.mxu0 0
        %1068 = vmatprep.subr.bf16.mxu0 0
        %1069 = vmatpush1.bf16.xpose.msra.mxu0 0
        %1070 = vmatprep.subr.bf16.mxu0 0
        %1071 = vmatpush1.bf16.xpose.msra.mxu0 %v1054
        %1072 = vmatprep.subr.bf16.mxu0 0
        %1073 = vmatpush2.bf16.xpose.msra.mxu0 0
        %1074 = vmatprep.subr.bf16.mxu0 0
        %1075 = vmatpush2.bf16.xpose.msra.mxu0 0
        %1076 = vmatprep.subr.bf16.mxu0 0
        %1077 = vmatpush2.bf16.xpose.msra.mxu0 0
        %1078 = vmatprep.subr.bf16.mxu0 0
        %1079 = vmatpush2.bf16.xpose.msra.mxu0 0
        %1080 = vmatprep.subr.bf16.mxu0 0
        %1081 = vmatpush2.bf16.xpose.msra.mxu0 0
        %1082 = vmatprep.subr.bf16.mxu0 0
        %1083 = vmatpush2.bf16.xpose.msra.mxu0 0
        %1084 = vmatprep.subr.bf16.mxu0 0
        %1085 = vmatpush2.bf16.xpose.msra.mxu0 0
        %1086 = vmatprep.subr.bf16.mxu0 0
        %1087 = vmatpush2.bf16.xpose.msra.mxu0 0
        %1088 = vmatprep.mubr.bf16.mxu0 0
        %1089 = vmatmul.mubr.bf16.gmra.mxu0 %v1051
        %v1090 = vpop.f32.mrf.mxu0
        %v1091 = vadd.f32 0.0, %v1090
        %v1092 = vpop.f32.mrf.mxu0
        %v1093 = vpop.f32.mrf.mxu0
        %v1094 = vpop.f32.mrf.mxu0
        %1095 = vdwg.mxu0
        %1096 = vrot.lane.b32.xlu0 %v823, 120
        %v1097 = vpop.permute.xlu0 %1096
        %1098 = vrot.lane.b32.xlu0 %v823, 88
        %v1099 = vpop.permute.xlu0 %1098
        %v1101 = vsel %vm827, %v1097, 0
        %v1104 = vsel %vm827, %v1099, 0
        %1106 = vmatprep.subr.bf16.mxu0 0
        %1107 = vmatpush1.bf16.xpose.msra.mxu0 0
        %1108 = vmatprep.subr.bf16.mxu0 0
        %1109 = vmatpush1.bf16.xpose.msra.mxu0 0
        %1110 = vmatprep.subr.bf16.mxu0 0
        %1111 = vmatpush1.bf16.xpose.msra.mxu0 0
        %1112 = vmatprep.subr.bf16.mxu0 0
        %1113 = vmatpush1.bf16.xpose.msra.mxu0 0
        %1114 = vmatprep.subr.bf16.mxu0 0
        %1115 = vmatpush1.bf16.xpose.msra.mxu0 0
        %1116 = vmatprep.subr.bf16.mxu0 0
        %1117 = vmatpush1.bf16.xpose.msra.mxu0 0
        %1118 = vmatprep.subr.bf16.mxu0 0
        %1119 = vmatpush1.bf16.xpose.msra.mxu0 0
        %1120 = vmatprep.subr.bf16.mxu0 0
        %1121 = vmatpush1.bf16.xpose.msra.mxu0 %v1104
        %1122 = vmatprep.subr.bf16.mxu0 0
        %1123 = vmatpush2.bf16.xpose.msra.mxu0 0
        %1124 = vmatprep.subr.bf16.mxu0 0
        %1125 = vmatpush2.bf16.xpose.msra.mxu0 0
        %1126 = vmatprep.subr.bf16.mxu0 0
        %1127 = vmatpush2.bf16.xpose.msra.mxu0 0
        %1128 = vmatprep.subr.bf16.mxu0 0
        %1129 = vmatpush2.bf16.xpose.msra.mxu0 0
        %1130 = vmatprep.subr.bf16.mxu0 0
        %1131 = vmatpush2.bf16.xpose.msra.mxu0 0
        %1132 = vmatprep.subr.bf16.mxu0 0
        %1133 = vmatpush2.bf16.xpose.msra.mxu0 0
        %1134 = vmatprep.subr.bf16.mxu0 0
        %1135 = vmatpush2.bf16.xpose.msra.mxu0 0
        %1136 = vmatprep.subr.bf16.mxu0 0
        %1137 = vmatpush2.bf16.xpose.msra.mxu0 0
        %1138 = vmatprep.mubr.bf16.mxu0 0
        %1139 = vmatmul.mubr.bf16.gmra.mxu0 %v1101
        %v1140 = vpop.f32.mrf.mxu0
        %v1141 = vadd.f32 0.0, %v1140
        %v1142 = vpop.f32.mrf.mxu0
        %v1143 = vpop.f32.mrf.mxu0
        %v1144 = vpop.f32.mrf.mxu0
        %1145 = vdwg.mxu0
        %v1146 = vmul.f32 %v1091, 0.35355338
        %v1147 = vmul.f32 %v1141, 0.35355338
        %v1148 = vsel %vm827, %v1146, -inf
        %1149 = vmax.xlane.f32.xlu0 %v1148
        %v1150 = vpop.xlane.xlu0 %1149
        %v1151 = vsel %vm827, %v1147, -inf
        %1152 = vmax.xlane.f32.xlu0 %v1151
        %v1153 = vpop.xlane.xlu0 %1152
        %v1154 = vsub.f32 %v1146, %v1150
        %v1155 = vsub.f32 %v1147, %v1153
        %v1156 = vmul.f32 %v1154, 1.442695
        %v1157 = vpow.pop %v1156
        %v1158 = vmul.f32 %v1155, 1.442695
        %v1159 = vpow.pop %v1158
        %v1160 = vsel %vm827, %v1157, 0.0
        %1161 = vadd.xlane.f32.xlu0 %v1160
        %v1162 = vpop.xlane.xlu0 %1161
        %v1163 = vsel %vm827, %v1159, 0.0
        %1164 = vadd.xlane.f32.xlu0 %v1163
        %v1165 = vpop.xlane.xlu0 %1164
        %v1166 = vrcp.pop %v1162
        %v1167 = vrcp.pop %v1165
        %v1168 = vmul.f32 %v1157, %v1166
        %v1169 = vmul.f32 %v1159, %v1167
        %v1170 = vpack.c.bf16 %v1168, %v1168
        %v1171 = vpack.c.bf16 %v1169, %v1169
        %1172 = vrot.lane.b32.xlu0 %v822, 56
        %v1173 = vpop.permute.xlu0 %1172
        %v1175 = vsel %vm827, %v1170, 0
        %v1178 = vsel %vm954, %v1173, 0
        %1180 = vmatprep.subr.bf16.mxu0 0
        %1181 = vmatpush1.bf16.msra.mxu0 0
        %1182 = vmatprep.subr.bf16.mxu0 0
        %1183 = vmatpush1.bf16.msra.mxu0 0
        %1184 = vmatprep.subr.bf16.mxu0 0
        %1185 = vmatpush1.bf16.msra.mxu0 0
        %1186 = vmatprep.subr.bf16.mxu0 0
        %1187 = vmatpush1.bf16.msra.mxu0 0
        %1188 = vmatprep.subr.bf16.mxu0 0
        %1189 = vmatpush1.bf16.msra.mxu0 0
        %1190 = vmatprep.subr.bf16.mxu0 0
        %1191 = vmatpush1.bf16.msra.mxu0 0
        %1192 = vmatprep.subr.bf16.mxu0 0
        %1193 = vmatpush1.bf16.msra.mxu0 0
        %1194 = vmatprep.subr.bf16.mxu0 0
        %1195 = vmatpush1.bf16.msra.mxu0 %v1178
        %1196 = vmatprep.subr.bf16.mxu0 0
        %1197 = vmatpush2.bf16.msra.mxu0 0
        %1198 = vmatprep.subr.bf16.mxu0 0
        %1199 = vmatpush2.bf16.msra.mxu0 0
        %1200 = vmatprep.subr.bf16.mxu0 0
        %1201 = vmatpush2.bf16.msra.mxu0 0
        %1202 = vmatprep.subr.bf16.mxu0 0
        %1203 = vmatpush2.bf16.msra.mxu0 0
        %1204 = vmatprep.subr.bf16.mxu0 0
        %1205 = vmatpush2.bf16.msra.mxu0 0
        %1206 = vmatprep.subr.bf16.mxu0 0
        %1207 = vmatpush2.bf16.msra.mxu0 0
        %1208 = vmatprep.subr.bf16.mxu0 0
        %1209 = vmatpush2.bf16.msra.mxu0 0
        %1210 = vmatprep.subr.bf16.mxu0 0
        %1211 = vmatpush2.bf16.msra.mxu0 0
        %1212 = vmatprep.mubr.bf16.mxu0 0
        %1213 = vmatmul.mubr.bf16.gmra.mxu0 %v1175
        %v1214 = vpop.f32.mrf.mxu0
        %v1215 = vadd.f32 0.0, %v1214
        %v1216 = vpop.f32.mrf.mxu0
        %v1217 = vpop.f32.mrf.mxu0
        %v1218 = vpop.f32.mrf.mxu0
        %1219 = vdwg.mxu0
        %1220 = vrot.lane.b32.xlu0 %v823, 56
        %v1221 = vpop.permute.xlu0 %1220
        %v1223 = vsel %vm827, %v1171, 0
        %v1226 = vsel %vm954, %v1221, 0
        %1228 = vmatprep.subr.bf16.mxu0 0
        %1229 = vmatpush1.bf16.msra.mxu0 0
        %1230 = vmatprep.subr.bf16.mxu0 0
        %1231 = vmatpush1.bf16.msra.mxu0 0
        %1232 = vmatprep.subr.bf16.mxu0 0
        %1233 = vmatpush1.bf16.msra.mxu0 0
        %1234 = vmatprep.subr.bf16.mxu0 0
        %1235 = vmatpush1.bf16.msra.mxu0 0
        %1236 = vmatprep.subr.bf16.mxu0 0
        %1237 = vmatpush1.bf16.msra.mxu0 0
        %1238 = vmatprep.subr.bf16.mxu0 0
        %1239 = vmatpush1.bf16.msra.mxu0 0
        %1240 = vmatprep.subr.bf16.mxu0 0
        %1241 = vmatpush1.bf16.msra.mxu0 0
        %1242 = vmatprep.subr.bf16.mxu0 0
        %1243 = vmatpush1.bf16.msra.mxu0 %v1226
        %1244 = vmatprep.subr.bf16.mxu0 0
        %1245 = vmatpush2.bf16.msra.mxu0 0
        %1246 = vmatprep.subr.bf16.mxu0 0
        %1247 = vmatpush2.bf16.msra.mxu0 0
        %1248 = vmatprep.subr.bf16.mxu0 0
        %1249 = vmatpush2.bf16.msra.mxu0 0
        %1250 = vmatprep.subr.bf16.mxu0 0
        %1251 = vmatpush2.bf16.msra.mxu0 0
        %1252 = vmatprep.subr.bf16.mxu0 0
        %1253 = vmatpush2.bf16.msra.mxu0 0
        %1254 = vmatprep.subr.bf16.mxu0 0
        %1255 = vmatpush2.bf16.msra.mxu0 0
        %1256 = vmatprep.subr.bf16.mxu0 0
        %1257 = vmatpush2.bf16.msra.mxu0 0
        %1258 = vmatprep.subr.bf16.mxu0 0
        %1259 = vmatpush2.bf16.msra.mxu0 0
        %1260 = vmatprep.mubr.bf16.mxu0 0
        %1261 = vmatmul.mubr.bf16.gmra.mxu0 %v1223
        %v1262 = vpop.f32.mrf.mxu0
        %v1263 = vadd.f32 0.0, %v1262
        %v1264 = vpop.f32.mrf.mxu0
        %v1265 = vpop.f32.mrf.mxu0
        %v1266 = vpop.f32.mrf.mxu0
        %1267 = vdwg.mxu0
        %1268 = vrot.lane.b32.xlu0 %v822, 112
        %v1269 = vpop.permute.xlu0 %1268
        %1270 = vrot.lane.b32.xlu0 %v822, 80
        %v1271 = vpop.permute.xlu0 %1270
        %v1273 = vsel %vm827, %v1269, 0
        %v1276 = vsel %vm827, %v1271, 0
        %1278 = vmatprep.subr.bf16.mxu0 0
        %1279 = vmatpush1.bf16.xpose.msra.mxu0 0
        %1280 = vmatprep.subr.bf16.mxu0 0
        %1281 = vmatpush1.bf16.xpose.msra.mxu0 0
        %1282 = vmatprep.subr.bf16.mxu0 0
        %1283 = vmatpush1.bf16.xpose.msra.mxu0 0
        %1284 = vmatprep.subr.bf16.mxu0 0
        %1285 = vmatpush1.bf16.xpose.msra.mxu0 0
        %1286 = vmatprep.subr.bf16.mxu0 0
        %1287 = vmatpush1.bf16.xpose.msra.mxu0 0
        %1288 = vmatprep.subr.bf16.mxu0 0
        %1289 = vmatpush1.bf16.xpose.msra.mxu0 0
        %1290 = vmatprep.subr.bf16.mxu0 0
        %1291 = vmatpush1.bf16.xpose.msra.mxu0 0
        %1292 = vmatprep.subr.bf16.mxu0 0
        %1293 = vmatpush1.bf16.xpose.msra.mxu0 %v1276
        %1294 = vmatprep.subr.bf16.mxu0 0
        %1295 = vmatpush2.bf16.xpose.msra.mxu0 0
        %1296 = vmatprep.subr.bf16.mxu0 0
        %1297 = vmatpush2.bf16.xpose.msra.mxu0 0
        %1298 = vmatprep.subr.bf16.mxu0 0
        %1299 = vmatpush2.bf16.xpose.msra.mxu0 0
        %1300 = vmatprep.subr.bf16.mxu0 0
        %1301 = vmatpush2.bf16.xpose.msra.mxu0 0
        %1302 = vmatprep.subr.bf16.mxu0 0
        %1303 = vmatpush2.bf16.xpose.msra.mxu0 0
        %1304 = vmatprep.subr.bf16.mxu0 0
        %1305 = vmatpush2.bf16.xpose.msra.mxu0 0
        %1306 = vmatprep.subr.bf16.mxu0 0
        %1307 = vmatpush2.bf16.xpose.msra.mxu0 0
        %1308 = vmatprep.subr.bf16.mxu0 0
        %1309 = vmatpush2.bf16.xpose.msra.mxu0 0
        %1310 = vmatprep.mubr.bf16.mxu0 0
        %1311 = vmatmul.mubr.bf16.gmra.mxu0 %v1273
        %v1312 = vpop.f32.mrf.mxu0
        %v1313 = vadd.f32 0.0, %v1312
        %v1314 = vpop.f32.mrf.mxu0
        %v1315 = vpop.f32.mrf.mxu0
        %v1316 = vpop.f32.mrf.mxu0
        %1317 = vdwg.mxu0
        %1318 = vrot.lane.b32.xlu0 %v823, 112
        %v1319 = vpop.permute.xlu0 %1318
        %1320 = vrot.lane.b32.xlu0 %v823, 80
        %v1321 = vpop.permute.xlu0 %1320
        %v1323 = vsel %vm827, %v1319, 0
        %v1326 = vsel %vm827, %v1321, 0
        %1328 = vmatprep.subr.bf16.mxu0 0
        %1329 = vmatpush1.bf16.xpose.msra.mxu0 0
        %1330 = vmatprep.subr.bf16.mxu0 0
        %1331 = vmatpush1.bf16.xpose.msra.mxu0 0
        %1332 = vmatprep.subr.bf16.mxu0 0
        %1333 = vmatpush1.bf16.xpose.msra.mxu0 0
        %1334 = vmatprep.subr.bf16.mxu0 0
        %1335 = vmatpush1.bf16.xpose.msra.mxu0 0
        %1336 = vmatprep.subr.bf16.mxu0 0
        %1337 = vmatpush1.bf16.xpose.msra.mxu0 0
        %1338 = vmatprep.subr.bf16.mxu0 0
        %1339 = vmatpush1.bf16.xpose.msra.mxu0 0
        %1340 = vmatprep.subr.bf16.mxu0 0
        %1341 = vmatpush1.bf16.xpose.msra.mxu0 0
        %1342 = vmatprep.subr.bf16.mxu0 0
        %1343 = vmatpush1.bf16.xpose.msra.mxu0 %v1326
        %1344 = vmatprep.subr.bf16.mxu0 0
        %1345 = vmatpush2.bf16.xpose.msra.mxu0 0
        %1346 = vmatprep.subr.bf16.mxu0 0
        %1347 = vmatpush2.bf16.xpose.msra.mxu0 0
        %1348 = vmatprep.subr.bf16.mxu0 0
        %1349 = vmatpush2.bf16.xpose.msra.mxu0 0
        %1350 = vmatprep.subr.bf16.mxu0 0
        %1351 = vmatpush2.bf16.xpose.msra.mxu0 0
        %1352 = vmatprep.subr.bf16.mxu0 0
        %1353 = vmatpush2.bf16.xpose.msra.mxu0 0
        %1354 = vmatprep.subr.bf16.mxu0 0
        %1355 = vmatpush2.bf16.xpose.msra.mxu0 0
        %1356 = vmatprep.subr.bf16.mxu0 0
        %1357 = vmatpush2.bf16.xpose.msra.mxu0 0
        %1358 = vmatprep.subr.bf16.mxu0 0
        %1359 = vmatpush2.bf16.xpose.msra.mxu0 0
        %1360 = vmatprep.mubr.bf16.mxu0 0
        %1361 = vmatmul.mubr.bf16.gmra.mxu0 %v1323
        %v1362 = vpop.f32.mrf.mxu0
        %v1363 = vadd.f32 0.0, %v1362
        %v1364 = vpop.f32.mrf.mxu0
        %v1365 = vpop.f32.mrf.mxu0
        %v1366 = vpop.f32.mrf.mxu0
        %1367 = vdwg.mxu0
        %v1368 = vmul.f32 %v1313, 0.35355338
        %v1369 = vmul.f32 %v1363, 0.35355338
        %v1370 = vsel %vm827, %v1368, -inf
        %1371 = vmax.xlane.f32.xlu0 %v1370
        %v1372 = vpop.xlane.xlu0 %1371
        %v1373 = vsel %vm827, %v1369, -inf
        %1374 = vmax.xlane.f32.xlu0 %v1373
        %v1375 = vpop.xlane.xlu0 %1374
        %v1376 = vsub.f32 %v1368, %v1372
        %v1377 = vsub.f32 %v1369, %v1375
        %v1378 = vmul.f32 %v1376, 1.442695
        %v1379 = vpow.pop %v1378
        %v1380 = vmul.f32 %v1377, 1.442695
        %v1381 = vpow.pop %v1380
        %v1382 = vsel %vm827, %v1379, 0.0
        %1383 = vadd.xlane.f32.xlu0 %v1382
        %v1384 = vpop.xlane.xlu0 %1383
        %v1385 = vsel %vm827, %v1381, 0.0
        %1386 = vadd.xlane.f32.xlu0 %v1385
        %v1387 = vpop.xlane.xlu0 %1386
        %v1388 = vrcp.pop %v1384
        %v1389 = vrcp.pop %v1387
        %v1390 = vmul.f32 %v1379, %v1388
        %v1391 = vmul.f32 %v1381, %v1389
        %v1392 = vpack.c.bf16 %v1390, %v1390
        %v1393 = vpack.c.bf16 %v1391, %v1391
        %1394 = vrot.lane.b32.xlu0 %v822, 48
        %v1395 = vpop.permute.xlu0 %1394
        %v1397 = vsel %vm827, %v1392, 0
        %v1400 = vsel %vm954, %v1395, 0
        %1402 = vmatprep.subr.bf16.mxu0 0
        %1403 = vmatpush1.bf16.msra.mxu0 0
        %1404 = vmatprep.subr.bf16.mxu0 0
        %1405 = vmatpush1.bf16.msra.mxu0 0
        %1406 = vmatprep.subr.bf16.mxu0 0
        %1407 = vmatpush1.bf16.msra.mxu0 0
        %1408 = vmatprep.subr.bf16.mxu0 0
        %1409 = vmatpush1.bf16.msra.mxu0 0
        %1410 = vmatprep.subr.bf16.mxu0 0
        %1411 = vmatpush1.bf16.msra.mxu0 0
        %1412 = vmatprep.subr.bf16.mxu0 0
        %1413 = vmatpush1.bf16.msra.mxu0 0
        %1414 = vmatprep.subr.bf16.mxu0 0
        %1415 = vmatpush1.bf16.msra.mxu0 0
        %1416 = vmatprep.subr.bf16.mxu0 0
        %1417 = vmatpush1.bf16.msra.mxu0 %v1400
        %1418 = vmatprep.subr.bf16.mxu0 0
        %1419 = vmatpush2.bf16.msra.mxu0 0
        %1420 = vmatprep.subr.bf16.mxu0 0
        %1421 = vmatpush2.bf16.msra.mxu0 0
        %1422 = vmatprep.subr.bf16.mxu0 0
        %1423 = vmatpush2.bf16.msra.mxu0 0
        %1424 = vmatprep.subr.bf16.mxu0 0
        %1425 = vmatpush2.bf16.msra.mxu0 0
        %1426 = vmatprep.subr.bf16.mxu0 0
        %1427 = vmatpush2.bf16.msra.mxu0 0
        %1428 = vmatprep.subr.bf16.mxu0 0
        %1429 = vmatpush2.bf16.msra.mxu0 0
        %1430 = vmatprep.subr.bf16.mxu0 0
        %1431 = vmatpush2.bf16.msra.mxu0 0
        %1432 = vmatprep.subr.bf16.mxu0 0
        %1433 = vmatpush2.bf16.msra.mxu0 0
        %1434 = vmatprep.mubr.bf16.mxu0 0
        %1435 = vmatmul.mubr.bf16.gmra.mxu0 %v1397
        %v1436 = vpop.f32.mrf.mxu0
        %v1437 = vadd.f32 0.0, %v1436
        %v1438 = vpop.f32.mrf.mxu0
        %v1439 = vpop.f32.mrf.mxu0
        %v1440 = vpop.f32.mrf.mxu0
        %1441 = vdwg.mxu0
        %1442 = vrot.lane.b32.xlu0 %v823, 48
        %v1443 = vpop.permute.xlu0 %1442
        %v1445 = vsel %vm827, %v1393, 0
        %v1448 = vsel %vm954, %v1443, 0
        %1450 = vmatprep.subr.bf16.mxu0 0
        %1451 = vmatpush1.bf16.msra.mxu0 0
        %1452 = vmatprep.subr.bf16.mxu0 0
        %1453 = vmatpush1.bf16.msra.mxu0 0
        %1454 = vmatprep.subr.bf16.mxu0 0
        %1455 = vmatpush1.bf16.msra.mxu0 0
        %1456 = vmatprep.subr.bf16.mxu0 0
        %1457 = vmatpush1.bf16.msra.mxu0 0
        %1458 = vmatprep.subr.bf16.mxu0 0
        %1459 = vmatpush1.bf16.msra.mxu0 0
        %1460 = vmatprep.subr.bf16.mxu0 0
        %1461 = vmatpush1.bf16.msra.mxu0 0
        %1462 = vmatprep.subr.bf16.mxu0 0
        %1463 = vmatpush1.bf16.msra.mxu0 0
        %1464 = vmatprep.subr.bf16.mxu0 0
        %1465 = vmatpush1.bf16.msra.mxu0 %v1448
        %1466 = vmatprep.subr.bf16.mxu0 0
        %1467 = vmatpush2.bf16.msra.mxu0 0
        %1468 = vmatprep.subr.bf16.mxu0 0
        %1469 = vmatpush2.bf16.msra.mxu0 0
        %1470 = vmatprep.subr.bf16.mxu0 0
        %1471 = vmatpush2.bf16.msra.mxu0 0
        %1472 = vmatprep.subr.bf16.mxu0 0
        %1473 = vmatpush2.bf16.msra.mxu0 0
        %1474 = vmatprep.subr.bf16.mxu0 0
        %1475 = vmatpush2.bf16.msra.mxu0 0
        %1476 = vmatprep.subr.bf16.mxu0 0
        %1477 = vmatpush2.bf16.msra.mxu0 0
        %1478 = vmatprep.subr.bf16.mxu0 0
        %1479 = vmatpush2.bf16.msra.mxu0 0
        %1480 = vmatprep.subr.bf16.mxu0 0
        %1481 = vmatpush2.bf16.msra.mxu0 0
        %1482 = vmatprep.mubr.bf16.mxu0 0
        %1483 = vmatmul.mubr.bf16.gmra.mxu0 %v1445
        %v1484 = vpop.f32.mrf.mxu0
        %v1485 = vadd.f32 0.0, %v1484
        %v1486 = vpop.f32.mrf.mxu0
        %v1487 = vpop.f32.mrf.mxu0
        %v1488 = vpop.f32.mrf.mxu0
        %1489 = vdwg.mxu0
        %1490 = vrot.lane.b32.xlu0 %v822, 104
        %v1491 = vpop.permute.xlu0 %1490
        %1492 = vrot.lane.b32.xlu0 %v822, 72
        %v1493 = vpop.permute.xlu0 %1492
        %v1495 = vsel %vm827, %v1491, 0
        %v1498 = vsel %vm827, %v1493, 0
        %1500 = vmatprep.subr.bf16.mxu0 0
        %1501 = vmatpush1.bf16.xpose.msra.mxu0 0
        %1502 = vmatprep.subr.bf16.mxu0 0
        %1503 = vmatpush1.bf16.xpose.msra.mxu0 0
        %1504 = vmatprep.subr.bf16.mxu0 0
        %1505 = vmatpush1.bf16.xpose.msra.mxu0 0
        %1506 = vmatprep.subr.bf16.mxu0 0
        %1507 = vmatpush1.bf16.xpose.msra.mxu0 0
        %1508 = vmatprep.subr.bf16.mxu0 0
        %1509 = vmatpush1.bf16.xpose.msra.mxu0 0
        %1510 = vmatprep.subr.bf16.mxu0 0
        %1511 = vmatpush1.bf16.xpose.msra.mxu0 0
        %1512 = vmatprep.subr.bf16.mxu0 0
        %1513 = vmatpush1.bf16.xpose.msra.mxu0 0
        %1514 = vmatprep.subr.bf16.mxu0 0
        %1515 = vmatpush1.bf16.xpose.msra.mxu0 %v1498
        %1516 = vmatprep.subr.bf16.mxu0 0
        %1517 = vmatpush2.bf16.xpose.msra.mxu0 0
        %1518 = vmatprep.subr.bf16.mxu0 0
        %1519 = vmatpush2.bf16.xpose.msra.mxu0 0
        %1520 = vmatprep.subr.bf16.mxu0 0
        %1521 = vmatpush2.bf16.xpose.msra.mxu0 0
        %1522 = vmatprep.subr.bf16.mxu0 0
        %1523 = vmatpush2.bf16.xpose.msra.mxu0 0
        %1524 = vmatprep.subr.bf16.mxu0 0
        %1525 = vmatpush2.bf16.xpose.msra.mxu0 0
        %1526 = vmatprep.subr.bf16.mxu0 0
        %1527 = vmatpush2.bf16.xpose.msra.mxu0 0
        %1528 = vmatprep.subr.bf16.mxu0 0
        %1529 = vmatpush2.bf16.xpose.msra.mxu0 0
        %1530 = vmatprep.subr.bf16.mxu0 0
        %1531 = vmatpush2.bf16.xpose.msra.mxu0 0
        %1532 = vmatprep.mubr.bf16.mxu0 0
        %1533 = vmatmul.mubr.bf16.gmra.mxu0 %v1495
        %v1534 = vpop.f32.mrf.mxu0
        %v1535 = vadd.f32 0.0, %v1534
        %v1536 = vpop.f32.mrf.mxu0
        %v1537 = vpop.f32.mrf.mxu0
        %v1538 = vpop.f32.mrf.mxu0
        %1539 = vdwg.mxu0
        %1540 = vrot.lane.b32.xlu0 %v823, 104
        %v1541 = vpop.permute.xlu0 %1540
        %1542 = vrot.lane.b32.xlu0 %v823, 72
        %v1543 = vpop.permute.xlu0 %1542
        %v1545 = vsel %vm827, %v1541, 0
        %v1548 = vsel %vm827, %v1543, 0
        %1550 = vmatprep.subr.bf16.mxu0 0
        %1551 = vmatpush1.bf16.xpose.msra.mxu0 0
        %1552 = vmatprep.subr.bf16.mxu0 0
        %1553 = vmatpush1.bf16.xpose.msra.mxu0 0
        %1554 = vmatprep.subr.bf16.mxu0 0
        %1555 = vmatpush1.bf16.xpose.msra.mxu0 0
        %1556 = vmatprep.subr.bf16.mxu0 0
        %1557 = vmatpush1.bf16.xpose.msra.mxu0 0
        %1558 = vmatprep.subr.bf16.mxu0 0
        %1559 = vmatpush1.bf16.xpose.msra.mxu0 0
        %1560 = vmatprep.subr.bf16.mxu0 0
        %1561 = vmatpush1.bf16.xpose.msra.mxu0 0
        %1562 = vmatprep.subr.bf16.mxu0 0
        %1563 = vmatpush1.bf16.xpose.msra.mxu0 0
        %1564 = vmatprep.subr.bf16.mxu0 0
        %1565 = vmatpush1.bf16.xpose.msra.mxu0 %v1548
        %1566 = vmatprep.subr.bf16.mxu0 0
        %1567 = vmatpush2.bf16.xpose.msra.mxu0 0
        %1568 = vmatprep.subr.bf16.mxu0 0
        %1569 = vmatpush2.bf16.xpose.msra.mxu0 0
        %1570 = vmatprep.subr.bf16.mxu0 0
        %1571 = vmatpush2.bf16.xpose.msra.mxu0 0
        %1572 = vmatprep.subr.bf16.mxu0 0
        %1573 = vmatpush2.bf16.xpose.msra.mxu0 0
        %1574 = vmatprep.subr.bf16.mxu0 0
        %1575 = vmatpush2.bf16.xpose.msra.mxu0 0
        %1576 = vmatprep.subr.bf16.mxu0 0
        %1577 = vmatpush2.bf16.xpose.msra.mxu0 0
        %1578 = vmatprep.subr.bf16.mxu0 0
        %1579 = vmatpush2.bf16.xpose.msra.mxu0 0
        %1580 = vmatprep.subr.bf16.mxu0 0
        %1581 = vmatpush2.bf16.xpose.msra.mxu0 0
        %1582 = vmatprep.mubr.bf16.mxu0 0
        %1583 = vmatmul.mubr.bf16.gmra.mxu0 %v1545
        %v1584 = vpop.f32.mrf.mxu0
        %v1585 = vadd.f32 0.0, %v1584
        %v1586 = vpop.f32.mrf.mxu0
        %v1587 = vpop.f32.mrf.mxu0
        %v1588 = vpop.f32.mrf.mxu0
        %1589 = vdwg.mxu0
        %v1590 = vmul.f32 %v1535, 0.35355338
        %v1591 = vmul.f32 %v1585, 0.35355338
        %v1592 = vsel %vm827, %v1590, -inf
        %1593 = vmax.xlane.f32.xlu0 %v1592
        %v1594 = vpop.xlane.xlu0 %1593
        %v1595 = vsel %vm827, %v1591, -inf
        %1596 = vmax.xlane.f32.xlu0 %v1595
        %v1597 = vpop.xlane.xlu0 %1596
        %v1598 = vsub.f32 %v1590, %v1594
        %v1599 = vsub.f32 %v1591, %v1597
        %v1600 = vmul.f32 %v1598, 1.442695
        %v1601 = vpow.pop %v1600
        %v1602 = vmul.f32 %v1599, 1.442695
        %v1603 = vpow.pop %v1602
        %v1604 = vsel %vm827, %v1601, 0.0
        %1605 = vadd.xlane.f32.xlu0 %v1604
        %v1606 = vpop.xlane.xlu0 %1605
        %v1607 = vsel %vm827, %v1603, 0.0
        %1608 = vadd.xlane.f32.xlu0 %v1607
        %v1609 = vpop.xlane.xlu0 %1608
        %v1610 = vrcp.pop %v1606
        %v1611 = vrcp.pop %v1609
        %v1612 = vmul.f32 %v1601, %v1610
        %v1613 = vmul.f32 %v1603, %v1611
        %v1614 = vpack.c.bf16 %v1612, %v1612
        %v1615 = vpack.c.bf16 %v1613, %v1613
        %1616 = vrot.lane.b32.xlu0 %v822, 40
        %v1617 = vpop.permute.xlu0 %1616
        %v1619 = vsel %vm827, %v1614, 0
        %v1622 = vsel %vm954, %v1617, 0
        %1624 = vmatprep.subr.bf16.mxu0 0
        %1625 = vmatpush1.bf16.msra.mxu0 0
        %1626 = vmatprep.subr.bf16.mxu0 0
        %1627 = vmatpush1.bf16.msra.mxu0 0
        %1628 = vmatprep.subr.bf16.mxu0 0
        %1629 = vmatpush1.bf16.msra.mxu0 0
        %1630 = vmatprep.subr.bf16.mxu0 0
        %1631 = vmatpush1.bf16.msra.mxu0 0
        %1632 = vmatprep.subr.bf16.mxu0 0
        %1633 = vmatpush1.bf16.msra.mxu0 0
        %1634 = vmatprep.subr.bf16.mxu0 0
        %1635 = vmatpush1.bf16.msra.mxu0 0
        %1636 = vmatprep.subr.bf16.mxu0 0
        %1637 = vmatpush1.bf16.msra.mxu0 0
        %1638 = vmatprep.subr.bf16.mxu0 0
        %1639 = vmatpush1.bf16.msra.mxu0 %v1622
        %1640 = vmatprep.subr.bf16.mxu0 0
        %1641 = vmatpush2.bf16.msra.mxu0 0
        %1642 = vmatprep.subr.bf16.mxu0 0
        %1643 = vmatpush2.bf16.msra.mxu0 0
        %1644 = vmatprep.subr.bf16.mxu0 0
        %1645 = vmatpush2.bf16.msra.mxu0 0
        %1646 = vmatprep.subr.bf16.mxu0 0
        %1647 = vmatpush2.bf16.msra.mxu0 0
        %1648 = vmatprep.subr.bf16.mxu0 0
        %1649 = vmatpush2.bf16.msra.mxu0 0
        %1650 = vmatprep.subr.bf16.mxu0 0
        %1651 = vmatpush2.bf16.msra.mxu0 0
        %1652 = vmatprep.subr.bf16.mxu0 0
        %1653 = vmatpush2.bf16.msra.mxu0 0
        %1654 = vmatprep.subr.bf16.mxu0 0
        %1655 = vmatpush2.bf16.msra.mxu0 0
        %1656 = vmatprep.mubr.bf16.mxu0 0
        %1657 = vmatmul.mubr.bf16.gmra.mxu0 %v1619
        %v1658 = vpop.f32.mrf.mxu0
        %v1659 = vadd.f32 0.0, %v1658
        %v1660 = vpop.f32.mrf.mxu0
        %v1661 = vpop.f32.mrf.mxu0
        %v1662 = vpop.f32.mrf.mxu0
        %1663 = vdwg.mxu0
        %1664 = vrot.lane.b32.xlu0 %v823, 40
        %v1665 = vpop.permute.xlu0 %1664
        %v1667 = vsel %vm827, %v1615, 0
        %v1670 = vsel %vm954, %v1665, 0
        %1672 = vmatprep.subr.bf16.mxu0 0
        %1673 = vmatpush1.bf16.msra.mxu0 0
        %1674 = vmatprep.subr.bf16.mxu0 0
        %1675 = vmatpush1.bf16.msra.mxu0 0
        %1676 = vmatprep.subr.bf16.mxu0 0
        %1677 = vmatpush1.bf16.msra.mxu0 0
        %1678 = vmatprep.subr.bf16.mxu0 0
        %1679 = vmatpush1.bf16.msra.mxu0 0
        %1680 = vmatprep.subr.bf16.mxu0 0
        %1681 = vmatpush1.bf16.msra.mxu0 0
        %1682 = vmatprep.subr.bf16.mxu0 0
        %1683 = vmatpush1.bf16.msra.mxu0 0
        %1684 = vmatprep.subr.bf16.mxu0 0
        %1685 = vmatpush1.bf16.msra.mxu0 0
        %1686 = vmatprep.subr.bf16.mxu0 0
        %1687 = vmatpush1.bf16.msra.mxu0 %v1670
        %1688 = vmatprep.subr.bf16.mxu0 0
        %1689 = vmatpush2.bf16.msra.mxu0 0
        %1690 = vmatprep.subr.bf16.mxu0 0
        %1691 = vmatpush2.bf16.msra.mxu0 0
        %1692 = vmatprep.subr.bf16.mxu0 0
        %1693 = vmatpush2.bf16.msra.mxu0 0
        %1694 = vmatprep.subr.bf16.mxu0 0
        %1695 = vmatpush2.bf16.msra.mxu0 0
        %1696 = vmatprep.subr.bf16.mxu0 0
        %1697 = vmatpush2.bf16.msra.mxu0 0
        %1698 = vmatprep.subr.bf16.mxu0 0
        %1699 = vmatpush2.bf16.msra.mxu0 0
        %1700 = vmatprep.subr.bf16.mxu0 0
        %1701 = vmatpush2.bf16.msra.mxu0 0
        %1702 = vmatprep.subr.bf16.mxu0 0
        %1703 = vmatpush2.bf16.msra.mxu0 0
        %1704 = vmatprep.mubr.bf16.mxu0 0
        %1705 = vmatmul.mubr.bf16.gmra.mxu0 %v1667
        %v1706 = vpop.f32.mrf.mxu0
        %v1707 = vadd.f32 0.0, %v1706
        %v1708 = vpop.f32.mrf.mxu0
        %v1709 = vpop.f32.mrf.mxu0
        %v1710 = vpop.f32.mrf.mxu0
        %1711 = vdwg.mxu0
        %1714 = vrot.lane.b32.xlu0 %v1215, 8
        %v1715 = vpop.permute.xlu0 %1714
        %1716 = vrot.lane.b32.xlu0 %v1263, 8
        %v1717 = vpop.permute.xlu0 %1716
        %1722 = vrot.lane.b32.xlu0 %v1437, 16
        %v1723 = vpop.permute.xlu0 %1722
        %1724 = vrot.lane.b32.xlu0 %v1485, 16
        %v1725 = vpop.permute.xlu0 %1724
        %1730 = vrot.lane.b32.xlu0 %v1659, 24
        %v1731 = vpop.permute.xlu0 %1730
        %1732 = vrot.lane.b32.xlu0 %v1707, 24
        %v1733 = vpop.permute.xlu0 %1732
        %v1736 = vsel %vm827, %v993, %v1715
        %v1737 = vsel %vm827, %v1041, %v1717
        %vm1738 = vcmask 130048
        %v1739 = vsel %vm1738, %v1736, %v1723
        %v1740 = vsel %vm1738, %v1737, %v1725
        %vm1741 = vcmask 195584
        %v1742 = vsel %vm1741, %v1739, %v1731
        %v1743 = vsel %vm1741, %v1740, %v1733
        %v1744 = vpack.c.bf16 %v1743, %v1742
        %v1745 = vld [vmem:[%s668] sm:$0xf]
        %v1746 = vld [vmem:[%s668 + $0x4] sm:$0xf]
        %v1747 = vld [vmem:[%s668 + $0x8] sm:$0xf]
        %v1748 = vld [vmem:[%s668 + $0xc] sm:$0xf]
        %v1749 = vld [vmem:[%s671] sm:$0x1]
        %v1751 = vlaneseq
        %v1752 = vshrl.u32 %v1751, 7
        %v1753 = vsub.s32 0, %v1752
        %v1754 = vrot.slane %v1749, %v1753
        %v1760 = vunpack.c.l.b16 %v1745
        %v1761 = vunpack.c.l.b16 %v1746
        %v1762 = vunpack.c.l.b16 %v1747
        %v1763 = vunpack.c.l.b16 %v1748
        %v1764 = vpack.c.b16 %v1761, %v1760
        %v1765 = vpack.c.b16 %v1763, %v1762
        %v1769 = vsel %vm710, %v1744, 0
        %1771 = vmatprep.subr.bf16.mxu0 0
        %1772 = vmatpush1.bf16.msra.mxu0 0
        %1773 = vmatprep.subr.bf16.mxu0 0
        %1774 = vmatpush1.bf16.msra.mxu0 0
        %1775 = vmatprep.subr.bf16.mxu0 0
        %1776 = vmatpush1.bf16.msra.mxu0 0
        %1777 = vmatprep.subr.bf16.mxu0 0
        %1778 = vmatpush1.bf16.msra.mxu0 0
        %1779 = vmatprep.subr.bf16.mxu0 0
        %1780 = vmatpush1.bf16.msra.mxu0 0
        %1781 = vmatprep.subr.bf16.mxu0 0
        %1782 = vmatpush1.bf16.msra.mxu0 0
        %1783 = vmatprep.subr.bf16.mxu0 0
        %1784 = vmatpush1.bf16.msra.mxu0 %v1765
        %1785 = vmatprep.subr.bf16.mxu0 0
        %1786 = vmatpush1.bf16.msra.mxu0 %v1764
        %1787 = vmatprep.subr.bf16.mxu0 0
        %1788 = vmatpush2.bf16.msra.mxu0 0
        %1789 = vmatprep.subr.bf16.mxu0 0
        %1790 = vmatpush2.bf16.msra.mxu0 0
        %1791 = vmatprep.subr.bf16.mxu0 0
        %1792 = vmatpush2.bf16.msra.mxu0 0
        %1793 = vmatprep.subr.bf16.mxu0 0
        %1794 = vmatpush2.bf16.msra.mxu0 0
        %1795 = vmatprep.subr.bf16.mxu0 0
        %1796 = vmatpush2.bf16.msra.mxu0 0
        %1797 = vmatprep.subr.bf16.mxu0 0
        %1798 = vmatpush2.bf16.msra.mxu0 0
        %1799 = vmatprep.subr.bf16.mxu0 0
        %1800 = vmatpush2.bf16.msra.mxu0 0
        %1801 = vmatprep.subr.bf16.mxu0 0
        %1802 = vmatpush2.bf16.msra.mxu0 0
        %1803 = vmatprep.mubr.bf16.mxu0 0
        %1804 = vmatmul.mubr.bf16.gmra.mxu0 %v1769
        %v1805 = vpop.f32.mrf.mxu0
        %v1806 = vadd.f32 %v1754, %v1805
        %v1807 = vpop.f32.mrf.mxu0
        %v1808 = vpop.f32.mrf.mxu0
        %v1809 = vadd.f32 %v1754, %v1808
        %v1810 = vpop.f32.mrf.mxu0
        %1811 = vdwg.mxu0
        %v1812 = vadd.f32 %v706, %v1806
        %v1813 = vadd.f32 %v707, %v1809
        %v1814 = vld [vmem:[%s674] sm:$0x1]
        %v1815 = vld [vmem:[%s677] sm:$0x1]
        %v1816 = vsel %vm710, %v1812, 0.0
        %1817 = vadd.xlane.f32.xlu0 %v1816
        %v1818 = vpop.xlane.xlu0 %1817
        %v1819 = vsel %vm710, %v1813, 0.0
        %1820 = vadd.xlane.f32.xlu0 %v1819
        %v1821 = vpop.xlane.xlu0 %1820
        %v1822 = vmul.f32 %v1818, %v717
        %v1823 = vmul.f32 %v1821, %v717
        %v1824 = vsub.f32 %v1812, %v1822
        %v1825 = vsub.f32 %v1813, %v1823
        %v1826 = vmul.f32 %v1824, %v1824
        %v1827 = vmul.f32 %v1825, %v1825
        %v1828 = vsel %vm710, %v1826, 0.0
        %1829 = vadd.xlane.f32.xlu0 %v1828
        %v1830 = vpop.xlane.xlu0 %1829
        %v1831 = vsel %vm710, %v1827, 0.0
        %1832 = vadd.xlane.f32.xlu0 %v1831
        %v1833 = vpop.xlane.xlu0 %1832
        %v1834 = vmul.f32 %v1830, %v717
        %v1835 = vmul.f32 %v1833, %v717
        %v1836 = vadd.f32 %v1834, 1e-06
        %v1837 = vadd.f32 %v1835, 1e-06
        %v1838 = vrsqrt.pop %v1836
        %v1839 = vrsqrt.pop %v1837
        %v1840 = vmul.f32 %v1824, %v1838
        %v1841 = vmul.f32 %v1825, %v1839
        %v1843 = vlaneseq
        %v1844 = vshrl.u32 %v1843, 7
        %v1845 = vsub.s32 0, %v1844
        %v1846 = vrot.slane %v1814, %v1845
        %v1848 = vmul.f32 %v1840, %v1846
        %v1849 = vmul.f32 %v1841, %v1846
        %v1851 = vlaneseq
        %v1852 = vshrl.u32 %v1851, 7
        %v1853 = vsub.s32 0, %v1852
        %v1854 = vrot.slane %v1815, %v1853
        %v1856 = vadd.f32 %v1848, %v1854
        %v1857 = vadd.f32 %v1849, %v1854
        %v1858 = vpack.c.bf16 %v1857, %v1856
        %v1859 = vld [vmem:[%s682] sm:$0xff]
        %v1860 = vld [vmem:[%s682 + $0x8] sm:$0xff]
        %v1861 = vld [vmem:[%s682 + $0x10] sm:$0xff]
        %v1862 = vld [vmem:[%s682 + $0x18] sm:$0xff]
        %v1863 = vld [vmem:[%s682 + $0x20] sm:$0xff]
        %v1864 = vld [vmem:[%s682 + $0x28] sm:$0xff]
        %v1865 = vld [vmem:[%s682 + $0x30] sm:$0xff]
        %v1866 = vld [vmem:[%s682 + $0x38] sm:$0xff]
        %v1867 = vld [vmem:[%s682 + $0x40] sm:$0xff]
        %v1868 = vld [vmem:[%s682 + $0x48] sm:$0xff]
        %v1869 = vld [vmem:[%s682 + $0x50] sm:$0xff]
        %v1870 = vld [vmem:[%s682 + $0x58] sm:$0xff]
        %v1871 = vld [vmem:[%s682 + $0x60] sm:$0xff]
        %v1872 = vld [vmem:[%s682 + $0x68] sm:$0xff]
        %v1873 = vld [vmem:[%s682 + $0x70] sm:$0xff]
        %v1874 = vld [vmem:[%s682 + $0x78] sm:$0xff]
        %v1875 = vld [vmem:[%s682 + $0x80] sm:$0xff]
        %v1876 = vld [vmem:[%s682 + $0x88] sm:$0xff]
        %v1877 = vld [vmem:[%s682 + $0x90] sm:$0xff]
        %v1878 = vld [vmem:[%s682 + $0x98] sm:$0xff]
        %v1879 = vld [vmem:[%s682 + $0xa0] sm:$0xff]
        %v1880 = vld [vmem:[%s682 + $0xa8] sm:$0xff]
        %v1881 = vld [vmem:[%s682 + $0xb0] sm:$0xff]
        %v1882 = vld [vmem:[%s682 + $0xb8] sm:$0xff]
        %v1883 = vld [vmem:[%s682 + $0xc0] sm:$0xff]
        %v1884 = vld [vmem:[%s682 + $0xc8] sm:$0xff]
        %v1885 = vld [vmem:[%s682 + $0xd0] sm:$0xff]
        %v1886 = vld [vmem:[%s682 + $0xd8] sm:$0xff]
        %v1887 = vld [vmem:[%s682 + $0xe0] sm:$0xff]
        %v1888 = vld [vmem:[%s682 + $0xe8] sm:$0xff]
        %v1889 = vld [vmem:[%s682 + $0xf0] sm:$0xff]
        %v1890 = vld [vmem:[%s682 + $0xf8] sm:$0xff]
        %v1891 = vld [vmem:[%s686] sm:$0xff]
        %v1892 = vld [vmem:[%s686 + $0x8] sm:$0xff]
        %v1895 = vlaneseq
        %v1896 = vshrl.u32 %v1895, 7
        %v1897 = vsub.s32 0, %v1896
        %v1898 = vrot.slane %v1891, %v1897
        %v1899 = vlaneseq
        %v1900 = vshrl.u32 %v1899, 7
        %v1901 = vsub.s32 1, %v1900
        %v1902 = vrot.slane %v1891, %v1901
        %v1903 = vlaneseq
        %v1904 = vshrl.u32 %v1903, 7
        %v1905 = vsub.s32 2, %v1904
        %v1906 = vrot.slane %v1891, %v1905
        %v1907 = vlaneseq
        %v1908 = vshrl.u32 %v1907, 7
        %v1909 = vsub.s32 3, %v1908
        %v1910 = vrot.slane %v1891, %v1909
        %v1911 = vlaneseq
        %v1912 = vshrl.u32 %v1911, 7
        %v1913 = vsub.s32 4, %v1912
        %v1914 = vrot.slane %v1891, %v1913
        %v1915 = vlaneseq
        %v1916 = vshrl.u32 %v1915, 7
        %v1917 = vsub.s32 5, %v1916
        %v1918 = vrot.slane %v1891, %v1917
        %v1919 = vlaneseq
        %v1920 = vshrl.u32 %v1919, 7
        %v1921 = vsub.s32 6, %v1920
        %v1922 = vrot.slane %v1891, %v1921
        %v1923 = vlaneseq
        %v1924 = vshrl.u32 %v1923, 7
        %v1925 = vsub.s32 7, %v1924
        %v1926 = vrot.slane %v1891, %v1925
        %v1927 = vlaneseq
        %v1928 = vshrl.u32 %v1927, 7
        %v1929 = vsub.s32 0, %v1928
        %v1930 = vrot.slane %v1892, %v1929
        %v1931 = vlaneseq
        %v1932 = vshrl.u32 %v1931, 7
        %v1933 = vsub.s32 1, %v1932
        %v1934 = vrot.slane %v1892, %v1933
        %v1935 = vlaneseq
        %v1936 = vshrl.u32 %v1935, 7
        %v1937 = vsub.s32 2, %v1936
        %v1938 = vrot.slane %v1892, %v1937
        %v1939 = vlaneseq
        %v1940 = vshrl.u32 %v1939, 7
        %v1941 = vsub.s32 3, %v1940
        %v1942 = vrot.slane %v1892, %v1941
        %v1943 = vlaneseq
        %v1944 = vshrl.u32 %v1943, 7
        %v1945 = vsub.s32 4, %v1944
        %v1946 = vrot.slane %v1892, %v1945
        %v1947 = vlaneseq
        %v1948 = vshrl.u32 %v1947, 7
        %v1949 = vsub.s32 5, %v1948
        %v1950 = vrot.slane %v1892, %v1949
        %v1951 = vlaneseq
        %v1952 = vshrl.u32 %v1951, 7
        %v1953 = vsub.s32 6, %v1952
        %v1954 = vrot.slane %v1892, %v1953
        %v1955 = vlaneseq
        %v1956 = vshrl.u32 %v1955, 7
        %v1957 = vsub.s32 7, %v1956
        %v1958 = vrot.slane %v1892, %v1957
        %v2007 = vunpack.c.l.b16 %v1859
        %v2008 = vunpack.c.h.b16 %v1859
        %v2009 = vunpack.c.l.b16 %v1860
        %v2010 = vunpack.c.h.b16 %v1860
        %v2011 = vunpack.c.l.b16 %v1861
        %v2012 = vunpack.c.h.b16 %v1861
        %v2013 = vunpack.c.l.b16 %v1862
        %v2014 = vunpack.c.h.b16 %v1862
        %v2015 = vunpack.c.l.b16 %v1863
        %v2016 = vunpack.c.h.b16 %v1863
        %v2017 = vunpack.c.l.b16 %v1864
        %v2018 = vunpack.c.h.b16 %v1864
        %v2019 = vunpack.c.l.b16 %v1865
        %v2020 = vunpack.c.h.b16 %v1865
        %v2021 = vunpack.c.l.b16 %v1866
        %v2022 = vunpack.c.h.b16 %v1866
        %v2023 = vunpack.c.l.b16 %v1867
        %v2024 = vunpack.c.h.b16 %v1867
        %v2025 = vunpack.c.l.b16 %v1868
        %v2026 = vunpack.c.h.b16 %v1868
        %v2027 = vunpack.c.l.b16 %v1869
        %v2028 = vunpack.c.h.b16 %v1869
        %v2029 = vunpack.c.l.b16 %v1870
        %v2030 = vunpack.c.h.b16 %v1870
        %v2031 = vunpack.c.l.b16 %v1871
        %v2032 = vunpack.c.h.b16 %v1871
        %v2033 = vunpack.c.l.b16 %v1872
        %v2034 = vunpack.c.h.b16 %v1872
        %v2035 = vunpack.c.l.b16 %v1873
        %v2036 = vunpack.c.h.b16 %v1873
        %v2037 = vunpack.c.l.b16 %v1874
        %v2038 = vunpack.c.h.b16 %v1874
        %v2039 = vunpack.c.l.b16 %v1875
        %v2040 = vunpack.c.h.b16 %v1875
        %v2041 = vunpack.c.l.b16 %v1876
        %v2042 = vunpack.c.h.b16 %v1876
        %v2043 = vunpack.c.l.b16 %v1877
        %v2044 = vunpack.c.h.b16 %v1877
        %v2045 = vunpack.c.l.b16 %v1878
        %v2046 = vunpack.c.h.b16 %v1878
        %v2047 = vunpack.c.l.b16 %v1879
        %v2048 = vunpack.c.h.b16 %v1879
        %v2049 = vunpack.c.l.b16 %v1880
        %v2050 = vunpack.c.h.b16 %v1880
        %v2051 = vunpack.c.l.b16 %v1881
        %v2052 = vunpack.c.h.b16 %v1881
        %v2053 = vunpack.c.l.b16 %v1882
        %v2054 = vunpack.c.h.b16 %v1882
        %v2055 = vunpack.c.l.b16 %v1883
        %v2056 = vunpack.c.h.b16 %v1883
        %v2057 = vunpack.c.l.b16 %v1884
        %v2058 = vunpack.c.h.b16 %v1884
        %v2059 = vunpack.c.l.b16 %v1885
        %v2060 = vunpack.c.h.b16 %v1885
        %v2061 = vunpack.c.l.b16 %v1886
        %v2062 = vunpack.c.h.b16 %v1886
        %v2063 = vunpack.c.l.b16 %v1887
        %v2064 = vunpack.c.h.b16 %v1887
        %v2065 = vunpack.c.l.b16 %v1888
        %v2066 = vunpack.c.h.b16 %v1888
        %v2067 = vunpack.c.l.b16 %v1889
        %v2068 = vunpack.c.h.b16 %v1889
        %v2069 = vunpack.c.l.b16 %v1890
        %v2070 = vunpack.c.h.b16 %v1890
        %v2071 = vpack.c.b16 %v2023, %v2007
        %v2072 = vpack.c.b16 %v2024, %v2008
        %v2073 = vpack.c.b16 %v2025, %v2009
        %v2074 = vpack.c.b16 %v2026, %v2010
        %v2075 = vpack.c.b16 %v2027, %v2011
        %v2076 = vpack.c.b16 %v2028, %v2012
        %v2077 = vpack.c.b16 %v2029, %v2013
        %v2078 = vpack.c.b16 %v2030, %v2014
        %v2079 = vpack.c.b16 %v2031, %v2015
        %v2080 = vpack.c.b16 %v2032, %v2016
        %v2081 = vpack.c.b16 %v2033, %v2017
        %v2082 = vpack.c.b16 %v2034, %v2018
        %v2083 = vpack.c.b16 %v2035, %v2019
        %v2084 = vpack.c.b16 %v2036, %v2020
        %v2085 = vpack.c.b16 %v2037, %v2021
        %v2086 = vpack.c.b16 %v2038, %v2022
        %v2087 = vpack.c.b16 %v2055, %v2039
        %v2088 = vpack.c.b16 %v2056, %v2040
        %v2089 = vpack.c.b16 %v2057, %v2041
        %v2090 = vpack.c.b16 %v2058, %v2042
        %v2091 = vpack.c.b16 %v2059, %v2043
        %v2092 = vpack.c.b16 %v2060, %v2044
        %v2093 = vpack.c.b16 %v2061, %v2045
        %v2094 = vpack.c.b16 %v2062, %v2046
        %v2095 = vpack.c.b16 %v2063, %v2047
        %v2096 = vpack.c.b16 %v2064, %v2048
        %v2097 = vpack.c.b16 %v2065, %v2049
        %v2098 = vpack.c.b16 %v2066, %v2050
        %v2099 = vpack.c.b16 %v2067, %v2051
        %v2100 = vpack.c.b16 %v2068, %v2052
        %v2101 = vpack.c.b16 %v2069, %v2053
        %v2102 = vpack.c.b16 %v2070, %v2054
        %v2136 = vsel %vm710, %v1858, 0
        %2138 = vmatprep.subr.bf16.mxu0 0
        %2139 = vmatpush1.bf16.msra.mxu0 0
        %2140 = vmatprep.subr.bf16.mxu0 0
        %2141 = vmatpush1.bf16.msra.mxu0 0
        %2142 = vmatprep.subr.bf16.mxu0 0
        %2143 = vmatpush1.bf16.msra.mxu0 0
        %2144 = vmatprep.subr.bf16.mxu0 0
        %2145 = vmatpush1.bf16.msra.mxu0 0
        %2146 = vmatprep.subr.bf16.mxu0 0
        %2147 = vmatpush1.bf16.msra.mxu0 0
        %2148 = vmatprep.subr.bf16.mxu0 0
        %2149 = vmatpush1.bf16.msra.mxu0 0
        %2150 = vmatprep.subr.bf16.mxu0 %v2088
        %2151 = vmatpush1.bf16.msra.mxu0 %v2087
        %2152 = vmatprep.subr.bf16.mxu0 %v2072
        %2153 = vmatpush1.bf16.msra.mxu0 %v2071
        %2154 = vmatprep.subr.bf16.mxu0 0
        %2155 = vmatpush2.bf16.msra.mxu0 0
        %2156 = vmatprep.subr.bf16.mxu0 0
        %2157 = vmatpush2.bf16.msra.mxu0 0
        %2158 = vmatprep.subr.bf16.mxu0 0
        %2159 = vmatpush2.bf16.msra.mxu0 0
        %2160 = vmatprep.subr.bf16.mxu0 0
        %2161 = vmatpush2.bf16.msra.mxu0 0
        %2162 = vmatprep.subr.bf16.mxu0 0
        %2163 = vmatpush2.bf16.msra.mxu0 0
        %2164 = vmatprep.subr.bf16.mxu0 0
        %2165 = vmatpush2.bf16.msra.mxu0 0
        %2166 = vmatprep.subr.bf16.mxu0 0
        %2167 = vmatpush2.bf16.msra.mxu0 0
        %2168 = vmatprep.subr.bf16.mxu0 0
        %2169 = vmatpush2.bf16.msra.mxu0 0
        %2170 = vmatprep.mubr.bf16.mxu0 0
        %2171 = vmatmul.mubr.bf16.gmra.mxu0 %v2136
        %v2172 = vpop.f32.mrf.mxu0
        %v2173 = vadd.f32 %v1898, %v2172
        %v2174 = vpop.f32.mrf.mxu0
        %v2175 = vadd.f32 %v1902, %v2174
        %v2176 = vpop.f32.mrf.mxu0
        %v2177 = vadd.f32 %v1898, %v2176
        %v2178 = vpop.f32.mrf.mxu0
        %v2179 = vadd.f32 %v1902, %v2178
        %2180 = vdwg.mxu0
        %2181 = vmatprep.subr.bf16.mxu0 0
        %2182 = vmatpush1.bf16.msra.mxu0 0
        %2183 = vmatprep.subr.bf16.mxu0 0
        %2184 = vmatpush1.bf16.msra.mxu0 0
        %2185 = vmatprep.subr.bf16.mxu0 0
        %2186 = vmatpush1.bf16.msra.mxu0 0
        %2187 = vmatprep.subr.bf16.mxu0 0
        %2188 = vmatpush1.bf16.msra.mxu0 0
        %2189 = vmatprep.subr.bf16.mxu0 0
        %2190 = vmatpush1.bf16.msra.mxu0 0
        %2191 = vmatprep.subr.bf16.mxu0 0
        %2192 = vmatpush1.bf16.msra.mxu0 0
        %2193 = vmatprep.subr.bf16.mxu0 %v2090
        %2194 = vmatpush1.bf16.msra.mxu0 %v2089
        %2195 = vmatprep.subr.bf16.mxu0 %v2074
        %2196 = vmatpush1.bf16.msra.mxu0 %v2073
        %2197 = vmatprep.subr.bf16.mxu0 0
        %2198 = vmatpush2.bf16.msra.mxu0 0
        %2199 = vmatprep.subr.bf16.mxu0 0
        %2200 = vmatpush2.bf16.msra.mxu0 0
        %2201 = vmatprep.subr.bf16.mxu0 0
        %2202 = vmatpush2.bf16.msra.mxu0 0
        %2203 = vmatprep.subr.bf16.mxu0 0
        %2204 = vmatpush2.bf16.msra.mxu0 0
        %2205 = vmatprep.subr.bf16.mxu0 0
        %2206 = vmatpush2.bf16.msra.mxu0 0
        %2207 = vmatprep.subr.bf16.mxu0 0
        %2208 = vmatpush2.bf16.msra.mxu0 0
        %2209 = vmatprep.subr.bf16.mxu0 0
        %2210 = vmatpush2.bf16.msra.mxu0 0
        %2211 = vmatprep.subr.bf16.mxu0 0
        %2212 = vmatpush2.bf16.msra.mxu0 0
        %2213 = vmatprep.mubr.bf16.mxu0 0
        %2214 = vmatmul.mubr.bf16.gmra.mxu0 %v2136
        %v2215 = vpop.f32.mrf.mxu0
        %v2216 = vadd.f32 %v1906, %v2215
        %v2217 = vpop.f32.mrf.mxu0
        %v2218 = vadd.f32 %v1910, %v2217
        %v2219 = vpop.f32.mrf.mxu0
        %v2220 = vadd.f32 %v1906, %v2219
        %v2221 = vpop.f32.mrf.mxu0
        %v2222 = vadd.f32 %v1910, %v2221
        %2223 = vdwg.mxu0
        %2224 = vmatprep.subr.bf16.mxu0 0
        %2225 = vmatpush1.bf16.msra.mxu0 0
        %2226 = vmatprep.subr.bf16.mxu0 0
        %2227 = vmatpush1.bf16.msra.mxu0 0
        %2228 = vmatprep.subr.bf16.mxu0 0
        %2229 = vmatpush1.bf16.msra.mxu0 0
        %2230 = vmatprep.subr.bf16.mxu0 0
        %2231 = vmatpush1.bf16.msra.mxu0 0
        %2232 = vmatprep.subr.bf16.mxu0 0
        %2233 = vmatpush1.bf16.msra.mxu0 0
        %2234 = vmatprep.subr.bf16.mxu0 0
        %2235 = vmatpush1.bf16.msra.mxu0 0
        %2236 = vmatprep.subr.bf16.mxu0 %v2092
        %2237 = vmatpush1.bf16.msra.mxu0 %v2091
        %2238 = vmatprep.subr.bf16.mxu0 %v2076
        %2239 = vmatpush1.bf16.msra.mxu0 %v2075
        %2240 = vmatprep.subr.bf16.mxu0 0
        %2241 = vmatpush2.bf16.msra.mxu0 0
        %2242 = vmatprep.subr.bf16.mxu0 0
        %2243 = vmatpush2.bf16.msra.mxu0 0
        %2244 = vmatprep.subr.bf16.mxu0 0
        %2245 = vmatpush2.bf16.msra.mxu0 0
        %2246 = vmatprep.subr.bf16.mxu0 0
        %2247 = vmatpush2.bf16.msra.mxu0 0
        %2248 = vmatprep.subr.bf16.mxu0 0
        %2249 = vmatpush2.bf16.msra.mxu0 0
        %2250 = vmatprep.subr.bf16.mxu0 0
        %2251 = vmatpush2.bf16.msra.mxu0 0
        %2252 = vmatprep.subr.bf16.mxu0 0
        %2253 = vmatpush2.bf16.msra.mxu0 0
        %2254 = vmatprep.subr.bf16.mxu0 0
        %2255 = vmatpush2.bf16.msra.mxu0 0
        %2256 = vmatprep.mubr.bf16.mxu0 0
        %2257 = vmatmul.mubr.bf16.gmra.mxu0 %v2136
        %v2258 = vpop.f32.mrf.mxu0
        %v2259 = vadd.f32 %v1914, %v2258
        %v2260 = vpop.f32.mrf.mxu0
        %v2261 = vadd.f32 %v1918, %v2260
        %v2262 = vpop.f32.mrf.mxu0
        %v2263 = vadd.f32 %v1914, %v2262
        %v2264 = vpop.f32.mrf.mxu0
        %v2265 = vadd.f32 %v1918, %v2264
        %2266 = vdwg.mxu0
        %2267 = vmatprep.subr.bf16.mxu0 0
        %2268 = vmatpush1.bf16.msra.mxu0 0
        %2269 = vmatprep.subr.bf16.mxu0 0
        %2270 = vmatpush1.bf16.msra.mxu0 0
        %2271 = vmatprep.subr.bf16.mxu0 0
        %2272 = vmatpush1.bf16.msra.mxu0 0
        %2273 = vmatprep.subr.bf16.mxu0 0
        %2274 = vmatpush1.bf16.msra.mxu0 0
        %2275 = vmatprep.subr.bf16.mxu0 0
        %2276 = vmatpush1.bf16.msra.mxu0 0
        %2277 = vmatprep.subr.bf16.mxu0 0
        %2278 = vmatpush1.bf16.msra.mxu0 0
        %2279 = vmatprep.subr.bf16.mxu0 %v2094
        %2280 = vmatpush1.bf16.msra.mxu0 %v2093
        %2281 = vmatprep.subr.bf16.mxu0 %v2078
        %2282 = vmatpush1.bf16.msra.mxu0 %v2077
        %2283 = vmatprep.subr.bf16.mxu0 0
        %2284 = vmatpush2.bf16.msra.mxu0 0
        %2285 = vmatprep.subr.bf16.mxu0 0
        %2286 = vmatpush2.bf16.msra.mxu0 0
        %2287 = vmatprep.subr.bf16.mxu0 0
        %2288 = vmatpush2.bf16.msra.mxu0 0
        %2289 = vmatprep.subr.bf16.mxu0 0
        %2290 = vmatpush2.bf16.msra.mxu0 0
        %2291 = vmatprep.subr.bf16.mxu0 0
        %2292 = vmatpush2.bf16.msra.mxu0 0
        %2293 = vmatprep.subr.bf16.mxu0 0
        %2294 = vmatpush2.bf16.msra.mxu0 0
        %2295 = vmatprep.subr.bf16.mxu0 0
        %2296 = vmatpush2.bf16.msra.mxu0 0
        %2297 = vmatprep.subr.bf16.mxu0 0
        %2298 = vmatpush2.bf16.msra.mxu0 0
        %2299 = vmatprep.mubr.bf16.mxu0 0
        %2300 = vmatmul.mubr.bf16.gmra.mxu0 %v2136
        %v2301 = vpop.f32.mrf.mxu0
        %v2302 = vadd.f32 %v1922, %v2301
        %v2303 = vpop.f32.mrf.mxu0
        %v2304 = vadd.f32 %v1926, %v2303
        %v2305 = vpop.f32.mrf.mxu0
        %v2306 = vadd.f32 %v1922, %v2305
        %v2307 = vpop.f32.mrf.mxu0
        %v2308 = vadd.f32 %v1926, %v2307
        %2309 = vdwg.mxu0
        %2310 = vmatprep.subr.bf16.mxu0 0
        %2311 = vmatpush1.bf16.msra.mxu0 0
        %2312 = vmatprep.subr.bf16.mxu0 0
        %2313 = vmatpush1.bf16.msra.mxu0 0
        %2314 = vmatprep.subr.bf16.mxu0 0
        %2315 = vmatpush1.bf16.msra.mxu0 0
        %2316 = vmatprep.subr.bf16.mxu0 0
        %2317 = vmatpush1.bf16.msra.mxu0 0
        %2318 = vmatprep.subr.bf16.mxu0 0
        %2319 = vmatpush1.bf16.msra.mxu0 0
        %2320 = vmatprep.subr.bf16.mxu0 0
        %2321 = vmatpush1.bf16.msra.mxu0 0
        %2322 = vmatprep.subr.bf16.mxu0 %v2096
        %2323 = vmatpush1.bf16.msra.mxu0 %v2095
        %2324 = vmatprep.subr.bf16.mxu0 %v2080
        %2325 = vmatpush1.bf16.msra.mxu0 %v2079
        %2326 = vmatprep.subr.bf16.mxu0 0
        %2327 = vmatpush2.bf16.msra.mxu0 0
        %2328 = vmatprep.subr.bf16.mxu0 0
        %2329 = vmatpush2.bf16.msra.mxu0 0
        %2330 = vmatprep.subr.bf16.mxu0 0
        %2331 = vmatpush2.bf16.msra.mxu0 0
        %2332 = vmatprep.subr.bf16.mxu0 0
        %2333 = vmatpush2.bf16.msra.mxu0 0
        %2334 = vmatprep.subr.bf16.mxu0 0
        %2335 = vmatpush2.bf16.msra.mxu0 0
        %2336 = vmatprep.subr.bf16.mxu0 0
        %2337 = vmatpush2.bf16.msra.mxu0 0
        %2338 = vmatprep.subr.bf16.mxu0 0
        %2339 = vmatpush2.bf16.msra.mxu0 0
        %2340 = vmatprep.subr.bf16.mxu0 0
        %2341 = vmatpush2.bf16.msra.mxu0 0
        %2342 = vmatprep.mubr.bf16.mxu0 0
        %2343 = vmatmul.mubr.bf16.gmra.mxu0 %v2136
        %v2344 = vpop.f32.mrf.mxu0
        %v2345 = vadd.f32 %v1930, %v2344
        %v2346 = vpop.f32.mrf.mxu0
        %v2347 = vadd.f32 %v1934, %v2346
        %v2348 = vpop.f32.mrf.mxu0
        %v2349 = vadd.f32 %v1930, %v2348
        %v2350 = vpop.f32.mrf.mxu0
        %v2351 = vadd.f32 %v1934, %v2350
        %2352 = vdwg.mxu0
        %2353 = vmatprep.subr.bf16.mxu0 0
        %2354 = vmatpush1.bf16.msra.mxu0 0
        %2355 = vmatprep.subr.bf16.mxu0 0
        %2356 = vmatpush1.bf16.msra.mxu0 0
        %2357 = vmatprep.subr.bf16.mxu0 0
        %2358 = vmatpush1.bf16.msra.mxu0 0
        %2359 = vmatprep.subr.bf16.mxu0 0
        %2360 = vmatpush1.bf16.msra.mxu0 0
        %2361 = vmatprep.subr.bf16.mxu0 0
        %2362 = vmatpush1.bf16.msra.mxu0 0
        %2363 = vmatprep.subr.bf16.mxu0 0
        %2364 = vmatpush1.bf16.msra.mxu0 0
        %2365 = vmatprep.subr.bf16.mxu0 %v2098
        %2366 = vmatpush1.bf16.msra.mxu0 %v2097
        %2367 = vmatprep.subr.bf16.mxu0 %v2082
        %2368 = vmatpush1.bf16.msra.mxu0 %v2081
        %2369 = vmatprep.subr.bf16.mxu0 0
        %2370 = vmatpush2.bf16.msra.mxu0 0
        %2371 = vmatprep.subr.bf16.mxu0 0
        %2372 = vmatpush2.bf16.msra.mxu0 0
        %2373 = vmatprep.subr.bf16.mxu0 0
        %2374 = vmatpush2.bf16.msra.mxu0 0
        %2375 = vmatprep.subr.bf16.mxu0 0
        %2376 = vmatpush2.bf16.msra.mxu0 0
        %2377 = vmatprep.subr.bf16.mxu0 0
        %2378 = vmatpush2.bf16.msra.mxu0 0
        %2379 = vmatprep.subr.bf16.mxu0 0
        %2380 = vmatpush2.bf16.msra.mxu0 0
        %2381 = vmatprep.subr.bf16.mxu0 0
        %2382 = vmatpush2.bf16.msra.mxu0 0
        %2383 = vmatprep.subr.bf16.mxu0 0
        %2384 = vmatpush2.bf16.msra.mxu0 0
        %2385 = vmatprep.mubr.bf16.mxu0 0
        %2386 = vmatmul.mubr.bf16.gmra.mxu0 %v2136
        %v2387 = vpop.f32.mrf.mxu0
        %v2388 = vadd.f32 %v1938, %v2387
        %v2389 = vpop.f32.mrf.mxu0
        %v2390 = vadd.f32 %v1942, %v2389
        %v2391 = vpop.f32.mrf.mxu0
        %v2392 = vadd.f32 %v1938, %v2391
        %v2393 = vpop.f32.mrf.mxu0
        %v2394 = vadd.f32 %v1942, %v2393
        %2395 = vdwg.mxu0
        %2396 = vmatprep.subr.bf16.mxu0 0
        %2397 = vmatpush1.bf16.msra.mxu0 0
        %2398 = vmatprep.subr.bf16.mxu0 0
        %2399 = vmatpush1.bf16.msra.mxu0 0
        %2400 = vmatprep.subr.bf16.mxu0 0
        %2401 = vmatpush1.bf16.msra.mxu0 0
        %2402 = vmatprep.subr.bf16.mxu0 0
        %2403 = vmatpush1.bf16.msra.mxu0 0
        %2404 = vmatprep.subr.bf16.mxu0 0
        %2405 = vmatpush1.bf16.msra.mxu0 0
        %2406 = vmatprep.subr.bf16.mxu0 0
        %2407 = vmatpush1.bf16.msra.mxu0 0
        %2408 = vmatprep.subr.bf16.mxu0 %v2100
        %2409 = vmatpush1.bf16.msra.mxu0 %v2099
        %2410 = vmatprep.subr.bf16.mxu0 %v2084
        %2411 = vmatpush1.bf16.msra.mxu0 %v2083
        %2412 = vmatprep.subr.bf16.mxu0 0
        %2413 = vmatpush2.bf16.msra.mxu0 0
        %2414 = vmatprep.subr.bf16.mxu0 0
        %2415 = vmatpush2.bf16.msra.mxu0 0
        %2416 = vmatprep.subr.bf16.mxu0 0
        %2417 = vmatpush2.bf16.msra.mxu0 0
        %2418 = vmatprep.subr.bf16.mxu0 0
        %2419 = vmatpush2.bf16.msra.mxu0 0
        %2420 = vmatprep.subr.bf16.mxu0 0
        %2421 = vmatpush2.bf16.msra.mxu0 0
        %2422 = vmatprep.subr.bf16.mxu0 0
        %2423 = vmatpush2.bf16.msra.mxu0 0
        %2424 = vmatprep.subr.bf16.mxu0 0
        %2425 = vmatpush2.bf16.msra.mxu0 0
        %2426 = vmatprep.subr.bf16.mxu0 0
        %2427 = vmatpush2.bf16.msra.mxu0 0
        %2428 = vmatprep.mubr.bf16.mxu0 0
        %2429 = vmatmul.mubr.bf16.gmra.mxu0 %v2136
        %v2430 = vpop.f32.mrf.mxu0
        %v2431 = vadd.f32 %v1946, %v2430
        %v2432 = vpop.f32.mrf.mxu0
        %v2433 = vadd.f32 %v1950, %v2432
        %v2434 = vpop.f32.mrf.mxu0
        %v2435 = vadd.f32 %v1946, %v2434
        %v2436 = vpop.f32.mrf.mxu0
        %v2437 = vadd.f32 %v1950, %v2436
        %2438 = vdwg.mxu0
        %2439 = vmatprep.subr.bf16.mxu0 0
        %2440 = vmatpush1.bf16.msra.mxu0 0
        %2441 = vmatprep.subr.bf16.mxu0 0
        %2442 = vmatpush1.bf16.msra.mxu0 0
        %2443 = vmatprep.subr.bf16.mxu0 0
        %2444 = vmatpush1.bf16.msra.mxu0 0
        %2445 = vmatprep.subr.bf16.mxu0 0
        %2446 = vmatpush1.bf16.msra.mxu0 0
        %2447 = vmatprep.subr.bf16.mxu0 0
        %2448 = vmatpush1.bf16.msra.mxu0 0
        %2449 = vmatprep.subr.bf16.mxu0 0
        %2450 = vmatpush1.bf16.msra.mxu0 0
        %2451 = vmatprep.subr.bf16.mxu0 %v2102
        %2452 = vmatpush1.bf16.msra.mxu0 %v2101
        %2453 = vmatprep.subr.bf16.mxu0 %v2086
        %2454 = vmatpush1.bf16.msra.mxu0 %v2085
        %2455 = vmatprep.subr.bf16.mxu0 0
        %2456 = vmatpush2.bf16.msra.mxu0 0
        %2457 = vmatprep.subr.bf16.mxu0 0
        %2458 = vmatpush2.bf16.msra.mxu0 0
        %2459 = vmatprep.subr.bf16.mxu0 0
        %2460 = vmatpush2.bf16.msra.mxu0 0
        %2461 = vmatprep.subr.bf16.mxu0 0
        %2462 = vmatpush2.bf16.msra.mxu0 0
        %2463 = vmatprep.subr.bf16.mxu0 0
        %2464 = vmatpush2.bf16.msra.mxu0 0
        %2465 = vmatprep.subr.bf16.mxu0 0
        %2466 = vmatpush2.bf16.msra.mxu0 0
        %2467 = vmatprep.subr.bf16.mxu0 0
        %2468 = vmatpush2.bf16.msra.mxu0 0
        %2469 = vmatprep.subr.bf16.mxu0 0
        %2470 = vmatpush2.bf16.msra.mxu0 0
        %2471 = vmatprep.mubr.bf16.mxu0 0
        %2472 = vmatmul.mubr.bf16.gmra.mxu0 %v2136
        %v2473 = vpop.f32.mrf.mxu0
        %v2474 = vadd.f32 %v1954, %v2473
        %v2475 = vpop.f32.mrf.mxu0
        %v2476 = vadd.f32 %v1958, %v2475
        %v2477 = vpop.f32.mrf.mxu0
        %v2478 = vadd.f32 %v1954, %v2477
        %v2479 = vpop.f32.mrf.mxu0
        %v2480 = vadd.f32 %v1958, %v2479
        %2481 = vdwg.mxu0
        %v2482 = vmul.f32 %v2173, 0.5
        %v2483 = vmul.f32 %v2175, 0.5
        %v2484 = vmul.f32 %v2216, 0.5
        %v2485 = vmul.f32 %v2218, 0.5
        %v2486 = vmul.f32 %v2259, 0.5
        %v2487 = vmul.f32 %v2261, 0.5
        %v2488 = vmul.f32 %v2302, 0.5
        %v2489 = vmul.f32 %v2304, 0.5
        %v2490 = vmul.f32 %v2345, 0.5
        %v2491 = vmul.f32 %v2347, 0.5
        %v2492 = vmul.f32 %v2388, 0.5
        %v2493 = vmul.f32 %v2390, 0.5
        %v2494 = vmul.f32 %v2431, 0.5
        %v2495 = vmul.f32 %v2433, 0.5
        %v2496 = vmul.f32 %v2474, 0.5
        %v2497 = vmul.f32 %v2476, 0.5
        %v2498 = vmul.f32 %v2177, 0.5
        %v2499 = vmul.f32 %v2179, 0.5
        %v2500 = vmul.f32 %v2220, 0.5
        %v2501 = vmul.f32 %v2222, 0.5
        %v2502 = vmul.f32 %v2263, 0.5
        %v2503 = vmul.f32 %v2265, 0.5
        %v2504 = vmul.f32 %v2306, 0.5
        %v2505 = vmul.f32 %v2308, 0.5
        %v2506 = vmul.f32 %v2349, 0.5
        %v2507 = vmul.f32 %v2351, 0.5
        %v2508 = vmul.f32 %v2392, 0.5
        %v2509 = vmul.f32 %v2394, 0.5
        %v2510 = vmul.f32 %v2435, 0.5
        %v2511 = vmul.f32 %v2437, 0.5
        %v2512 = vmul.f32 %v2478, 0.5
        %v2513 = vmul.f32 %v2480, 0.5
        %v2514 = vmul.f32 %v2173, 0.70710677
        %v2515 = vmul.f32 %v2175, 0.70710677
        %v2516 = vmul.f32 %v2216, 0.70710677
        %v2517 = vmul.f32 %v2218, 0.70710677
        %v2518 = vmul.f32 %v2259, 0.70710677
        %v2519 = vmul.f32 %v2261, 0.70710677
        %v2520 = vmul.f32 %v2302, 0.70710677
        %v2521 = vmul.f32 %v2304, 0.70710677
        %v2522 = vmul.f32 %v2345, 0.70710677
        %v2523 = vmul.f32 %v2347, 0.70710677
        %v2524 = vmul.f32 %v2388, 0.70710677
        %v2525 = vmul.f32 %v2390, 0.70710677
        %v2526 = vmul.f32 %v2431, 0.70710677
        %v2527 = vmul.f32 %v2433, 0.70710677
        %v2528 = vmul.f32 %v2474, 0.70710677
        %v2529 = vmul.f32 %v2476, 0.70710677
        %v2530 = vmul.f32 %v2177, 0.70710677
        %v2531 = vmul.f32 %v2179, 0.70710677
        %v2532 = vmul.f32 %v2220, 0.70710677
        %v2533 = vmul.f32 %v2222, 0.70710677
        %v2534 = vmul.f32 %v2263, 0.70710677
        %v2535 = vmul.f32 %v2265, 0.70710677
        %v2536 = vmul.f32 %v2306, 0.70710677
        %v2537 = vmul.f32 %v2308, 0.70710677
        %v2538 = vmul.f32 %v2349, 0.70710677
        %v2539 = vmul.f32 %v2351, 0.70710677
        %v2540 = vmul.f32 %v2392, 0.70710677
        %v2541 = vmul.f32 %v2394, 0.70710677
        %v2542 = vmul.f32 %v2435, 0.70710677
        %v2543 = vmul.f32 %v2437, 0.70710677
        %v2544 = vmul.f32 %v2478, 0.70710677
        %v2545 = vmul.f32 %v2480, 0.70710677
        %v2546 = verf.f32.pop %v2514
        %v2547 = verf.f32.pop %v2515
        %v2548 = verf.f32.pop %v2516
        %v2549 = verf.f32.pop %v2517
        %v2550 = verf.f32.pop %v2518
        %v2551 = verf.f32.pop %v2519
        %v2552 = verf.f32.pop %v2520
        %v2553 = verf.f32.pop %v2521
        %v2554 = verf.f32.pop %v2522
        %v2555 = verf.f32.pop %v2523
        %v2556 = verf.f32.pop %v2524
        %v2557 = verf.f32.pop %v2525
        %v2558 = verf.f32.pop %v2526
        %v2559 = verf.f32.pop %v2527
        %v2560 = verf.f32.pop %v2528
        %v2561 = verf.f32.pop %v2529
        %v2562 = verf.f32.pop %v2530
        %v2563 = verf.f32.pop %v2531
        %v2564 = verf.f32.pop %v2532
        %v2565 = verf.f32.pop %v2533
        %v2566 = verf.f32.pop %v2534
        %v2567 = verf.f32.pop %v2535
        %v2568 = verf.f32.pop %v2536
        %v2569 = verf.f32.pop %v2537
        %v2570 = verf.f32.pop %v2538
        %v2571 = verf.f32.pop %v2539
        %v2572 = verf.f32.pop %v2540
        %v2573 = verf.f32.pop %v2541
        %v2574 = verf.f32.pop %v2542
        %v2575 = verf.f32.pop %v2543
        %v2576 = verf.f32.pop %v2544
        %v2577 = verf.f32.pop %v2545
        %v2578 = vadd.f32 %v2546, 1.0
        %v2579 = vadd.f32 %v2547, 1.0
        %v2580 = vadd.f32 %v2548, 1.0
        %v2581 = vadd.f32 %v2549, 1.0
        %v2582 = vadd.f32 %v2550, 1.0
        %v2583 = vadd.f32 %v2551, 1.0
        %v2584 = vadd.f32 %v2552, 1.0
        %v2585 = vadd.f32 %v2553, 1.0
        %v2586 = vadd.f32 %v2554, 1.0
        %v2587 = vadd.f32 %v2555, 1.0
        %v2588 = vadd.f32 %v2556, 1.0
        %v2589 = vadd.f32 %v2557, 1.0
        %v2590 = vadd.f32 %v2558, 1.0
        %v2591 = vadd.f32 %v2559, 1.0
        %v2592 = vadd.f32 %v2560, 1.0
        %v2593 = vadd.f32 %v2561, 1.0
        %v2594 = vadd.f32 %v2562, 1.0
        %v2595 = vadd.f32 %v2563, 1.0
        %v2596 = vadd.f32 %v2564, 1.0
        %v2597 = vadd.f32 %v2565, 1.0
        %v2598 = vadd.f32 %v2566, 1.0
        %v2599 = vadd.f32 %v2567, 1.0
        %v2600 = vadd.f32 %v2568, 1.0
        %v2601 = vadd.f32 %v2569, 1.0
        %v2602 = vadd.f32 %v2570, 1.0
        %v2603 = vadd.f32 %v2571, 1.0
        %v2604 = vadd.f32 %v2572, 1.0
        %v2605 = vadd.f32 %v2573, 1.0
        %v2606 = vadd.f32 %v2574, 1.0
        %v2607 = vadd.f32 %v2575, 1.0
        %v2608 = vadd.f32 %v2576, 1.0
        %v2609 = vadd.f32 %v2577, 1.0
        %v2610 = vmul.f32 %v2482, %v2578
        %v2611 = vmul.f32 %v2483, %v2579
        %v2612 = vmul.f32 %v2484, %v2580
        %v2613 = vmul.f32 %v2485, %v2581
        %v2614 = vmul.f32 %v2486, %v2582
        %v2615 = vmul.f32 %v2487, %v2583
        %v2616 = vmul.f32 %v2488, %v2584
        %v2617 = vmul.f32 %v2489, %v2585
        %v2618 = vmul.f32 %v2490, %v2586
        %v2619 = vmul.f32 %v2491, %v2587
        %v2620 = vmul.f32 %v2492, %v2588
        %v2621 = vmul.f32 %v2493, %v2589
        %v2622 = vmul.f32 %v2494, %v2590
        %v2623 = vmul.f32 %v2495, %v2591
        %v2624 = vmul.f32 %v2496, %v2592
        %v2625 = vmul.f32 %v2497, %v2593
        %v2626 = vmul.f32 %v2498, %v2594
        %v2627 = vmul.f32 %v2499, %v2595
        %v2628 = vmul.f32 %v2500, %v2596
        %v2629 = vmul.f32 %v2501, %v2597
        %v2630 = vmul.f32 %v2502, %v2598
        %v2631 = vmul.f32 %v2503, %v2599
        %v2632 = vmul.f32 %v2504, %v2600
        %v2633 = vmul.f32 %v2505, %v2601
        %v2634 = vmul.f32 %v2506, %v2602
        %v2635 = vmul.f32 %v2507, %v2603
        %v2636 = vmul.f32 %v2508, %v2604
        %v2637 = vmul.f32 %v2509, %v2605
        %v2638 = vmul.f32 %v2510, %v2606
        %v2639 = vmul.f32 %v2511, %v2607
        %v2640 = vmul.f32 %v2512, %v2608
        %v2641 = vmul.f32 %v2513, %v2609
        %v2642 = vpack.c.bf16 %v2626, %v2610
        %v2643 = vpack.c.bf16 %v2627, %v2611
        %v2644 = vpack.c.bf16 %v2628, %v2612
        %v2645 = vpack.c.bf16 %v2629, %v2613
        %v2646 = vpack.c.bf16 %v2630, %v2614
        %v2647 = vpack.c.bf16 %v2631, %v2615
        %v2648 = vpack.c.bf16 %v2632, %v2616
        %v2649 = vpack.c.bf16 %v2633, %v2617
        %v2650 = vpack.c.bf16 %v2634, %v2618
        %v2651 = vpack.c.bf16 %v2635, %v2619
        %v2652 = vpack.c.bf16 %v2636, %v2620
        %v2653 = vpack.c.bf16 %v2637, %v2621
        %v2654 = vpack.c.bf16 %v2638, %v2622
        %v2655 = vpack.c.bf16 %v2639, %v2623
        %v2656 = vpack.c.bf16 %v2640, %v2624
        %v2657 = vpack.c.bf16 %v2641, %v2625
        %v2658 = vld [vmem:[%s691] sm:$0xf]
        %v2659 = vld [vmem:[%s691 + $0x4] sm:$0xf]
        %v2660 = vld [vmem:[%s691 + $0x8] sm:$0xf]
        %v2661 = vld [vmem:[%s691 + $0xc] sm:$0xf]
        %v2662 = vld [vmem:[%s691 + $0x10] sm:$0xf]
        %v2663 = vld [vmem:[%s691 + $0x14] sm:$0xf]
        %v2664 = vld [vmem:[%s691 + $0x18] sm:$0xf]
        %v2665 = vld [vmem:[%s691 + $0x1c] sm:$0xf]
        %v2666 = vld [vmem:[%s691 + $0x20] sm:$0xf]
        %v2667 = vld [vmem:[%s691 + $0x24] sm:$0xf]
        %v2668 = vld [vmem:[%s691 + $0x28] sm:$0xf]
        %v2669 = vld [vmem:[%s691 + $0x2c] sm:$0xf]
        %v2670 = vld [vmem:[%s691 + $0x30] sm:$0xf]
        %v2671 = vld [vmem:[%s691 + $0x34] sm:$0xf]
        %v2672 = vld [vmem:[%s691 + $0x38] sm:$0xf]
        %v2673 = vld [vmem:[%s691 + $0x3c] sm:$0xf]
        %v2674 = vld [vmem:[%s691 + $0x40] sm:$0xf]
        %v2675 = vld [vmem:[%s691 + $0x44] sm:$0xf]
        %v2676 = vld [vmem:[%s691 + $0x48] sm:$0xf]
        %v2677 = vld [vmem:[%s691 + $0x4c] sm:$0xf]
        %v2678 = vld [vmem:[%s691 + $0x50] sm:$0xf]
        %v2679 = vld [vmem:[%s691 + $0x54] sm:$0xf]
        %v2680 = vld [vmem:[%s691 + $0x58] sm:$0xf]
        %v2681 = vld [vmem:[%s691 + $0x5c] sm:$0xf]
        %v2682 = vld [vmem:[%s691 + $0x60] sm:$0xf]
        %v2683 = vld [vmem:[%s691 + $0x64] sm:$0xf]
        %v2684 = vld [vmem:[%s691 + $0x68] sm:$0xf]
        %v2685 = vld [vmem:[%s691 + $0x6c] sm:$0xf]
        %v2686 = vld [vmem:[%s691 + $0x70] sm:$0xf]
        %v2687 = vld [vmem:[%s691 + $0x74] sm:$0xf]
        %v2688 = vld [vmem:[%s691 + $0x78] sm:$0xf]
        %v2689 = vld [vmem:[%s691 + $0x7c] sm:$0xf]
        %v2690 = vld [vmem:[%s691 + $0x80] sm:$0xf]
        %v2691 = vld [vmem:[%s691 + $0x84] sm:$0xf]
        %v2692 = vld [vmem:[%s691 + $0x88] sm:$0xf]
        %v2693 = vld [vmem:[%s691 + $0x8c] sm:$0xf]
        %v2694 = vld [vmem:[%s691 + $0x90] sm:$0xf]
        %v2695 = vld [vmem:[%s691 + $0x94] sm:$0xf]
        %v2696 = vld [vmem:[%s691 + $0x98] sm:$0xf]
        %v2697 = vld [vmem:[%s691 + $0x9c] sm:$0xf]
        %v2698 = vld [vmem:[%s691 + $0xa0] sm:$0xf]
        %v2699 = vld [vmem:[%s691 + $0xa4] sm:$0xf]
        %v2700 = vld [vmem:[%s691 + $0xa8] sm:$0xf]
        %v2701 = vld [vmem:[%s691 + $0xac] sm:$0xf]
        %v2702 = vld [vmem:[%s691 + $0xb0] sm:$0xf]
        %v2703 = vld [vmem:[%s691 + $0xb4] sm:$0xf]
        %v2704 = vld [vmem:[%s691 + $0xb8] sm:$0xf]
        %v2705 = vld [vmem:[%s691 + $0xbc] sm:$0xf]
        %v2706 = vld [vmem:[%s691 + $0xc0] sm:$0xf]
        %v2707 = vld [vmem:[%s691 + $0xc4] sm:$0xf]
        %v2708 = vld [vmem:[%s691 + $0xc8] sm:$0xf]
        %v2709 = vld [vmem:[%s691 + $0xcc] sm:$0xf]
        %v2710 = vld [vmem:[%s691 + $0xd0] sm:$0xf]
        %v2711 = vld [vmem:[%s691 + $0xd4] sm:$0xf]
        %v2712 = vld [vmem:[%s691 + $0xd8] sm:$0xf]
        %v2713 = vld [vmem:[%s691 + $0xdc] sm:$0xf]
        %v2714 = vld [vmem:[%s691 + $0xe0] sm:$0xf]
        %v2715 = vld [vmem:[%s691 + $0xe4] sm:$0xf]
        %v2716 = vld [vmem:[%s691 + $0xe8] sm:$0xf]
        %v2717 = vld [vmem:[%s691 + $0xec] sm:$0xf]
        %v2718 = vld [vmem:[%s691 + $0xf0] sm:$0xf]
        %v2719 = vld [vmem:[%s691 + $0xf4] sm:$0xf]
        %v2720 = vld [vmem:[%s691 + $0xf8] sm:$0xf]
        %v2721 = vld [vmem:[%s691 + $0xfc] sm:$0xf]
        %v2722 = vld [vmem:[%s691 + $0x100] sm:$0xf]
        %v2723 = vld [vmem:[%s691 + $0x104] sm:$0xf]
        %v2724 = vld [vmem:[%s691 + $0x108] sm:$0xf]
        %v2725 = vld [vmem:[%s691 + $0x10c] sm:$0xf]
        %v2726 = vld [vmem:[%s691 + $0x110] sm:$0xf]
        %v2727 = vld [vmem:[%s691 + $0x114] sm:$0xf]
        %v2728 = vld [vmem:[%s691 + $0x118] sm:$0xf]
        %v2729 = vld [vmem:[%s691 + $0x11c] sm:$0xf]
        %v2730 = vld [vmem:[%s691 + $0x120] sm:$0xf]
        %v2731 = vld [vmem:[%s691 + $0x124] sm:$0xf]
        %v2732 = vld [vmem:[%s691 + $0x128] sm:$0xf]
        %v2733 = vld [vmem:[%s691 + $0x12c] sm:$0xf]
        %v2734 = vld [vmem:[%s691 + $0x130] sm:$0xf]
        %v2735 = vld [vmem:[%s691 + $0x134] sm:$0xf]
        %v2736 = vld [vmem:[%s691 + $0x138] sm:$0xf]
        %v2737 = vld [vmem:[%s691 + $0x13c] sm:$0xf]
        %v2738 = vld [vmem:[%s691 + $0x140] sm:$0xf]
        %v2739 = vld [vmem:[%s691 + $0x144] sm:$0xf]
        %v2740 = vld [vmem:[%s691 + $0x148] sm:$0xf]
        %v2741 = vld [vmem:[%s691 + $0x14c] sm:$0xf]
        %v2742 = vld [vmem:[%s691 + $0x150] sm:$0xf]
        %v2743 = vld [vmem:[%s691 + $0x154] sm:$0xf]
        %v2744 = vld [vmem:[%s691 + $0x158] sm:$0xf]
        %v2745 = vld [vmem:[%s691 + $0x15c] sm:$0xf]
        %v2746 = vld [vmem:[%s691 + $0x160] sm:$0xf]
        %v2747 = vld [vmem:[%s691 + $0x164] sm:$0xf]
        %v2748 = vld [vmem:[%s691 + $0x168] sm:$0xf]
        %v2749 = vld [vmem:[%s691 + $0x16c] sm:$0xf]
        %v2750 = vld [vmem:[%s691 + $0x170] sm:$0xf]
        %v2751 = vld [vmem:[%s691 + $0x174] sm:$0xf]
        %v2752 = vld [vmem:[%s691 + $0x178] sm:$0xf]
        %v2753 = vld [vmem:[%s691 + $0x17c] sm:$0xf]
        %v2754 = vld [vmem:[%s691 + $0x180] sm:$0xf]
        %v2755 = vld [vmem:[%s691 + $0x184] sm:$0xf]
        %v2756 = vld [vmem:[%s691 + $0x188] sm:$0xf]
        %v2757 = vld [vmem:[%s691 + $0x18c] sm:$0xf]
        %v2758 = vld [vmem:[%s691 + $0x190] sm:$0xf]
        %v2759 = vld [vmem:[%s691 + $0x194] sm:$0xf]
        %v2760 = vld [vmem:[%s691 + $0x198] sm:$0xf]
        %v2761 = vld [vmem:[%s691 + $0x19c] sm:$0xf]
        %v2762 = vld [vmem:[%s691 + $0x1a0] sm:$0xf]
        %v2763 = vld [vmem:[%s691 + $0x1a4] sm:$0xf]
        %v2764 = vld [vmem:[%s691 + $0x1a8] sm:$0xf]
        %v2765 = vld [vmem:[%s691 + $0x1ac] sm:$0xf]
        %v2766 = vld [vmem:[%s691 + $0x1b0] sm:$0xf]
        %v2767 = vld [vmem:[%s691 + $0x1b4] sm:$0xf]
        %v2768 = vld [vmem:[%s691 + $0x1b8] sm:$0xf]
        %v2769 = vld [vmem:[%s691 + $0x1bc] sm:$0xf]
        %v2770 = vld [vmem:[%s691 + $0x1c0] sm:$0xf]
        %v2771 = vld [vmem:[%s691 + $0x1c4] sm:$0xf]
        %v2772 = vld [vmem:[%s691 + $0x1c8] sm:$0xf]
        %v2773 = vld [vmem:[%s691 + $0x1cc] sm:$0xf]
        %v2774 = vld [vmem:[%s691 + $0x1d0] sm:$0xf]
        %v2775 = vld [vmem:[%s691 + $0x1d4] sm:$0xf]
        %v2776 = vld [vmem:[%s691 + $0x1d8] sm:$0xf]
        %v2777 = vld [vmem:[%s691 + $0x1dc] sm:$0xf]
        %v2778 = vld [vmem:[%s691 + $0x1e0] sm:$0xf]
        %v2779 = vld [vmem:[%s691 + $0x1e4] sm:$0xf]
        %v2780 = vld [vmem:[%s691 + $0x1e8] sm:$0xf]
        %v2781 = vld [vmem:[%s691 + $0x1ec] sm:$0xf]
        %v2782 = vld [vmem:[%s691 + $0x1f0] sm:$0xf]
        %v2783 = vld [vmem:[%s691 + $0x1f4] sm:$0xf]
        %v2784 = vld [vmem:[%s691 + $0x1f8] sm:$0xf]
        %v2785 = vld [vmem:[%s691 + $0x1fc] sm:$0xf]
        %v2786 = vld [vmem:[%s691 + $0x200] sm:$0xf]
        %v2787 = vld [vmem:[%s691 + $0x204] sm:$0xf]
        %v2788 = vld [vmem:[%s691 + $0x208] sm:$0xf]
        %v2789 = vld [vmem:[%s691 + $0x20c] sm:$0xf]
        %v2790 = vld [vmem:[%s691 + $0x210] sm:$0xf]
        %v2791 = vld [vmem:[%s691 + $0x214] sm:$0xf]
        %v2792 = vld [vmem:[%s691 + $0x218] sm:$0xf]
        %v2793 = vld [vmem:[%s691 + $0x21c] sm:$0xf]
        %v2794 = vld [vmem:[%s691 + $0x220] sm:$0xf]
        %v2795 = vld [vmem:[%s691 + $0x224] sm:$0xf]
        %v2796 = vld [vmem:[%s691 + $0x228] sm:$0xf]
        %v2797 = vld [vmem:[%s691 + $0x22c] sm:$0xf]
        %v2798 = vld [vmem:[%s691 + $0x230] sm:$0xf]
        %v2799 = vld [vmem:[%s691 + $0x234] sm:$0xf]
        %v2800 = vld [vmem:[%s691 + $0x238] sm:$0xf]
        %v2801 = vld [vmem:[%s691 + $0x23c] sm:$0xf]
        %v2802 = vld [vmem:[%s691 + $0x240] sm:$0xf]
        %v2803 = vld [vmem:[%s691 + $0x244] sm:$0xf]
        %v2804 = vld [vmem:[%s691 + $0x248] sm:$0xf]
        %v2805 = vld [vmem:[%s691 + $0x24c] sm:$0xf]
        %v2806 = vld [vmem:[%s691 + $0x250] sm:$0xf]
        %v2807 = vld [vmem:[%s691 + $0x254] sm:$0xf]
        %v2808 = vld [vmem:[%s691 + $0x258] sm:$0xf]
        %v2809 = vld [vmem:[%s691 + $0x25c] sm:$0xf]
        %v2810 = vld [vmem:[%s691 + $0x260] sm:$0xf]
        %v2811 = vld [vmem:[%s691 + $0x264] sm:$0xf]
        %v2812 = vld [vmem:[%s691 + $0x268] sm:$0xf]
        %v2813 = vld [vmem:[%s691 + $0x26c] sm:$0xf]
        %v2814 = vld [vmem:[%s691 + $0x270] sm:$0xf]
        %v2815 = vld [vmem:[%s691 + $0x274] sm:$0xf]
        %v2816 = vld [vmem:[%s691 + $0x278] sm:$0xf]
        %v2817 = vld [vmem:[%s691 + $0x27c] sm:$0xf]
        %v2818 = vld [vmem:[%s691 + $0x280] sm:$0xf]
        %v2819 = vld [vmem:[%s691 + $0x284] sm:$0xf]
        %v2820 = vld [vmem:[%s691 + $0x288] sm:$0xf]
        %v2821 = vld [vmem:[%s691 + $0x28c] sm:$0xf]
        %v2822 = vld [vmem:[%s691 + $0x290] sm:$0xf]
        %v2823 = vld [vmem:[%s691 + $0x294] sm:$0xf]
        %v2824 = vld [vmem:[%s691 + $0x298] sm:$0xf]
        %v2825 = vld [vmem:[%s691 + $0x29c] sm:$0xf]
        %v2826 = vld [vmem:[%s691 + $0x2a0] sm:$0xf]
        %v2827 = vld [vmem:[%s691 + $0x2a4] sm:$0xf]
        %v2828 = vld [vmem:[%s691 + $0x2a8] sm:$0xf]
        %v2829 = vld [vmem:[%s691 + $0x2ac] sm:$0xf]
        %v2830 = vld [vmem:[%s691 + $0x2b0] sm:$0xf]
        %v2831 = vld [vmem:[%s691 + $0x2b4] sm:$0xf]
        %v2832 = vld [vmem:[%s691 + $0x2b8] sm:$0xf]
        %v2833 = vld [vmem:[%s691 + $0x2bc] sm:$0xf]
        %v2834 = vld [vmem:[%s691 + $0x2c0] sm:$0xf]
        %v2835 = vld [vmem:[%s691 + $0x2c4] sm:$0xf]
        %v2836 = vld [vmem:[%s691 + $0x2c8] sm:$0xf]
        %v2837 = vld [vmem:[%s691 + $0x2cc] sm:$0xf]
        %v2838 = vld [vmem:[%s691 + $0x2d0] sm:$0xf]
        %v2839 = vld [vmem:[%s691 + $0x2d4] sm:$0xf]
        %v2840 = vld [vmem:[%s691 + $0x2d8] sm:$0xf]
        %v2841 = vld [vmem:[%s691 + $0x2dc] sm:$0xf]
        %v2842 = vld [vmem:[%s691 + $0x2e0] sm:$0xf]
        %v2843 = vld [vmem:[%s691 + $0x2e4] sm:$0xf]
        %v2844 = vld [vmem:[%s691 + $0x2e8] sm:$0xf]
        %v2845 = vld [vmem:[%s691 + $0x2ec] sm:$0xf]
        %v2846 = vld [vmem:[%s691 + $0x2f0] sm:$0xf]
        %v2847 = vld [vmem:[%s691 + $0x2f4] sm:$0xf]
        %v2848 = vld [vmem:[%s691 + $0x2f8] sm:$0xf]
        %v2849 = vld [vmem:[%s691 + $0x2fc] sm:$0xf]
        %v2850 = vld [vmem:[%s691 + $0x300] sm:$0xf]
        %v2851 = vld [vmem:[%s691 + $0x304] sm:$0xf]
        %v2852 = vld [vmem:[%s691 + $0x308] sm:$0xf]
        %v2853 = vld [vmem:[%s691 + $0x30c] sm:$0xf]
        %v2854 = vld [vmem:[%s691 + $0x310] sm:$0xf]
        %v2855 = vld [vmem:[%s691 + $0x314] sm:$0xf]
        %v2856 = vld [vmem:[%s691 + $0x318] sm:$0xf]
        %v2857 = vld [vmem:[%s691 + $0x31c] sm:$0xf]
        %v2858 = vld [vmem:[%s691 + $0x320] sm:$0xf]
        %v2859 = vld [vmem:[%s691 + $0x324] sm:$0xf]
        %v2860 = vld [vmem:[%s691 + $0x328] sm:$0xf]
        %v2861 = vld [vmem:[%s691 + $0x32c] sm:$0xf]
        %v2862 = vld [vmem:[%s691 + $0x330] sm:$0xf]
        %v2863 = vld [vmem:[%s691 + $0x334] sm:$0xf]
        %v2864 = vld [vmem:[%s691 + $0x338] sm:$0xf]
        %v2865 = vld [vmem:[%s691 + $0x33c] sm:$0xf]
        %v2866 = vld [vmem:[%s691 + $0x340] sm:$0xf]
        %v2867 = vld [vmem:[%s691 + $0x344] sm:$0xf]
        %v2868 = vld [vmem:[%s691 + $0x348] sm:$0xf]
        %v2869 = vld [vmem:[%s691 + $0x34c] sm:$0xf]
        %v2870 = vld [vmem:[%s691 + $0x350] sm:$0xf]
        %v2871 = vld [vmem:[%s691 + $0x354] sm:$0xf]
        %v2872 = vld [vmem:[%s691 + $0x358] sm:$0xf]
        %v2873 = vld [vmem:[%s691 + $0x35c] sm:$0xf]
        %v2874 = vld [vmem:[%s691 + $0x360] sm:$0xf]
        %v2875 = vld [vmem:[%s691 + $0x364] sm:$0xf]
        %v2876 = vld [vmem:[%s691 + $0x368] sm:$0xf]
        %v2877 = vld [vmem:[%s691 + $0x36c] sm:$0xf]
        %v2878 = vld [vmem:[%s691 + $0x370] sm:$0xf]
        %v2879 = vld [vmem:[%s691 + $0x374] sm:$0xf]
        %v2880 = vld [vmem:[%s691 + $0x378] sm:$0xf]
        %v2881 = vld [vmem:[%s691 + $0x37c] sm:$0xf]
        %v2882 = vld [vmem:[%s691 + $0x380] sm:$0xf]
        %v2883 = vld [vmem:[%s691 + $0x384] sm:$0xf]
        %v2884 = vld [vmem:[%s691 + $0x388] sm:$0xf]
        %v2885 = vld [vmem:[%s691 + $0x38c] sm:$0xf]
        %v2886 = vld [vmem:[%s691 + $0x390] sm:$0xf]
        %v2887 = vld [vmem:[%s691 + $0x394] sm:$0xf]
        %v2888 = vld [vmem:[%s691 + $0x398] sm:$0xf]
        %v2889 = vld [vmem:[%s691 + $0x39c] sm:$0xf]
        %v2890 = vld [vmem:[%s691 + $0x3a0] sm:$0xf]
        %v2891 = vld [vmem:[%s691 + $0x3a4] sm:$0xf]
        %v2892 = vld [vmem:[%s691 + $0x3a8] sm:$0xf]
        %v2893 = vld [vmem:[%s691 + $0x3ac] sm:$0xf]
        %v2894 = vld [vmem:[%s691 + $0x3b0] sm:$0xf]
        %v2895 = vld [vmem:[%s691 + $0x3b4] sm:$0xf]
        %v2896 = vld [vmem:[%s691 + $0x3b8] sm:$0xf]
        %v2897 = vld [vmem:[%s691 + $0x3bc] sm:$0xf]
        %v2898 = vld [vmem:[%s691 + $0x3c0] sm:$0xf]
        %v2899 = vld [vmem:[%s691 + $0x3c4] sm:$0xf]
        %v2900 = vld [vmem:[%s691 + $0x3c8] sm:$0xf]
        %v2901 = vld [vmem:[%s691 + $0x3cc] sm:$0xf]
        %v2902 = vld [vmem:[%s691 + $0x3d0] sm:$0xf]
        %v2903 = vld [vmem:[%s691 + $0x3d4] sm:$0xf]
        %v2904 = vld [vmem:[%s691 + $0x3d8] sm:$0xf]
        %v2905 = vld [vmem:[%s691 + $0x3dc] sm:$0xf]
        %v2906 = vld [vmem:[%s691 + $0x3e0] sm:$0xf]
        %v2907 = vld [vmem:[%s691 + $0x3e4] sm:$0xf]
        %v2908 = vld [vmem:[%s691 + $0x3e8] sm:$0xf]
        %v2909 = vld [vmem:[%s691 + $0x3ec] sm:$0xf]
        %v2910 = vld [vmem:[%s691 + $0x3f0] sm:$0xf]
        %v2911 = vld [vmem:[%s691 + $0x3f4] sm:$0xf]
        %v2912 = vld [vmem:[%s691 + $0x3f8] sm:$0xf]
        %v2913 = vld [vmem:[%s691 + $0x3fc] sm:$0xf]
        %v3170 = vunpack.c.l.b16 %v2658
        %v3171 = vunpack.c.l.b16 %v2659
        %v3172 = vunpack.c.l.b16 %v2660
        %v3173 = vunpack.c.l.b16 %v2661
        %v3174 = vunpack.c.l.b16 %v2662
        %v3175 = vunpack.c.l.b16 %v2663
        %v3176 = vunpack.c.l.b16 %v2664
        %v3177 = vunpack.c.l.b16 %v2665
        %v3178 = vunpack.c.l.b16 %v2666
        %v3179 = vunpack.c.l.b16 %v2667
        %v3180 = vunpack.c.l.b16 %v2668
        %v3181 = vunpack.c.l.b16 %v2669
        %v3182 = vunpack.c.l.b16 %v2670
        %v3183 = vunpack.c.l.b16 %v2671
        %v3184 = vunpack.c.l.b16 %v2672
        %v3185 = vunpack.c.l.b16 %v2673
        %v3186 = vunpack.c.l.b16 %v2674
        %v3187 = vunpack.c.l.b16 %v2675
        %v3188 = vunpack.c.l.b16 %v2676
        %v3189 = vunpack.c.l.b16 %v2677
        %v3190 = vunpack.c.l.b16 %v2678
        %v3191 = vunpack.c.l.b16 %v2679
        %v3192 = vunpack.c.l.b16 %v2680
        %v3193 = vunpack.c.l.b16 %v2681
        %v3194 = vunpack.c.l.b16 %v2682
        %v3195 = vunpack.c.l.b16 %v2683
        %v3196 = vunpack.c.l.b16 %v2684
        %v3197 = vunpack.c.l.b16 %v2685
        %v3198 = vunpack.c.l.b16 %v2686
        %v3199 = vunpack.c.l.b16 %v2687
        %v3200 = vunpack.c.l.b16 %v2688
        %v3201 = vunpack.c.l.b16 %v2689
        %v3202 = vunpack.c.l.b16 %v2690
        %v3203 = vunpack.c.l.b16 %v2691
        %v3204 = vunpack.c.l.b16 %v2692
        %v3205 = vunpack.c.l.b16 %v2693
        %v3206 = vunpack.c.l.b16 %v2694
        %v3207 = vunpack.c.l.b16 %v2695
        %v3208 = vunpack.c.l.b16 %v2696
        %v3209 = vunpack.c.l.b16 %v2697
        %v3210 = vunpack.c.l.b16 %v2698
        %v3211 = vunpack.c.l.b16 %v2699
        %v3212 = vunpack.c.l.b16 %v2700
        %v3213 = vunpack.c.l.b16 %v2701
        %v3214 = vunpack.c.l.b16 %v2702
        %v3215 = vunpack.c.l.b16 %v2703
        %v3216 = vunpack.c.l.b16 %v2704
        %v3217 = vunpack.c.l.b16 %v2705
        %v3218 = vunpack.c.l.b16 %v2706
        %v3219 = vunpack.c.l.b16 %v2707
        %v3220 = vunpack.c.l.b16 %v2708
        %v3221 = vunpack.c.l.b16 %v2709
        %v3222 = vunpack.c.l.b16 %v2710
        %v3223 = vunpack.c.l.b16 %v2711
        %v3224 = vunpack.c.l.b16 %v2712
        %v3225 = vunpack.c.l.b16 %v2713
        %v3226 = vunpack.c.l.b16 %v2714
        %v3227 = vunpack.c.l.b16 %v2715
        %v3228 = vunpack.c.l.b16 %v2716
        %v3229 = vunpack.c.l.b16 %v2717
        %v3230 = vunpack.c.l.b16 %v2718
        %v3231 = vunpack.c.l.b16 %v2719
        %v3232 = vunpack.c.l.b16 %v2720
        %v3233 = vunpack.c.l.b16 %v2721
        %v3234 = vunpack.c.l.b16 %v2722
        %v3235 = vunpack.c.l.b16 %v2723
        %v3236 = vunpack.c.l.b16 %v2724
        %v3237 = vunpack.c.l.b16 %v2725
        %v3238 = vunpack.c.l.b16 %v2726
        %v3239 = vunpack.c.l.b16 %v2727
        %v3240 = vunpack.c.l.b16 %v2728
        %v3241 = vunpack.c.l.b16 %v2729
        %v3242 = vunpack.c.l.b16 %v2730
        %v3243 = vunpack.c.l.b16 %v2731
        %v3244 = vunpack.c.l.b16 %v2732
        %v3245 = vunpack.c.l.b16 %v2733
        %v3246 = vunpack.c.l.b16 %v2734
        %v3247 = vunpack.c.l.b16 %v2735
        %v3248 = vunpack.c.l.b16 %v2736
        %v3249 = vunpack.c.l.b16 %v2737
        %v3250 = vunpack.c.l.b16 %v2738
        %v3251 = vunpack.c.l.b16 %v2739
        %v3252 = vunpack.c.l.b16 %v2740
        %v3253 = vunpack.c.l.b16 %v2741
        %v3254 = vunpack.c.l.b16 %v2742
        %v3255 = vunpack.c.l.b16 %v2743
        %v3256 = vunpack.c.l.b16 %v2744
        %v3257 = vunpack.c.l.b16 %v2745
        %v3258 = vunpack.c.l.b16 %v2746
        %v3259 = vunpack.c.l.b16 %v2747
        %v3260 = vunpack.c.l.b16 %v2748
        %v3261 = vunpack.c.l.b16 %v2749
        %v3262 = vunpack.c.l.b16 %v2750
        %v3263 = vunpack.c.l.b16 %v2751
        %v3264 = vunpack.c.l.b16 %v2752
        %v3265 = vunpack.c.l.b16 %v2753
        %v3266 = vunpack.c.l.b16 %v2754
        %v3267 = vunpack.c.l.b16 %v2755
        %v3268 = vunpack.c.l.b16 %v2756
        %v3269 = vunpack.c.l.b16 %v2757
        %v3270 = vunpack.c.l.b16 %v2758
        %v3271 = vunpack.c.l.b16 %v2759
        %v3272 = vunpack.c.l.b16 %v2760
        %v3273 = vunpack.c.l.b16 %v2761
        %v3274 = vunpack.c.l.b16 %v2762
        %v3275 = vunpack.c.l.b16 %v2763
        %v3276 = vunpack.c.l.b16 %v2764
        %v3277 = vunpack.c.l.b16 %v2765
        %v3278 = vunpack.c.l.b16 %v2766
        %v3279 = vunpack.c.l.b16 %v2767
        %v3280 = vunpack.c.l.b16 %v2768
        %v3281 = vunpack.c.l.b16 %v2769
        %v3282 = vunpack.c.l.b16 %v2770
        %v3283 = vunpack.c.l.b16 %v2771
        %v3284 = vunpack.c.l.b16 %v2772
        %v3285 = vunpack.c.l.b16 %v2773
        %v3286 = vunpack.c.l.b16 %v2774
        %v3287 = vunpack.c.l.b16 %v2775
        %v3288 = vunpack.c.l.b16 %v2776
        %v3289 = vunpack.c.l.b16 %v2777
        %v3290 = vunpack.c.l.b16 %v2778
        %v3291 = vunpack.c.l.b16 %v2779
        %v3292 = vunpack.c.l.b16 %v2780
        %v3293 = vunpack.c.l.b16 %v2781
        %v3294 = vunpack.c.l.b16 %v2782
        %v3295 = vunpack.c.l.b16 %v2783
        %v3296 = vunpack.c.l.b16 %v2784
        %v3297 = vunpack.c.l.b16 %v2785
        %v3298 = vunpack.c.l.b16 %v2786
        %v3299 = vunpack.c.l.b16 %v2787
        %v3300 = vunpack.c.l.b16 %v2788
        %v3301 = vunpack.c.l.b16 %v2789
        %v3302 = vunpack.c.l.b16 %v2790
        %v3303 = vunpack.c.l.b16 %v2791
        %v3304 = vunpack.c.l.b16 %v2792
        %v3305 = vunpack.c.l.b16 %v2793
        %v3306 = vunpack.c.l.b16 %v2794
        %v3307 = vunpack.c.l.b16 %v2795
        %v3308 = vunpack.c.l.b16 %v2796
        %v3309 = vunpack.c.l.b16 %v2797
        %v3310 = vunpack.c.l.b16 %v2798
        %v3311 = vunpack.c.l.b16 %v2799
        %v3312 = vunpack.c.l.b16 %v2800
        %v3313 = vunpack.c.l.b16 %v2801
        %v3314 = vunpack.c.l.b16 %v2802
        %v3315 = vunpack.c.l.b16 %v2803
        %v3316 = vunpack.c.l.b16 %v2804
        %v3317 = vunpack.c.l.b16 %v2805
        %v3318 = vunpack.c.l.b16 %v2806
        %v3319 = vunpack.c.l.b16 %v2807
        %v3320 = vunpack.c.l.b16 %v2808
        %v3321 = vunpack.c.l.b16 %v2809
        %v3322 = vunpack.c.l.b16 %v2810
        %v3323 = vunpack.c.l.b16 %v2811
        %v3324 = vunpack.c.l.b16 %v2812
        %v3325 = vunpack.c.l.b16 %v2813
        %v3326 = vunpack.c.l.b16 %v2814
        %v3327 = vunpack.c.l.b16 %v2815
        %v3328 = vunpack.c.l.b16 %v2816
        %v3329 = vunpack.c.l.b16 %v2817
        %v3330 = vunpack.c.l.b16 %v2818
        %v3331 = vunpack.c.l.b16 %v2819
        %v3332 = vunpack.c.l.b16 %v2820
        %v3333 = vunpack.c.l.b16 %v2821
        %v3334 = vunpack.c.l.b16 %v2822
        %v3335 = vunpack.c.l.b16 %v2823
        %v3336 = vunpack.c.l.b16 %v2824
        %v3337 = vunpack.c.l.b16 %v2825
        %v3338 = vunpack.c.l.b16 %v2826
        %v3339 = vunpack.c.l.b16 %v2827
        %v3340 = vunpack.c.l.b16 %v2828
        %v3341 = vunpack.c.l.b16 %v2829
        %v3342 = vunpack.c.l.b16 %v2830
        %v3343 = vunpack.c.l.b16 %v2831
        %v3344 = vunpack.c.l.b16 %v2832
        %v3345 = vunpack.c.l.b16 %v2833
        %v3346 = vunpack.c.l.b16 %v2834
        %v3347 = vunpack.c.l.b16 %v2835
        %v3348 = vunpack.c.l.b16 %v2836
        %v3349 = vunpack.c.l.b16 %v2837
        %v3350 = vunpack.c.l.b16 %v2838
        %v3351 = vunpack.c.l.b16 %v2839
        %v3352 = vunpack.c.l.b16 %v2840
        %v3353 = vunpack.c.l.b16 %v2841
        %v3354 = vunpack.c.l.b16 %v2842
        %v3355 = vunpack.c.l.b16 %v2843
        %v3356 = vunpack.c.l.b16 %v2844
        %v3357 = vunpack.c.l.b16 %v2845
        %v3358 = vunpack.c.l.b16 %v2846
        %v3359 = vunpack.c.l.b16 %v2847
        %v3360 = vunpack.c.l.b16 %v2848
        %v3361 = vunpack.c.l.b16 %v2849
        %v3362 = vunpack.c.l.b16 %v2850
        %v3363 = vunpack.c.l.b16 %v2851
        %v3364 = vunpack.c.l.b16 %v2852
        %v3365 = vunpack.c.l.b16 %v2853
        %v3366 = vunpack.c.l.b16 %v2854
        %v3367 = vunpack.c.l.b16 %v2855
        %v3368 = vunpack.c.l.b16 %v2856
        %v3369 = vunpack.c.l.b16 %v2857
        %v3370 = vunpack.c.l.b16 %v2858
        %v3371 = vunpack.c.l.b16 %v2859
        %v3372 = vunpack.c.l.b16 %v2860
        %v3373 = vunpack.c.l.b16 %v2861
        %v3374 = vunpack.c.l.b16 %v2862
        %v3375 = vunpack.c.l.b16 %v2863
        %v3376 = vunpack.c.l.b16 %v2864
        %v3377 = vunpack.c.l.b16 %v2865
        %v3378 = vunpack.c.l.b16 %v2866
        %v3379 = vunpack.c.l.b16 %v2867
        %v3380 = vunpack.c.l.b16 %v2868
        %v3381 = vunpack.c.l.b16 %v2869
        %v3382 = vunpack.c.l.b16 %v2870
        %v3383 = vunpack.c.l.b16 %v2871
        %v3384 = vunpack.c.l.b16 %v2872
        %v3385 = vunpack.c.l.b16 %v2873
        %v3386 = vunpack.c.l.b16 %v2874
        %v3387 = vunpack.c.l.b16 %v2875
        %v3388 = vunpack.c.l.b16 %v2876
        %v3389 = vunpack.c.l.b16 %v2877
        %v3390 = vunpack.c.l.b16 %v2878
        %v3391 = vunpack.c.l.b16 %v2879
        %v3392 = vunpack.c.l.b16 %v2880
        %v3393 = vunpack.c.l.b16 %v2881
        %v3394 = vunpack.c.l.b16 %v2882
        %v3395 = vunpack.c.l.b16 %v2883
        %v3396 = vunpack.c.l.b16 %v2884
        %v3397 = vunpack.c.l.b16 %v2885
        %v3398 = vunpack.c.l.b16 %v2886
        %v3399 = vunpack.c.l.b16 %v2887
        %v3400 = vunpack.c.l.b16 %v2888
        %v3401 = vunpack.c.l.b16 %v2889
        %v3402 = vunpack.c.l.b16 %v2890
        %v3403 = vunpack.c.l.b16 %v2891
        %v3404 = vunpack.c.l.b16 %v2892
        %v3405 = vunpack.c.l.b16 %v2893
        %v3406 = vunpack.c.l.b16 %v2894
        %v3407 = vunpack.c.l.b16 %v2895
        %v3408 = vunpack.c.l.b16 %v2896
        %v3409 = vunpack.c.l.b16 %v2897
        %v3410 = vunpack.c.l.b16 %v2898
        %v3411 = vunpack.c.l.b16 %v2899
        %v3412 = vunpack.c.l.b16 %v2900
        %v3413 = vunpack.c.l.b16 %v2901
        %v3414 = vunpack.c.l.b16 %v2902
        %v3415 = vunpack.c.l.b16 %v2903
        %v3416 = vunpack.c.l.b16 %v2904
        %v3417 = vunpack.c.l.b16 %v2905
        %v3418 = vunpack.c.l.b16 %v2906
        %v3419 = vunpack.c.l.b16 %v2907
        %v3420 = vunpack.c.l.b16 %v2908
        %v3421 = vunpack.c.l.b16 %v2909
        %v3422 = vunpack.c.l.b16 %v2910
        %v3423 = vunpack.c.l.b16 %v2911
        %v3424 = vunpack.c.l.b16 %v2912
        %v3425 = vunpack.c.l.b16 %v2913
        %v3426 = vpack.c.b16 %v3171, %v3170
        %v3427 = vpack.c.b16 %v3173, %v3172
        %v3428 = vpack.c.b16 %v3175, %v3174
        %v3429 = vpack.c.b16 %v3177, %v3176
        %v3430 = vpack.c.b16 %v3179, %v3178
        %v3431 = vpack.c.b16 %v3181, %v3180
        %v3432 = vpack.c.b16 %v3183, %v3182
        %v3433 = vpack.c.b16 %v3185, %v3184
        %v3434 = vpack.c.b16 %v3187, %v3186
        %v3435 = vpack.c.b16 %v3189, %v3188
        %v3436 = vpack.c.b16 %v3191, %v3190
        %v3437 = vpack.c.b16 %v3193, %v3192
        %v3438 = vpack.c.b16 %v3195, %v3194
        %v3439 = vpack.c.b16 %v3197, %v3196
        %v3440 = vpack.c.b16 %v3199, %v3198
        %v3441 = vpack.c.b16 %v3201, %v3200
        %v3442 = vpack.c.b16 %v3203, %v3202
        %v3443 = vpack.c.b16 %v3205, %v3204
        %v3444 = vpack.c.b16 %v3207, %v3206
        %v3445 = vpack.c.b16 %v3209, %v3208
        %v3446 = vpack.c.b16 %v3211, %v3210
        %v3447 = vpack.c.b16 %v3213, %v3212
        %v3448 = vpack.c.b16 %v3215, %v3214
        %v3449 = vpack.c.b16 %v3217, %v3216
        %v3450 = vpack.c.b16 %v3219, %v3218
        %v3451 = vpack.c.b16 %v3221, %v3220
        %v3452 = vpack.c.b16 %v3223, %v3222
        %v3453 = vpack.c.b16 %v3225, %v3224
        %v3454 = vpack.c.b16 %v3227, %v3226
        %v3455 = vpack.c.b16 %v3229, %v3228
        %v3456 = vpack.c.b16 %v3231, %v3230
        %v3457 = vpack.c.b16 %v3233, %v3232
        %v3458 = vpack.c.b16 %v3235, %v3234
        %v3459 = vpack.c.b16 %v3237, %v3236
        %v3460 = vpack.c.b16 %v3239, %v3238
        %v3461 = vpack.c.b16 %v3241, %v3240
        %v3462 = vpack.c.b16 %v3243, %v3242
        %v3463 = vpack.c.b16 %v3245, %v3244
        %v3464 = vpack.c.b16 %v3247, %v3246
        %v3465 = vpack.c.b16 %v3249, %v3248
        %v3466 = vpack.c.b16 %v3251, %v3250
        %v3467 = vpack.c.b16 %v3253, %v3252
        %v3468 = vpack.c.b16 %v3255, %v3254
        %v3469 = vpack.c.b16 %v3257, %v3256
        %v3470 = vpack.c.b16 %v3259, %v3258
        %v3471 = vpack.c.b16 %v3261, %v3260
        %v3472 = vpack.c.b16 %v3263, %v3262
        %v3473 = vpack.c.b16 %v3265, %v3264
        %v3474 = vpack.c.b16 %v3267, %v3266
        %v3475 = vpack.c.b16 %v3269, %v3268
        %v3476 = vpack.c.b16 %v3271, %v3270
        %v3477 = vpack.c.b16 %v3273, %v3272
        %v3478 = vpack.c.b16 %v3275, %v3274
        %v3479 = vpack.c.b16 %v3277, %v3276
        %v3480 = vpack.c.b16 %v3279, %v3278
        %v3481 = vpack.c.b16 %v3281, %v3280
        %v3482 = vpack.c.b16 %v3283, %v3282
        %v3483 = vpack.c.b16 %v3285, %v3284
        %v3484 = vpack.c.b16 %v3287, %v3286
        %v3485 = vpack.c.b16 %v3289, %v3288
        %v3486 = vpack.c.b16 %v3291, %v3290
        %v3487 = vpack.c.b16 %v3293, %v3292
        %v3488 = vpack.c.b16 %v3295, %v3294
        %v3489 = vpack.c.b16 %v3297, %v3296
        %v3490 = vpack.c.b16 %v3299, %v3298
        %v3491 = vpack.c.b16 %v3301, %v3300
        %v3492 = vpack.c.b16 %v3303, %v3302
        %v3493 = vpack.c.b16 %v3305, %v3304
        %v3494 = vpack.c.b16 %v3307, %v3306
        %v3495 = vpack.c.b16 %v3309, %v3308
        %v3496 = vpack.c.b16 %v3311, %v3310
        %v3497 = vpack.c.b16 %v3313, %v3312
        %v3498 = vpack.c.b16 %v3315, %v3314
        %v3499 = vpack.c.b16 %v3317, %v3316
        %v3500 = vpack.c.b16 %v3319, %v3318
        %v3501 = vpack.c.b16 %v3321, %v3320
        %v3502 = vpack.c.b16 %v3323, %v3322
        %v3503 = vpack.c.b16 %v3325, %v3324
        %v3504 = vpack.c.b16 %v3327, %v3326
        %v3505 = vpack.c.b16 %v3329, %v3328
        %v3506 = vpack.c.b16 %v3331, %v3330
        %v3507 = vpack.c.b16 %v3333, %v3332
        %v3508 = vpack.c.b16 %v3335, %v3334
        %v3509 = vpack.c.b16 %v3337, %v3336
        %v3510 = vpack.c.b16 %v3339, %v3338
        %v3511 = vpack.c.b16 %v3341, %v3340
        %v3512 = vpack.c.b16 %v3343, %v3342
        %v3513 = vpack.c.b16 %v3345, %v3344
        %v3514 = vpack.c.b16 %v3347, %v3346
        %v3515 = vpack.c.b16 %v3349, %v3348
        %v3516 = vpack.c.b16 %v3351, %v3350
        %v3517 = vpack.c.b16 %v3353, %v3352
        %v3518 = vpack.c.b16 %v3355, %v3354
        %v3519 = vpack.c.b16 %v3357, %v3356
        %v3520 = vpack.c.b16 %v3359, %v3358
        %v3521 = vpack.c.b16 %v3361, %v3360
        %v3522 = vpack.c.b16 %v3363, %v3362
        %v3523 = vpack.c.b16 %v3365, %v3364
        %v3524 = vpack.c.b16 %v3367, %v3366
        %v3525 = vpack.c.b16 %v3369, %v3368
        %v3526 = vpack.c.b16 %v3371, %v3370
        %v3527 = vpack.c.b16 %v3373, %v3372
        %v3528 = vpack.c.b16 %v3375, %v3374
        %v3529 = vpack.c.b16 %v3377, %v3376
        %v3530 = vpack.c.b16 %v3379, %v3378
        %v3531 = vpack.c.b16 %v3381, %v3380
        %v3532 = vpack.c.b16 %v3383, %v3382
        %v3533 = vpack.c.b16 %v3385, %v3384
        %v3534 = vpack.c.b16 %v3387, %v3386
        %v3535 = vpack.c.b16 %v3389, %v3388
        %v3536 = vpack.c.b16 %v3391, %v3390
        %v3537 = vpack.c.b16 %v3393, %v3392
        %v3538 = vpack.c.b16 %v3395, %v3394
        %v3539 = vpack.c.b16 %v3397, %v3396
        %v3540 = vpack.c.b16 %v3399, %v3398
        %v3541 = vpack.c.b16 %v3401, %v3400
        %v3542 = vpack.c.b16 %v3403, %v3402
        %v3543 = vpack.c.b16 %v3405, %v3404
        %v3544 = vpack.c.b16 %v3407, %v3406
        %v3545 = vpack.c.b16 %v3409, %v3408
        %v3546 = vpack.c.b16 %v3411, %v3410
        %v3547 = vpack.c.b16 %v3413, %v3412
        %v3548 = vpack.c.b16 %v3415, %v3414
        %v3549 = vpack.c.b16 %v3417, %v3416
        %v3550 = vpack.c.b16 %v3419, %v3418
        %v3551 = vpack.c.b16 %v3421, %v3420
        %v3552 = vpack.c.b16 %v3423, %v3422
        %v3553 = vpack.c.b16 %v3425, %v3424
        %3682 = vmatprep.subr.bf16.mxu0 0
        %3683 = vmatpush1.bf16.msra.mxu0 %v3433
        %3684 = vmatprep.subr.bf16.mxu0 0
        %3685 = vmatpush1.bf16.msra.mxu0 %v3432
        %3686 = vmatprep.subr.bf16.mxu0 0
        %3687 = vmatpush1.bf16.msra.mxu0 %v3431
        %3688 = vmatprep.subr.bf16.mxu0 0
        %3689 = vmatpush1.bf16.msra.mxu0 %v3430
        %3690 = vmatprep.subr.bf16.mxu0 0
        %3691 = vmatpush1.bf16.msra.mxu0 %v3429
        %3692 = vmatprep.subr.bf16.mxu0 0
        %3693 = vmatpush1.bf16.msra.mxu0 %v3428
        %3694 = vmatprep.subr.bf16.mxu0 0
        %3695 = vmatpush1.bf16.msra.mxu0 %v3427
        %3696 = vmatprep.subr.bf16.mxu0 0
        %3697 = vmatpush1.bf16.msra.mxu0 %v3426
        %3698 = vmatprep.subr.bf16.mxu0 0
        %3699 = vmatpush2.bf16.msra.mxu0 %v3441
        %3700 = vmatprep.subr.bf16.mxu0 0
        %3701 = vmatpush2.bf16.msra.mxu0 %v3440
        %3702 = vmatprep.subr.bf16.mxu0 0
        %3703 = vmatpush2.bf16.msra.mxu0 %v3439
        %3704 = vmatprep.subr.bf16.mxu0 0
        %3705 = vmatpush2.bf16.msra.mxu0 %v3438
        %3706 = vmatprep.subr.bf16.mxu0 0
        %3707 = vmatpush2.bf16.msra.mxu0 %v3437
        %3708 = vmatprep.subr.bf16.mxu0 0
        %3709 = vmatpush2.bf16.msra.mxu0 %v3436
        %3710 = vmatprep.subr.bf16.mxu0 0
        %3711 = vmatpush2.bf16.msra.mxu0 %v3435
        %3712 = vmatprep.subr.bf16.mxu0 0
        %3713 = vmatpush2.bf16.msra.mxu0 %v3434
        %3714 = vmatprep.mubr.bf16.mxu0 %v2643
        %3715 = vmatmul.mubr.bf16.gmra.mxu0 %v2642
        %v3716 = vpop.f32.mrf.mxu0
        %v3717 = vadd.f32 0.0, %v3716
        %v3718 = vpop.f32.mrf.mxu0
        %v3719 = vpop.f32.mrf.mxu0
        %v3720 = vadd.f32 0.0, %v3719
        %v3721 = vpop.f32.mrf.mxu0
        %3722 = vdwg.mxu0
        %3723 = vmatprep.subr.bf16.mxu0 0
        %3724 = vmatpush1.bf16.msra.mxu0 %v3449
        %3725 = vmatprep.subr.bf16.mxu0 0
        %3726 = vmatpush1.bf16.msra.mxu0 %v3448
        %3727 = vmatprep.subr.bf16.mxu0 0
        %3728 = vmatpush1.bf16.msra.mxu0 %v3447
        %3729 = vmatprep.subr.bf16.mxu0 0
        %3730 = vmatpush1.bf16.msra.mxu0 %v3446
        %3731 = vmatprep.subr.bf16.mxu0 0
        %3732 = vmatpush1.bf16.msra.mxu0 %v3445
        %3733 = vmatprep.subr.bf16.mxu0 0
        %3734 = vmatpush1.bf16.msra.mxu0 %v3444
        %3735 = vmatprep.subr.bf16.mxu0 0
        %3736 = vmatpush1.bf16.msra.mxu0 %v3443
        %3737 = vmatprep.subr.bf16.mxu0 0
        %3738 = vmatpush1.bf16.msra.mxu0 %v3442
        %3739 = vmatprep.subr.bf16.mxu0 0
        %3740 = vmatpush2.bf16.msra.mxu0 %v3457
        %3741 = vmatprep.subr.bf16.mxu0 0
        %3742 = vmatpush2.bf16.msra.mxu0 %v3456
        %3743 = vmatprep.subr.bf16.mxu0 0
        %3744 = vmatpush2.bf16.msra.mxu0 %v3455
        %3745 = vmatprep.subr.bf16.mxu0 0
        %3746 = vmatpush2.bf16.msra.mxu0 %v3454
        %3747 = vmatprep.subr.bf16.mxu0 0
        %3748 = vmatpush2.bf16.msra.mxu0 %v3453
        %3749 = vmatprep.subr.bf16.mxu0 0
        %3750 = vmatpush2.bf16.msra.mxu0 %v3452
        %3751 = vmatprep.subr.bf16.mxu0 0
        %3752 = vmatpush2.bf16.msra.mxu0 %v3451
        %3753 = vmatprep.subr.bf16.mxu0 0
        %3754 = vmatpush2.bf16.msra.mxu0 %v3450
        %3755 = vmatprep.mubr.bf16.mxu0 %v2645
        %3756 = vmatmul.mubr.bf16.gmra.mxu0 %v2644
        %v3757 = vpop.f32.mrf.mxu0
        %v3758 = vadd.f32 %v3717, %v3757
        %v3759 = vpop.f32.mrf.mxu0
        %v3760 = vpop.f32.mrf.mxu0
        %v3761 = vadd.f32 %v3720, %v3760
        %v3762 = vpop.f32.mrf.mxu0
        %3763 = vdwg.mxu0
        %3764 = vmatprep.subr.bf16.mxu0 0
        %3765 = vmatpush1.bf16.msra.mxu0 %v3465
        %3766 = vmatprep.subr.bf16.mxu0 0
        %3767 = vmatpush1.bf16.msra.mxu0 %v3464
        %3768 = vmatprep.subr.bf16.mxu0 0
        %3769 = vmatpush1.bf16.msra.mxu0 %v3463
        %3770 = vmatprep.subr.bf16.mxu0 0
        %3771 = vmatpush1.bf16.msra.mxu0 %v3462
        %3772 = vmatprep.subr.bf16.mxu0 0
        %3773 = vmatpush1.bf16.msra.mxu0 %v3461
        %3774 = vmatprep.subr.bf16.mxu0 0
        %3775 = vmatpush1.bf16.msra.mxu0 %v3460
        %3776 = vmatprep.subr.bf16.mxu0 0
        %3777 = vmatpush1.bf16.msra.mxu0 %v3459
        %3778 = vmatprep.subr.bf16.mxu0 0
        %3779 = vmatpush1.bf16.msra.mxu0 %v3458
        %3780 = vmatprep.subr.bf16.mxu0 0
        %3781 = vmatpush2.bf16.msra.mxu0 %v3473
        %3782 = vmatprep.subr.bf16.mxu0 0
        %3783 = vmatpush2.bf16.msra.mxu0 %v3472
        %3784 = vmatprep.subr.bf16.mxu0 0
        %3785 = vmatpush2.bf16.msra.mxu0 %v3471
        %3786 = vmatprep.subr.bf16.mxu0 0
        %3787 = vmatpush2.bf16.msra.mxu0 %v3470
        %3788 = vmatprep.subr.bf16.mxu0 0
        %3789 = vmatpush2.bf16.msra.mxu0 %v3469
        %3790 = vmatprep.subr.bf16.mxu0 0
        %3791 = vmatpush2.bf16.msra.mxu0 %v3468
        %3792 = vmatprep.subr.bf16.mxu0 0
        %3793 = vmatpush2.bf16.msra.mxu0 %v3467
        %3794 = vmatprep.subr.bf16.mxu0 0
        %3795 = vmatpush2.bf16.msra.mxu0 %v3466
        %3796 = vmatprep.mubr.bf16.mxu0 %v2647
        %3797 = vmatmul.mubr.bf16.gmra.mxu0 %v2646
        %v3798 = vpop.f32.mrf.mxu0
        %v3799 = vadd.f32 %v3758, %v3798
        %v3800 = vpop.f32.mrf.mxu0
        %v3801 = vpop.f32.mrf.mxu0
        %v3802 = vadd.f32 %v3761, %v3801
        %v3803 = vpop.f32.mrf.mxu0
        %3804 = vdwg.mxu0
        %3805 = vmatprep.subr.bf16.mxu0 0
        %3806 = vmatpush1.bf16.msra.mxu0 %v3481
        %3807 = vmatprep.subr.bf16.mxu0 0
        %3808 = vmatpush1.bf16.msra.mxu0 %v3480
        %3809 = vmatprep.subr.bf16.mxu0 0
        %3810 = vmatpush1.bf16.msra.mxu0 %v3479
        %3811 = vmatprep.subr.bf16.mxu0 0
        %3812 = vmatpush1.bf16.msra.mxu0 %v3478
        %3813 = vmatprep.subr.bf16.mxu0 0
        %3814 = vmatpush1.bf16.msra.mxu0 %v3477
        %3815 = vmatprep.subr.bf16.mxu0 0
        %3816 = vmatpush1.bf16.msra.mxu0 %v3476
        %3817 = vmatprep.subr.bf16.mxu0 0
        %3818 = vmatpush1.bf16.msra.mxu0 %v3475
        %3819 = vmatprep.subr.bf16.mxu0 0
        %3820 = vmatpush1.bf16.msra.mxu0 %v3474
        %3821 = vmatprep.subr.bf16.mxu0 0
        %3822 = vmatpush2.bf16.msra.mxu0 %v3489
        %3823 = vmatprep.subr.bf16.mxu0 0
        %3824 = vmatpush2.bf16.msra.mxu0 %v3488
        %3825 = vmatprep.subr.bf16.mxu0 0
        %3826 = vmatpush2.bf16.msra.mxu0 %v3487
        %3827 = vmatprep.subr.bf16.mxu0 0
        %3828 = vmatpush2.bf16.msra.mxu0 %v3486
        %3829 = vmatprep.subr.bf16.mxu0 0
        %3830 = vmatpush2.bf16.msra.mxu0 %v3485
        %3831 = vmatprep.subr.bf16.mxu0 0
        %3832 = vmatpush2.bf16.msra.mxu0 %v3484
        %3833 = vmatprep.subr.bf16.mxu0 0
        %3834 = vmatpush2.bf16.msra.mxu0 %v3483
        %3835 = vmatprep.subr.bf16.mxu0 0
        %3836 = vmatpush2.bf16.msra.mxu0 %v3482
        %3837 = vmatprep.mubr.bf16.mxu0 %v2649
        %3838 = vmatmul.mubr.bf16.gmra.mxu0 %v2648
        %v3839 = vpop.f32.mrf.mxu0
        %v3840 = vadd.f32 %v3799, %v3839
        %v3841 = vpop.f32.mrf.mxu0
        %v3842 = vpop.f32.mrf.mxu0
        %v3843 = vadd.f32 %v3802, %v3842
        %v3844 = vpop.f32.mrf.mxu0
        %3845 = vdwg.mxu0
        %3846 = vmatprep.subr.bf16.mxu0 0
        %3847 = vmatpush1.bf16.msra.mxu0 %v3497
        %3848 = vmatprep.subr.bf16.mxu0 0
        %3849 = vmatpush1.bf16.msra.mxu0 %v3496
        %3850 = vmatprep.subr.bf16.mxu0 0
        %3851 = vmatpush1.bf16.msra.mxu0 %v3495
        %3852 = vmatprep.subr.bf16.mxu0 0
        %3853 = vmatpush1.bf16.msra.mxu0 %v3494
        %3854 = vmatprep.subr.bf16.mxu0 0
        %3855 = vmatpush1.bf16.msra.mxu0 %v3493
        %3856 = vmatprep.subr.bf16.mxu0 0
        %3857 = vmatpush1.bf16.msra.mxu0 %v3492
        %3858 = vmatprep.subr.bf16.mxu0 0
        %3859 = vmatpush1.bf16.msra.mxu0 %v3491
        %3860 = vmatprep.subr.bf16.mxu0 0
        %3861 = vmatpush1.bf16.msra.mxu0 %v3490
        %3862 = vmatprep.subr.bf16.mxu0 0
        %3863 = vmatpush2.bf16.msra.mxu0 %v3505
        %3864 = vmatprep.subr.bf16.mxu0 0
        %3865 = vmatpush2.bf16.msra.mxu0 %v3504
        %3866 = vmatprep.subr.bf16.mxu0 0
        %3867 = vmatpush2.bf16.msra.mxu0 %v3503
        %3868 = vmatprep.subr.bf16.mxu0 0
        %3869 = vmatpush2.bf16.msra.mxu0 %v3502
        %3870 = vmatprep.subr.bf16.mxu0 0
        %3871 = vmatpush2.bf16.msra.mxu0 %v3501
        %3872 = vmatprep.subr.bf16.mxu0 0
        %3873 = vmatpush2.bf16.msra.mxu0 %v3500
        %3874 = vmatprep.subr.bf16.mxu0 0
        %3875 = vmatpush2.bf16.msra.mxu0 %v3499
        %3876 = vmatprep.subr.bf16.mxu0 0
        %3877 = vmatpush2.bf16.msra.mxu0 %v3498
        %3878 = vmatprep.mubr.bf16.mxu0 %v2651
        %3879 = vmatmul.mubr.bf16.gmra.mxu0 %v2650
        %v3880 = vpop.f32.mrf.mxu0
        %v3881 = vadd.f32 %v3840, %v3880
        %v3882 = vpop.f32.mrf.mxu0
        %v3883 = vpop.f32.mrf.mxu0
        %v3884 = vadd.f32 %v3843, %v3883
        %v3885 = vpop.f32.mrf.mxu0
        %3886 = vdwg.mxu0
        %3887 = vmatprep.subr.bf16.mxu0 0
        %3888 = vmatpush1.bf16.msra.mxu0 %v3513
        %3889 = vmatprep.subr.bf16.mxu0 0
        %3890 = vmatpush1.bf16.msra.mxu0 %v3512
        %3891 = vmatprep.subr.bf16.mxu0 0
        %3892 = vmatpush1.bf16.msra.mxu0 %v3511
        %3893 = vmatprep.subr.bf16.mxu0 0
        %3894 = vmatpush1.bf16.msra.mxu0 %v3510
        %3895 = vmatprep.subr.bf16.mxu0 0
        %3896 = vmatpush1.bf16.msra.mxu0 %v3509
        %3897 = vmatprep.subr.bf16.mxu0 0
        %3898 = vmatpush1.bf16.msra.mxu0 %v3508
        %3899 = vmatprep.subr.bf16.mxu0 0
        %3900 = vmatpush1.bf16.msra.mxu0 %v3507
        %3901 = vmatprep.subr.bf16.mxu0 0
        %3902 = vmatpush1.bf16.msra.mxu0 %v3506
        %3903 = vmatprep.subr.bf16.mxu0 0
        %3904 = vmatpush2.bf16.msra.mxu0 %v3521
        %3905 = vmatprep.subr.bf16.mxu0 0
        %3906 = vmatpush2.bf16.msra.mxu0 %v3520
        %3907 = vmatprep.subr.bf16.mxu0 0
        %3908 = vmatpush2.bf16.msra.mxu0 %v3519
        %3909 = vmatprep.subr.bf16.mxu0 0
        %3910 = vmatpush2.bf16.msra.mxu0 %v3518
        %3911 = vmatprep.subr.bf16.mxu0 0
        %3912 = vmatpush2.bf16.msra.mxu0 %v3517
        %3913 = vmatprep.subr.bf16.mxu0 0
        %3914 = vmatpush2.bf16.msra.mxu0 %v3516
        %3915 = vmatprep.subr.bf16.mxu0 0
        %3916 = vmatpush2.bf16.msra.mxu0 %v3515
        %3917 = vmatprep.subr.bf16.mxu0 0
        %3918 = vmatpush2.bf16.msra.mxu0 %v3514
        %3919 = vmatprep.mubr.bf16.mxu0 %v2653
        %3920 = vmatmul.mubr.bf16.gmra.mxu0 %v2652
        %v3921 = vpop.f32.mrf.mxu0
        %v3922 = vadd.f32 %v3881, %v3921
        %v3923 = vpop.f32.mrf.mxu0
        %v3924 = vpop.f32.mrf.mxu0
        %v3925 = vadd.f32 %v3884, %v3924
        %v3926 = vpop.f32.mrf.mxu0
        %3927 = vdwg.mxu0
        %3928 = vmatprep.subr.bf16.mxu0 0
        %3929 = vmatpush1.bf16.msra.mxu0 %v3529
        %3930 = vmatprep.subr.bf16.mxu0 0
        %3931 = vmatpush1.bf16.msra.mxu0 %v3528
        %3932 = vmatprep.subr.bf16.mxu0 0
        %3933 = vmatpush1.bf16.msra.mxu0 %v3527
        %3934 = vmatprep.subr.bf16.mxu0 0
        %3935 = vmatpush1.bf16.msra.mxu0 %v3526
        %3936 = vmatprep.subr.bf16.mxu0 0
        %3937 = vmatpush1.bf16.msra.mxu0 %v3525
        %3938 = vmatprep.subr.bf16.mxu0 0
        %3939 = vmatpush1.bf16.msra.mxu0 %v3524
        %3940 = vmatprep.subr.bf16.mxu0 0
        %3941 = vmatpush1.bf16.msra.mxu0 %v3523
        %3942 = vmatprep.subr.bf16.mxu0 0
        %3943 = vmatpush1.bf16.msra.mxu0 %v3522
        %3944 = vmatprep.subr.bf16.mxu0 0
        %3945 = vmatpush2.bf16.msra.mxu0 %v3537
        %3946 = vmatprep.subr.bf16.mxu0 0
        %3947 = vmatpush2.bf16.msra.mxu0 %v3536
        %3948 = vmatprep.subr.bf16.mxu0 0
        %3949 = vmatpush2.bf16.msra.mxu0 %v3535
        %3950 = vmatprep.subr.bf16.mxu0 0
        %3951 = vmatpush2.bf16.msra.mxu0 %v3534
        %3952 = vmatprep.subr.bf16.mxu0 0
        %3953 = vmatpush2.bf16.msra.mxu0 %v3533
        %3954 = vmatprep.subr.bf16.mxu0 0
        %3955 = vmatpush2.bf16.msra.mxu0 %v3532
        %3956 = vmatprep.subr.bf16.mxu0 0
        %3957 = vmatpush2.bf16.msra.mxu0 %v3531
        %3958 = vmatprep.subr.bf16.mxu0 0
        %3959 = vmatpush2.bf16.msra.mxu0 %v3530
        %3960 = vmatprep.mubr.bf16.mxu0 %v2655
        %3961 = vmatmul.mubr.bf16.gmra.mxu0 %v2654
        %v3962 = vpop.f32.mrf.mxu0
        %v3963 = vadd.f32 %v3922, %v3962
        %v3964 = vpop.f32.mrf.mxu0
        %v3965 = vpop.f32.mrf.mxu0
        %v3966 = vadd.f32 %v3925, %v3965
        %v3967 = vpop.f32.mrf.mxu0
        %3968 = vdwg.mxu0
        %3969 = vmatprep.subr.bf16.mxu0 0
        %3970 = vmatpush1.bf16.msra.mxu0 %v3545
        %3971 = vmatprep.subr.bf16.mxu0 0
        %3972 = vmatpush1.bf16.msra.mxu0 %v3544
        %3973 = vmatprep.subr.bf16.mxu0 0
        %3974 = vmatpush1.bf16.msra.mxu0 %v3543
        %3975 = vmatprep.subr.bf16.mxu0 0
        %3976 = vmatpush1.bf16.msra.mxu0 %v3542
        %3977 = vmatprep.subr.bf16.mxu0 0
        %3978 = vmatpush1.bf16.msra.mxu0 %v3541
        %3979 = vmatprep.subr.bf16.mxu0 0
        %3980 = vmatpush1.bf16.msra.mxu0 %v3540
        %3981 = vmatprep.subr.bf16.mxu0 0
        %3982 = vmatpush1.bf16.msra.mxu0 %v3539
        %3983 = vmatprep.subr.bf16.mxu0 0
        %3984 = vmatpush1.bf16.msra.mxu0 %v3538
        %3985 = vmatprep.subr.bf16.mxu0 0
        %3986 = vmatpush2.bf16.msra.mxu0 %v3553
        %3987 = vmatprep.subr.bf16.mxu0 0
        %3988 = vmatpush2.bf16.msra.mxu0 %v3552
        %3989 = vmatprep.subr.bf16.mxu0 0
        %3990 = vmatpush2.bf16.msra.mxu0 %v3551
        %3991 = vmatprep.subr.bf16.mxu0 0
        %3992 = vmatpush2.bf16.msra.mxu0 %v3550
        %3993 = vmatprep.subr.bf16.mxu0 0
        %3994 = vmatpush2.bf16.msra.mxu0 %v3549
        %3995 = vmatprep.subr.bf16.mxu0 0
        %3996 = vmatpush2.bf16.msra.mxu0 %v3548
        %3997 = vmatprep.subr.bf16.mxu0 0
        %3998 = vmatpush2.bf16.msra.mxu0 %v3547
        %3999 = vmatprep.subr.bf16.mxu0 0
        %4000 = vmatpush2.bf16.msra.mxu0 %v3546
        %4001 = vmatprep.mubr.bf16.mxu0 %v2657
        %4002 = vmatmul.mubr.bf16.gmra.mxu0 %v2656
        %v4003 = vpop.f32.mrf.mxu0
        %v4004 = vadd.f32 %v3963, %v4003
        %v4005 = vpop.f32.mrf.mxu0
        %v4006 = vpop.f32.mrf.mxu0
        %v4007 = vadd.f32 %v3966, %v4006
        %v4008 = vpop.f32.mrf.mxu0
        %4009 = vdwg.mxu0
        %v4010 = vadd.f32 %v1812, %v4004
        %v4011 = vadd.f32 %v1813, %v4007
        %v4012 = vld [vmem:[%s694] sm:$0x1]
        %v4014 = vlaneseq
        %v4015 = vshrl.u32 %v4014, 7
        %v4016 = vsub.s32 0, %v4015
        %v4017 = vrot.slane %v4012, %v4016
        %v4019 = vadd.f32 %v4010, %v4017
        %v4020 = vadd.f32 %v4011, %v4017
        %4021 = vst.msk [vmem:[#allocation2] sm:$0xff] %vm710, %v4019
        %4022 = vst.msk [vmem:[#allocation2 + $0x8] sm:$0xff] %vm710, %v4020
        %p4023 = scmp.eq.s32.totalorder %s32, 1
        // Predicated region
        $region85: #{tpu_custom_call.1} parent=79 // pred_check
          %p4024 = pneg %p4023
        $region86: #{tpu_custom_call.1} parent=79 // pred_check_branch
          %4026 = sbr.rel (%p4024) target = $region88
        $region87: #{tpu_custom_call.1} parent=79 // pred_region
          %v4027 = vld [vmem:[%s13] sm:$0x1]
          %v4028 = vld [vmem:[%s14] sm:$0x1]
          %v4029 = vsel %vm710, %v4019, 0.0
          %4030 = vadd.xlane.f32.xlu0 %v4029
          %v4031 = vpop.xlane.xlu0 %4030
          %v4032 = vsel %vm710, %v4020, 0.0
          %4033 = vadd.xlane.f32.xlu0 %v4032
          %v4034 = vpop.xlane.xlu0 %4033
          %v4035 = vmul.f32 %v4031, %v717
          %v4036 = vmul.f32 %v4034, %v717
          %v4037 = vsub.f32 %v4019, %v4035
          %v4038 = vsub.f32 %v4020, %v4036
          %v4039 = vmul.f32 %v4037, %v4037
          %v4040 = vmul.f32 %v4038, %v4038
          %v4041 = vsel %vm710, %v4039, 0.0
          %4042 = vadd.xlane.f32.xlu0 %v4041
          %v4043 = vpop.xlane.xlu0 %4042
          %v4044 = vsel %vm710, %v4040, 0.0
          %4045 = vadd.xlane.f32.xlu0 %v4044
          %v4046 = vpop.xlane.xlu0 %4045
          %v4047 = vmul.f32 %v4043, %v717
          %v4048 = vmul.f32 %v4046, %v717
          %v4049 = vadd.f32 %v4047, 1e-06
          %v4050 = vadd.f32 %v4048, 1e-06
          %v4051 = vrsqrt.pop %v4049
          %v4052 = vrsqrt.pop %v4050
          %v4053 = vmul.f32 %v4037, %v4051
          %v4054 = vmul.f32 %v4038, %v4052
          %v4056 = vlaneseq
          %v4057 = vshrl.u32 %v4056, 7
          %v4058 = vsub.s32 0, %v4057
          %v4059 = vrot.slane %v4027, %v4058
          %v4061 = vmul.f32 %v4053, %v4059
          %v4062 = vmul.f32 %v4054, %v4059
          %v4064 = vlaneseq
          %v4065 = vshrl.u32 %v4064, 7
          %v4066 = vsub.s32 0, %v4065
          %v4067 = vrot.slane %v4028, %v4066
          %v4069 = vadd.f32 %v4061, %v4067
          %v4070 = vadd.f32 %v4062, %v4067
          %4071 = vst.msk [vmem:[#allocation3] sm:$0xff] %vm710, %v4069
          %4072 = vst.msk [vmem:[#allocation3 + $0x8] sm:$0xff] %vm710, %v4070
        $region88: #{tpu_custom_call.1} parent=79 // pred_fallthru
          _
        // Predicated region
        $region89: #{tpu_custom_call.1} parent=79 // pred_check
          %p4073 = pneg %p437
        $region90: #{tpu_custom_call.1} parent=79 // pred_check_branch
          %4075 = sbr.rel (%p4073) target = $region92
        $region91: #{tpu_custom_call.1} parent=79 // pred_region
          %s4076 = smul.u32 2, %s31
          %s4078 = ssub.s32 256, 256
          %4079 = vsyncadd [#allocation4], %s4078
          %s4080 = smul.addr %s4076, 128
          %s4081 = scalar_lea.hbm %s15, %s4080
          %s4082 = sshll.u32 [#allocation3], 4
          %s4083 = int_to_ptr.vmem [resolvable:$true] %s4082
          %4088 = dma.vmem_to_hbm [thread:$0]  %s4083, 256, %s4081, [#allocation4], 128, 128, 8
        $region92: #{tpu_custom_call.1} parent=79 // pred_fallthru
          _
        // Predicated region
        $region93: #{tpu_custom_call.1} parent=79 // pred_check
          %p4089 = pneg %p437
        $region94: #{tpu_custom_call.1} parent=79 // pred_check_branch
          %4091 = sbr.rel (%p4089) target = $region96
        $region95: #{tpu_custom_call.1} parent=79 // pred_region
          %4092 = dma.done [#allocation4], 256
        $region96: #{tpu_custom_call.1} parent=79 // pred_fallthru
          _
      $region80: #{tpu_custom_call.1} parent=5 // pred_fallthru
        _
      %p4093 = scmp.le.s32.totalorder 2, %s22
      // Predicated region
      $region97: #{tpu_custom_call.1} parent=5 // pred_check
        %p4094 = pneg %p4093
      $region98: #{tpu_custom_call.1} parent=5 // pred_check_branch
        %4096 = sbr.rel (%p4094) target = $region100
      $region99: #{tpu_custom_call.1} parent=5 // pred_region
        %s4097 = ssub.s32 %s22, 2
      $region100: #{tpu_custom_call.1} parent=5 // pred_fallthru
        _
    $region6: #{tpu_custom_call.1} parent=1 // loop_footer
      %s26 = sadd.s32 1, %s22
    $region7: #{tpu_custom_call.1} parent=1 // loop_footer_branch
      %21 = sbr.rel target = $region3
    $region8: #{tpu_custom_call.1} parent=1 // loop_exit
      _
    %4098 = vsyncpa [#allocation4], 1
    %s4099 = scalar_lea.sflag [#allocation4], 1
    %4100 = vsyncpa %s4099, 1

</llo_original>
